<compile_context>
chip_gen: v5e
topology: v5e:2x2
jax: 0.10.0
libtpu: 0.0.40
codegen_flags: <defaults>
</compile_context>

<pallas_src>
import functools

import jax
import jax.numpy as jnp
from jax import lax
from jax.experimental import pallas as pl
from jax.experimental.pallas import tpu as pltpu

VMEM = pl.BlockSpec(memory_space=pltpu.MemorySpace.VMEM)


# ---------------------------------------------------------------------------
# Fused kernel: conv1 -> relu -> bn1 -> conv2 -> sigmoid -> bn2 -> pool -> MLP head
# ---------------------------------------------------------------------------
def _bitter_gcn_kernel(*refs):
    (x_ref, ea_ref, sd_ref, dt_ref, pool_ref, rec_ref,
     wlr1, blr1, we1, att1, bias1, sc1, sh1,
     wlr2, blr2, we2, att2, bias2, sc2, sh2,
     wf1p, wf1r, bf1, wf2, bf2, wf3, bf3, wf4, bf4, wo, bo,
     o_ref) = refs

    sd = sd_ref[...]                    # [Ep, 2*Np]  {0,1} one-hot  [src | dst]
    dt = dt_ref[...]                    # [Np, Ep]    dst one-hot, transposed
    ea = ea_ref[...]                    # [Ep, Fe]
    n_pad = sd.shape[1] // 2
    d = sd[:, n_pad:]                   # [Ep, Np] dst one-hot (lane-tile aligned slice)

    def gatv2(h_in, wlr, blr, we, att, bias):
        c = att.shape[1]
        # fused lin_l | lin_r : one matmul producing [xl | xr] on 2C lanes
        xlr = jnp.dot(h_in, wlr[...], preferred_element_type=jnp.float32) + blr[...]   # [Np, 2C]
        xl, xr = xlr[:, :c], xlr[:, c:]
        # ONE MXU pass gives both xl[src]+xr[dst] (attention input) and xl[src] (message):
        #   sd @ [[xl, xl], [xr, 0]] = [xl_src + xr_dst | xl_src]
        stacked2 = jnp.concatenate(
            [jnp.concatenate([xl, xl], axis=1),
             jnp.concatenate([xr, jnp.zeros_like(xr)], axis=1)], axis=0)                # [2Np, 2C]
        g2 = jnp.dot(sd, stacked2, preferred_element_type=jnp.float32)                  # [Ep, 2C]
        gath, xl_src = g2[:, :c], g2[:, c:]
        eproj = jnp.dot(ea, we[...], preferred_element_type=jnp.float32)                # [Ep, C]

        h = gath + eproj
        h = jnp.where(h > 0.0, h, 0.2 * h)                                              # LeakyReLU(0.2)
        logit = jnp.sum(h * att[...], axis=-1, keepdims=True)                           # [Ep, 1]

        # segment softmax over destination nodes (numerically stable, per-segment max).
        # Padded edges have all-zero sd/d rows: logit = 0, a = exp(0) = 1 (finite), and
        # their dt columns are zero, so they contribute nothing (no Inf/NaN possible).
        masked = jnp.where(d > 0.0, logit, -1e30)                                       # [Ep, Np] f32
        mx = jnp.max(masked, axis=0, keepdims=True)                                     # [1, Np]
        # TODO(synk): lane-1 gather; column-pack with other per-edge data when tiling lands.
        mx_e = lax.dot_general(d, mx, (((1,), (1,)), ((), ())),
                               preferred_element_type=jnp.float32)                      # [Ep, 1]
        a = jnp.exp(logit - mx_e)                                                       # [Ep, 1]
        # node-side normalization: one scatter produces numerator AND denominator,
        # then an exact per-node divide (per-edge alpha never materializes).
        num_den = jnp.dot(dt, jnp.concatenate([a * xl_src, a], axis=1),
                          preferred_element_type=jnp.float32)                           # [Np, C+1]
        agg = num_den[:, :c] / (num_den[:, c:] + 1e-16)
        return agg + bias[...]

    # conv1 -> ReLU -> BN1 (folded), conv2 -> Sigmoid -> BN2 (folded)
    h1 = gatv2(x_ref[...], wlr1, blr1, we1, att1, bias1)
    h1 = jnp.maximum(h1, 0.0) * sc1[...] + sh1[...]
    h2 = gatv2(h1, wlr2, blr2, we2, att2, bias2)
    h2 = jax.nn.sigmoid(h2) * sc2[...] + sh2[...]

    # global mean pool + receptor features + MLP head (fc1 split: no lane concat needed)
    pooled = jnp.dot(pool_ref[...], h2, preferred_element_type=jnp.float32)             # [G, 8]
    z = (jnp.dot(pooled, wf1p[...], preferred_element_type=jnp.float32)
         + jnp.dot(rec_ref[...], wf1r[...], preferred_element_type=jnp.float32)
         + bf1[...])
    z = jnp.maximum(z, 0.0)
    z = jnp.maximum(jnp.dot(z, wf2[...], preferred_element_type=jnp.float32) + bf2[...], 0.0)
    z = jnp.maximum(jnp.dot(z, wf3[...], preferred_element_type=jnp.float32) + bf3[...], 0.0)
    z = jnp.maximum(jnp.dot(z, wf4[...], preferred_element_type=jnp.float32) + bf4[...], 0.0)
    o_ref[...] = jnp.dot(z, wo[...], preferred_element_type=jnp.float32) + bo[...]


# ---------------------------------------------------------------------------
# Host-side wrapper (fully jittable: no Python loops, no device->host syncs)
# ---------------------------------------------------------------------------
def _round_up(v, m):
    return ((v + m - 1) // m) * m


def _fold_bn(bn, eps=1e-5):
    scale = bn["gamma"] / jnp.sqrt(bn["var"] + eps)
    shift = bn["beta"] - bn["mean"] * scale
    return scale.reshape(1, -1), shift.reshape(1, -1)


def _row(v):
    return v.reshape(1, -1).astype(jnp.float32)


@functools.partial(jax.jit, static_argnames=("num_rec", "num_graphs"))
def bitter_gcn_forward(all_node_feat, edge_index, edge_attr, batch, params, *,
                       num_rec, num_graphs):
    n = all_node_feat.shape[0]
    f_edge = edge_attr.shape[1]
    x = all_node_feat[:, :-num_rec].astype(jnp.float32)
    edge_attr = edge_attr.astype(jnp.float32)
    src, dst = edge_index[0], edge_index[1]

    # GATv2Conv default add_self_loops=True, fill_value='mean': one self-loop per node,
    # its edge feature = mean of that node's incoming edge features.
    # (assumes the supplied edge_index contains no pre-existing self loops)
    deg = jnp.zeros((n,), jnp.float32).at[dst].add(1.0)
    loop_attr = (jnp.zeros((n, f_edge), jnp.float32).at[dst].add(edge_attr)
                 / jnp.maximum(deg, 1.0)[:, None])
    node_ids = jnp.arange(n, dtype=src.dtype)
    src = jnp.concatenate([src, node_ids])
    dst = jnp.concatenate([dst, node_ids])
    edge_attr = jnp.concatenate([edge_attr, loop_attr], axis=0)
    e = int(edge_attr.shape[0])

    # pad N / E to 128 multiples (lane-tile friendly; padded src/dst = -1 so padded
    # one-hot rows are all-zero and inert; padded feature rows are zero).
    n_pad = _round_up(n, 128)
    e_pad = _round_up(e, 128)
    pad_e = e_pad - e
    src_p = jnp.concatenate([src, jnp.full((pad_e,), -1, src.dtype)])
    dst_p = jnp.concatenate([dst, jnp.full((pad_e,), -1, dst.dtype)])
    ids = jnp.arange(n_pad, dtype=src.dtype)
    s_1h = (ids[None, :] == src_p[:, None]).astype(jnp.float32)            # [Ep, Np]
    d_1h = (ids[None, :] == dst_p[:, None]).astype(jnp.float32)            # [Ep, Np]
    sd = jnp.concatenate([s_1h, d_1h], axis=1)                             # [Ep, 2Np]
    dt = d_1h.T                                                            # [Np, Ep]
    ea_p = jnp.pad(edge_attr, ((0, pad_e), (0, 0)))
    x_p = jnp.pad(x, ((0, n_pad - n), (0, 0)))

    # per-graph mean-pool matrix + receptor block (last num_rec feats of first node)
    one_hot_g = (jnp.arange(num_graphs)[:, None] == batch[None, :]).astype(jnp.float32)
    counts = jnp.maximum(jnp.sum(one_hot_g, axis=1), 1.0)                  # guard empty graphs
    pool = jnp.pad(one_hot_g / counts[:, None], ((0, 0), (0, n_pad - n)))  # [G, Np]
    first_idx = jnp.argmax(one_hot_g, axis=1)
    rec_feat = jnp.take(all_node_feat[:, -num_rec:], first_idx, axis=0).astype(jnp.float32)

    c1, c2 = params["conv1"], params["conv2"]
    wlr1 = jnp.concatenate([c1["wl"], c1["wr"]], axis=1)
    blr1 = jnp.concatenate([c1["bl"], c1["br"]]).reshape(1, -1)
    wlr2 = jnp.concatenate([c2["wl"], c2["wr"]], axis=1)
    blr2 = jnp.concatenate([c2["bl"], c2["br"]]).reshape(1, -1)
    sc1, sh1 = _fold_bn(params["bn1"])
    sc2, sh2 = _fold_bn(params["bn2"])

    pooled_dim = c2["wl"].shape[1]                                         # 8
    wf1, b1 = params["fc1"]

    args = [
        x_p, ea_p, sd, dt, pool, rec_feat,
        wlr1, blr1, c1["we"], _row(c1["att"]), _row(c1["bias"]), sc1, sh1,
        wlr2, blr2, c2["we"], _row(c2["att"]), _row(c2["bias"]), sc2, sh2,
        wf1[:pooled_dim, :], wf1[pooled_dim:, :], _row(b1),
    ]
    for name in ("fc2", "fc3", "fc4", "output"):
        w, b = params[name]
        args += [w.astype(jnp.float32), _row(b)]

    # scoped-VMEM hint: resident operands + biggest in-kernel temporaries with headroom,
    # capped at 64 MiB (v7x physical; v5e/v6e could go higher if ever needed).
    resident = sum(int(a.size) * a.dtype.itemsize for a in args)
    resident += e_pad * n_pad * 4                  # [E, N] masked-max temporary
    resident += (e_pad + 2 * n_pad) * 72 * 4       # [E, 2C] / [2N, 2C] class temporaries
    vmem_limit = int(min(max(2 * resident, 32 << 20), 64 << 20))

    out_dim = params["output"][0].shape[1]
    out = pl.pallas_call(
        _bitter_gcn_kernel,
        out_shape=jax.ShapeDtypeStruct((num_graphs, out_dim), jnp.float32),
        in_specs=[VMEM] * len(args),
        out_specs=VMEM,
        compiler_params=pltpu.CompilerParams(vmem_limit_bytes=vmem_limit),
    )(*args)
    # dropout layers are identity at inference; torch's .squeeze() is a no-op for (G>1, 2)
    return jnp.squeeze(out)


# ---------------------------------------------------------------------------
# Deterministic parameter init (synthetic, shapes follow the PyTorch module)
# ---------------------------------------------------------------------------
def _glorot(key, shape):
    lim = (6.0 / (shape[0] + shape[1])) ** 0.5
    return jax.random.uniform(key, shape, jnp.float32, -lim, lim)


def init_params(key, f_node, f_edge, num_rec):
    keys = iter(jax.random.split(key, 64))

    def lin(inp, out):
        return _glorot(next(keys), (inp, out)), 0.01 * jax.random.normal(next(keys), (out,), jnp.float32)

    def gat(inp, out, edge_dim):
        wl, bl = lin(inp, out)
        wr, br = lin(inp, out)
        we = _glorot(next(keys), (edge_dim, out))
        att = _glorot(next(keys), (1, out)).reshape(out)
        bias = 0.01 * jax.random.normal(next(keys), (out,), jnp.float32)
        return dict(wl=wl, bl=bl, wr=wr, br=br, we=we, att=att, bias=bias)

    def bn(c):
        return dict(
            gamma=1.0 + 0.1 * jax.random.normal(next(keys), (c,), jnp.float32),
            beta=0.1 * jax.random.normal(next(keys), (c,), jnp.float32),
            mean=0.1 * jax.random.normal(next(keys), (c,), jnp.float32),
            var=1.0 + 0.1 * jax.random.uniform(next(keys), (c,), jnp.float32),
        )

    return dict(
        conv1=gat(f_node, 32, f_edge),
        conv2=gat(32, 8, f_edge),
        bn1=bn(32),
        bn2=bn(8),
        fc1=lin(8 + num_rec, 32),
        fc2=lin(32, 16),
        fc3=lin(16, 8),
        fc4=lin(8, 4),
        output=lin(4, 2),
    )


# ---------------------------------------------------------------------------
if __name__ == "__main__":
    key = jax.random.PRNGKey(0)
    num_node_features = 12
    num_edge_features = 6
    num_rec = 22
    nodes_per_graph, num_graphs = 8, 2
    n_nodes = nodes_per_graph * num_graphs

    # bidirectional ring edges inside each graph
    src, dst = [], []
    for g in range(num_graphs):
        for i in range(nodes_per_graph):
            a = g * nodes_per_graph + i
            b = g * nodes_per_graph + (i + 1) % nodes_per_graph
            src += [a, b]
            dst += [b, a]
    edge_index = jnp.array([src, dst], dtype=jnp.int32)          # [2, E]
    n_edges = edge_index.shape[1]
    batch = jnp.array(
        sum(([g] * nodes_per_graph for g in range(num_graphs)), []), dtype=jnp.int32
    )

    k_x, k_e, k_p = jax.random.split(key, 3)
    all_node_feat = jax.random.normal(k_x, (n_nodes, num_node_features + num_rec), jnp.float32)
    edge_attr = jax.random.normal(k_e, (n_edges, num_edge_features), jnp.float32)
    params = init_params(k_p, num_node_features, num_edge_features, num_rec)

    out = bitter_gcn_forward(
        all_node_feat, edge_index, edge_attr, batch, params,
        num_rec=num_rec, num_graphs=num_graphs,
    )
    jax.block_until_ready(out)
    assert out.shape == (num_graphs, 2)
    print("KERNEL_OK")
</pallas_src>

<mosaic_0001>
module attributes {stable_mosaic.version = 11 : i64} {
  func.func @_bitter_gcn_kernel(%arg0: memref<128x12xf32, #tpu.memory_space<vmem>>, %arg1: memref<128x6xf32, #tpu.memory_space<vmem>>, %arg2: memref<128x256xf32, #tpu.memory_space<vmem>>, %arg3: memref<128x128xf32, #tpu.memory_space<vmem>>, %arg4: memref<2x128xf32, #tpu.memory_space<vmem>>, %arg5: memref<2x22xf32, #tpu.memory_space<vmem>>, %arg6: memref<12x64xf32, #tpu.memory_space<vmem>>, %arg7: memref<1x64xf32, #tpu.memory_space<vmem>>, %arg8: memref<6x32xf32, #tpu.memory_space<vmem>>, %arg9: memref<1x32xf32, #tpu.memory_space<vmem>>, %arg10: memref<1x32xf32, #tpu.memory_space<vmem>>, %arg11: memref<1x32xf32, #tpu.memory_space<vmem>>, %arg12: memref<1x32xf32, #tpu.memory_space<vmem>>, %arg13: memref<32x16xf32, #tpu.memory_space<vmem>>, %arg14: memref<1x16xf32, #tpu.memory_space<vmem>>, %arg15: memref<6x8xf32, #tpu.memory_space<vmem>>, %arg16: memref<1x8xf32, #tpu.memory_space<vmem>>, %arg17: memref<1x8xf32, #tpu.memory_space<vmem>>, %arg18: memref<1x8xf32, #tpu.memory_space<vmem>>, %arg19: memref<1x8xf32, #tpu.memory_space<vmem>>, %arg20: memref<8x32xf32, #tpu.memory_space<vmem>>, %arg21: memref<22x32xf32, #tpu.memory_space<vmem>>, %arg22: memref<1x32xf32, #tpu.memory_space<vmem>>, %arg23: memref<32x16xf32, #tpu.memory_space<vmem>>, %arg24: memref<1x16xf32, #tpu.memory_space<vmem>>, %arg25: memref<16x8xf32, #tpu.memory_space<vmem>>, %arg26: memref<1x8xf32, #tpu.memory_space<vmem>>, %arg27: memref<8x4xf32, #tpu.memory_space<vmem>>, %arg28: memref<1x4xf32, #tpu.memory_space<vmem>>, %arg29: memref<4x2xf32, #tpu.memory_space<vmem>>, %arg30: memref<1x2xf32, #tpu.memory_space<vmem>>, %arg31: memref<2x2xf32, #tpu.memory_space<vmem>>) attributes {dimension_semantics = [], scalar_prefetch = 0 : i64, scratch_operands = 0 : i64, tpu.core_type = #tpu.core_type<tc>} {
    %c0 = arith.constant 0 : index
    %c0_0 = arith.constant 0 : index
    %0 = vector.load %arg2[%c0, %c0_0] : memref<128x256xf32, #tpu.memory_space<vmem>>, vector<128x256xf32>
    %c0_1 = arith.constant 0 : index
    %c0_2 = arith.constant 0 : index
    %1 = vector.load %arg3[%c0_1, %c0_2] : memref<128x128xf32, #tpu.memory_space<vmem>>, vector<128x128xf32>
    %c0_3 = arith.constant 0 : index
    %c0_4 = arith.constant 0 : index
    %2 = vector.load %arg1[%c0_3, %c0_4] : memref<128x6xf32, #tpu.memory_space<vmem>>, vector<128x6xf32>
    %3 = vector.extract_strided_slice %0 {offsets = [0, 128], sizes = [128, 128], strides = [1, 1]} : vector<128x256xf32> to vector<128x128xf32>
    %c0_5 = arith.constant 0 : index
    %c0_6 = arith.constant 0 : index
    %4 = vector.load %arg0[%c0_5, %c0_6] : memref<128x12xf32, #tpu.memory_space<vmem>>, vector<128x12xf32>
    %c0_7 = arith.constant 0 : index
    %c0_8 = arith.constant 0 : index
    %5 = vector.load %arg6[%c0_7, %c0_8] : memref<12x64xf32, #tpu.memory_space<vmem>>, vector<12x64xf32>
    %cst = arith.constant dense<0.000000e+00> : vector<128x64xf32>
    %6 = tpu.matmul %4, %5, %cst {dimension_numbers = #tpu.dot_dimension_numbers<[1], [0], [0], [1], [0, 0, 1, 1], [], []>} : vector<128x12xf32>, vector<12x64xf32>, vector<128x64xf32> -> vector<128x64xf32>
    %c0_9 = arith.constant 0 : index
    %c0_10 = arith.constant 0 : index
    %7 = vector.load %arg7[%c0_9, %c0_10] : memref<1x64xf32, #tpu.memory_space<vmem>>, vector<1x64xf32>
    %8 = vector.broadcast %7 : vector<1x64xf32> to vector<128x64xf32>
    %9 = arith.addf %6, %8 : vector<128x64xf32>
    %10 = vector.extract_strided_slice %9 {offsets = [0, 0], sizes = [128, 32], strides = [1, 1]} : vector<128x64xf32> to vector<128x32xf32>
    %11 = vector.extract_strided_slice %9 {offsets = [0, 32], sizes = [128, 32], strides = [1, 1]} : vector<128x64xf32> to vector<128x32xf32>
    %12 = tpu.concatenate %10, %10 in 1 : vector<128x32xf32>, vector<128x32xf32> -> vector<128x64xf32>
    %cst_11 = arith.constant 0.000000e+00 : f32
    %13 = vector.broadcast %cst_11 : f32 to vector<128x32xf32>
    %14 = tpu.concatenate %11, %13 in 1 : vector<128x32xf32>, vector<128x32xf32> -> vector<128x64xf32>
    %15 = tpu.concatenate %12, %14 in 0 : vector<128x64xf32>, vector<128x64xf32> -> vector<256x64xf32>
    %cst_12 = arith.constant dense<0.000000e+00> : vector<128x64xf32>
    %16 = tpu.matmul %0, %15, %cst_12 {dimension_numbers = #tpu.dot_dimension_numbers<[1], [0], [0], [1], [0, 0, 1, 1], [], []>} : vector<128x256xf32>, vector<256x64xf32>, vector<128x64xf32> -> vector<128x64xf32>
    %17 = vector.extract_strided_slice %16 {offsets = [0, 0], sizes = [128, 32], strides = [1, 1]} : vector<128x64xf32> to vector<128x32xf32>
    %18 = vector.extract_strided_slice %16 {offsets = [0, 32], sizes = [128, 32], strides = [1, 1]} : vector<128x64xf32> to vector<128x32xf32>
    %c0_13 = arith.constant 0 : index
    %c0_14 = arith.constant 0 : index
    %19 = vector.load %arg8[%c0_13, %c0_14] : memref<6x32xf32, #tpu.memory_space<vmem>>, vector<6x32xf32>
    %cst_15 = arith.constant dense<0.000000e+00> : vector<128x32xf32>
    %20 = tpu.matmul %2, %19, %cst_15 {dimension_numbers = #tpu.dot_dimension_numbers<[1], [0], [0], [1], [0, 0, 1, 1], [], []>} : vector<128x6xf32>, vector<6x32xf32>, vector<128x32xf32> -> vector<128x32xf32>
    %21 = arith.addf %17, %20 : vector<128x32xf32>
    %cst_16 = arith.constant 0.000000e+00 : f32
    %22 = vector.broadcast %cst_16 : f32 to vector<128x32xf32>
    %23 = arith.cmpf ogt, %21, %22 : vector<128x32xf32>
    %cst_17 = arith.constant 2.000000e-01 : f32
    %24 = vector.broadcast %cst_17 : f32 to vector<128x32xf32>
    %25 = arith.mulf %24, %21 : vector<128x32xf32>
    %26 = arith.select %23, %21, %25 : vector<128x32xi1>, vector<128x32xf32>
    %c0_18 = arith.constant 0 : index
    %c0_19 = arith.constant 0 : index
    %27 = vector.load %arg9[%c0_18, %c0_19] : memref<1x32xf32, #tpu.memory_space<vmem>>, vector<1x32xf32>
    %28 = vector.broadcast %27 : vector<1x32xf32> to vector<128x32xf32>
    %29 = arith.mulf %26, %28 : vector<128x32xf32>
    %cst_20 = arith.constant dense<0.000000e+00> : vector<128xf32>
    %30 = vector.multi_reduction <add>, %29, %cst_20 [1] : vector<128x32xf32> to vector<128xf32>
    %31 = vector.shape_cast %30 : vector<128xf32> to vector<128x1xf32>
    %cst_21 = arith.constant 0.000000e+00 : f32
    %32 = vector.broadcast %cst_21 : f32 to vector<128x128xf32>
    %33 = arith.cmpf ogt, %3, %32 : vector<128x128xf32>
    %cst_22 = arith.constant -1.000000e+30 : f32
    %34 = vector.shape_cast %31 : vector<128x1xf32> to vector<128x1xf32>
    %35 = vector.broadcast %34 : vector<128x1xf32> to vector<128x128xf32>
    %36 = vector.broadcast %cst_22 : f32 to vector<128x128xf32>
    %37 = arith.select %33, %35, %36 : vector<128x128xi1>, vector<128x128xf32>
    %cst_23 = arith.constant dense<0xFF800000> : vector<128xf32>
    %38 = vector.multi_reduction <maximumf>, %37, %cst_23 [0] : vector<128x128xf32> to vector<128xf32>
    %39 = vector.shape_cast %38 : vector<128xf32> to vector<1x128xf32>
    %cst_24 = arith.constant dense<0.000000e+00> : vector<128x1xf32>
    %40 = tpu.matmul %3, %39, %cst_24 {dimension_numbers = #tpu.dot_dimension_numbers<[1], [1], [0], [0], [0, 0, 1, 0], [], []>} : vector<128x128xf32>, vector<1x128xf32>, vector<128x1xf32> -> vector<128x1xf32>
    %41 = arith.subf %31, %40 : vector<128x1xf32>
    %42 = math.exp %41 : vector<128x1xf32>
    %43 = vector.broadcast %42 : vector<128x1xf32> to vector<128x32xf32>
    %44 = arith.mulf %43, %18 : vector<128x32xf32>
    %45 = tpu.concatenate %44, %42 in 1 : vector<128x32xf32>, vector<128x1xf32> -> vector<128x33xf32>
    %cst_25 = arith.constant dense<0.000000e+00> : vector<128x33xf32>
    %46 = tpu.matmul %1, %45, %cst_25 {dimension_numbers = #tpu.dot_dimension_numbers<[1], [0], [0], [1], [0, 0, 1, 1], [], []>} : vector<128x128xf32>, vector<128x33xf32>, vector<128x33xf32> -> vector<128x33xf32>
    %47 = vector.extract_strided_slice %46 {offsets = [0, 0], sizes = [128, 32], strides = [1, 1]} : vector<128x33xf32> to vector<128x32xf32>
    %48 = vector.extract_strided_slice %46 {offsets = [0, 32], sizes = [128, 1], strides = [1, 1]} : vector<128x33xf32> to vector<128x1xf32>
    %cst_26 = arith.constant 1.000000e-16 : f32
    %49 = vector.broadcast %cst_26 : f32 to vector<128x1xf32>
    %50 = arith.addf %48, %49 : vector<128x1xf32>
    %51 = vector.broadcast %50 : vector<128x1xf32> to vector<128x32xf32>
    %52 = arith.divf %47, %51 : vector<128x32xf32>
    %c0_27 = arith.constant 0 : index
    %c0_28 = arith.constant 0 : index
    %53 = vector.load %arg10[%c0_27, %c0_28] : memref<1x32xf32, #tpu.memory_space<vmem>>, vector<1x32xf32>
    %54 = vector.broadcast %53 : vector<1x32xf32> to vector<128x32xf32>
    %55 = arith.addf %52, %54 : vector<128x32xf32>
    %cst_29 = arith.constant 0.000000e+00 : f32
    %56 = vector.broadcast %cst_29 : f32 to vector<128x32xf32>
    %57 = arith.maximumf %55, %56 : vector<128x32xf32>
    %c0_30 = arith.constant 0 : index
    %c0_31 = arith.constant 0 : index
    %58 = vector.load %arg11[%c0_30, %c0_31] : memref<1x32xf32, #tpu.memory_space<vmem>>, vector<1x32xf32>
    %59 = vector.broadcast %58 : vector<1x32xf32> to vector<128x32xf32>
    %60 = arith.mulf %57, %59 : vector<128x32xf32>
    %c0_32 = arith.constant 0 : index
    %c0_33 = arith.constant 0 : index
    %61 = vector.load %arg12[%c0_32, %c0_33] : memref<1x32xf32, #tpu.memory_space<vmem>>, vector<1x32xf32>
    %62 = vector.broadcast %61 : vector<1x32xf32> to vector<128x32xf32>
    %63 = arith.addf %60, %62 : vector<128x32xf32>
    %c0_34 = arith.constant 0 : index
    %c0_35 = arith.constant 0 : index
    %64 = vector.load %arg13[%c0_34, %c0_35] : memref<32x16xf32, #tpu.memory_space<vmem>>, vector<32x16xf32>
    %cst_36 = arith.constant dense<0.000000e+00> : vector<128x16xf32>
    %65 = tpu.matmul %63, %64, %cst_36 {dimension_numbers = #tpu.dot_dimension_numbers<[1], [0], [0], [1], [0, 0, 1, 1], [], []>} : vector<128x32xf32>, vector<32x16xf32>, vector<128x16xf32> -> vector<128x16xf32>
    %c0_37 = arith.constant 0 : index
    %c0_38 = arith.constant 0 : index
    %66 = vector.load %arg14[%c0_37, %c0_38] : memref<1x16xf32, #tpu.memory_space<vmem>>, vector<1x16xf32>
    %67 = vector.broadcast %66 : vector<1x16xf32> to vector<128x16xf32>
    %68 = arith.addf %65, %67 : vector<128x16xf32>
    %69 = vector.extract_strided_slice %68 {offsets = [0, 0], sizes = [128, 8], strides = [1, 1]} : vector<128x16xf32> to vector<128x8xf32>
    %70 = vector.extract_strided_slice %68 {offsets = [0, 8], sizes = [128, 8], strides = [1, 1]} : vector<128x16xf32> to vector<128x8xf32>
    %71 = tpu.concatenate %69, %69 in 1 : vector<128x8xf32>, vector<128x8xf32> -> vector<128x16xf32>
    %cst_39 = arith.constant 0.000000e+00 : f32
    %72 = vector.broadcast %cst_39 : f32 to vector<128x8xf32>
    %73 = tpu.concatenate %70, %72 in 1 : vector<128x8xf32>, vector<128x8xf32> -> vector<128x16xf32>
    %74 = tpu.concatenate %71, %73 in 0 : vector<128x16xf32>, vector<128x16xf32> -> vector<256x16xf32>
    %cst_40 = arith.constant dense<0.000000e+00> : vector<128x16xf32>
    %75 = tpu.matmul %0, %74, %cst_40 {dimension_numbers = #tpu.dot_dimension_numbers<[1], [0], [0], [1], [0, 0, 1, 1], [], []>} : vector<128x256xf32>, vector<256x16xf32>, vector<128x16xf32> -> vector<128x16xf32>
    %76 = vector.extract_strided_slice %75 {offsets = [0, 0], sizes = [128, 8], strides = [1, 1]} : vector<128x16xf32> to vector<128x8xf32>
    %77 = vector.extract_strided_slice %75 {offsets = [0, 8], sizes = [128, 8], strides = [1, 1]} : vector<128x16xf32> to vector<128x8xf32>
    %c0_41 = arith.constant 0 : index
    %c0_42 = arith.constant 0 : index
    %78 = vector.load %arg15[%c0_41, %c0_42] : memref<6x8xf32, #tpu.memory_space<vmem>>, vector<6x8xf32>
    %cst_43 = arith.constant dense<0.000000e+00> : vector<128x8xf32>
    %79 = tpu.matmul %2, %78, %cst_43 {dimension_numbers = #tpu.dot_dimension_numbers<[1], [0], [0], [1], [0, 0, 1, 1], [], []>} : vector<128x6xf32>, vector<6x8xf32>, vector<128x8xf32> -> vector<128x8xf32>
    %80 = arith.addf %76, %79 : vector<128x8xf32>
    %cst_44 = arith.constant 0.000000e+00 : f32
    %81 = vector.broadcast %cst_44 : f32 to vector<128x8xf32>
    %82 = arith.cmpf ogt, %80, %81 : vector<128x8xf32>
    %cst_45 = arith.constant 2.000000e-01 : f32
    %83 = vector.broadcast %cst_45 : f32 to vector<128x8xf32>
    %84 = arith.mulf %83, %80 : vector<128x8xf32>
    %85 = arith.select %82, %80, %84 : vector<128x8xi1>, vector<128x8xf32>
    %c0_46 = arith.constant 0 : index
    %c0_47 = arith.constant 0 : index
    %86 = vector.load %arg16[%c0_46, %c0_47] : memref<1x8xf32, #tpu.memory_space<vmem>>, vector<1x8xf32>
    %87 = vector.broadcast %86 : vector<1x8xf32> to vector<128x8xf32>
    %88 = arith.mulf %85, %87 : vector<128x8xf32>
    %cst_48 = arith.constant dense<0.000000e+00> : vector<128xf32>
    %89 = vector.multi_reduction <add>, %88, %cst_48 [1] : vector<128x8xf32> to vector<128xf32>
    %90 = vector.shape_cast %89 : vector<128xf32> to vector<128x1xf32>
    %cst_49 = arith.constant 0.000000e+00 : f32
    %91 = vector.broadcast %cst_49 : f32 to vector<128x128xf32>
    %92 = arith.cmpf ogt, %3, %91 : vector<128x128xf32>
    %cst_50 = arith.constant -1.000000e+30 : f32
    %93 = vector.shape_cast %90 : vector<128x1xf32> to vector<128x1xf32>
    %94 = vector.broadcast %93 : vector<128x1xf32> to vector<128x128xf32>
    %95 = vector.broadcast %cst_50 : f32 to vector<128x128xf32>
    %96 = arith.select %92, %94, %95 : vector<128x128xi1>, vector<128x128xf32>
    %cst_51 = arith.constant dense<0xFF800000> : vector<128xf32>
    %97 = vector.multi_reduction <maximumf>, %96, %cst_51 [0] : vector<128x128xf32> to vector<128xf32>
    %98 = vector.shape_cast %97 : vector<128xf32> to vector<1x128xf32>
    %cst_52 = arith.constant dense<0.000000e+00> : vector<128x1xf32>
    %99 = tpu.matmul %3, %98, %cst_52 {dimension_numbers = #tpu.dot_dimension_numbers<[1], [1], [0], [0], [0, 0, 1, 0], [], []>} : vector<128x128xf32>, vector<1x128xf32>, vector<128x1xf32> -> vector<128x1xf32>
    %100 = arith.subf %90, %99 : vector<128x1xf32>
    %101 = math.exp %100 : vector<128x1xf32>
    %102 = vector.broadcast %101 : vector<128x1xf32> to vector<128x8xf32>
    %103 = arith.mulf %102, %77 : vector<128x8xf32>
    %104 = tpu.concatenate %103, %101 in 1 : vector<128x8xf32>, vector<128x1xf32> -> vector<128x9xf32>
    %cst_53 = arith.constant dense<0.000000e+00> : vector<128x9xf32>
    %105 = tpu.matmul %1, %104, %cst_53 {dimension_numbers = #tpu.dot_dimension_numbers<[1], [0], [0], [1], [0, 0, 1, 1], [], []>} : vector<128x128xf32>, vector<128x9xf32>, vector<128x9xf32> -> vector<128x9xf32>
    %106 = vector.extract_strided_slice %105 {offsets = [0, 0], sizes = [128, 8], strides = [1, 1]} : vector<128x9xf32> to vector<128x8xf32>
    %107 = vector.extract_strided_slice %105 {offsets = [0, 8], sizes = [128, 1], strides = [1, 1]} : vector<128x9xf32> to vector<128x1xf32>
    %cst_54 = arith.constant 1.000000e-16 : f32
    %108 = vector.broadcast %cst_54 : f32 to vector<128x1xf32>
    %109 = arith.addf %107, %108 : vector<128x1xf32>
    %110 = vector.broadcast %109 : vector<128x1xf32> to vector<128x8xf32>
    %111 = arith.divf %106, %110 : vector<128x8xf32>
    %c0_55 = arith.constant 0 : index
    %c0_56 = arith.constant 0 : index
    %112 = vector.load %arg17[%c0_55, %c0_56] : memref<1x8xf32, #tpu.memory_space<vmem>>, vector<1x8xf32>
    %113 = vector.broadcast %112 : vector<1x8xf32> to vector<128x8xf32>
    %114 = arith.addf %111, %113 : vector<128x8xf32>
    %115 = arith.negf %114 : vector<128x8xf32>
    %116 = math.exp %115 : vector<128x8xf32>
    %cst_57 = arith.constant 1.000000e+00 : f32
    %117 = vector.broadcast %cst_57 : f32 to vector<128x8xf32>
    %118 = arith.addf %117, %116 : vector<128x8xf32>
    %119 = arith.divf %117, %118 : vector<128x8xf32>
    %c0_58 = arith.constant 0 : index
    %c0_59 = arith.constant 0 : index
    %120 = vector.load %arg18[%c0_58, %c0_59] : memref<1x8xf32, #tpu.memory_space<vmem>>, vector<1x8xf32>
    %121 = vector.broadcast %120 : vector<1x8xf32> to vector<128x8xf32>
    %122 = arith.mulf %119, %121 : vector<128x8xf32>
    %c0_60 = arith.constant 0 : index
    %c0_61 = arith.constant 0 : index
    %123 = vector.load %arg19[%c0_60, %c0_61] : memref<1x8xf32, #tpu.memory_space<vmem>>, vector<1x8xf32>
    %124 = vector.broadcast %123 : vector<1x8xf32> to vector<128x8xf32>
    %125 = arith.addf %122, %124 : vector<128x8xf32>
    %c0_62 = arith.constant 0 : index
    %c0_63 = arith.constant 0 : index
    %126 = vector.load %arg4[%c0_62, %c0_63] : memref<2x128xf32, #tpu.memory_space<vmem>>, vector<2x128xf32>
    %cst_64 = arith.constant dense<0.000000e+00> : vector<2x8xf32>
    %127 = tpu.matmul %126, %125, %cst_64 {dimension_numbers = #tpu.dot_dimension_numbers<[1], [0], [0], [1], [0, 0, 1, 1], [], []>} : vector<2x128xf32>, vector<128x8xf32>, vector<2x8xf32> -> vector<2x8xf32>
    %c0_65 = arith.constant 0 : index
    %c0_66 = arith.constant 0 : index
    %128 = vector.load %arg20[%c0_65, %c0_66] : memref<8x32xf32, #tpu.memory_space<vmem>>, vector<8x32xf32>
    %cst_67 = arith.constant dense<0.000000e+00> : vector<2x32xf32>
    %129 = tpu.matmul %127, %128, %cst_67 {dimension_numbers = #tpu.dot_dimension_numbers<[1], [0], [0], [1], [0, 0, 1, 1], [], []>} : vector<2x8xf32>, vector<8x32xf32>, vector<2x32xf32> -> vector<2x32xf32>
    %c0_68 = arith.constant 0 : index
    %c0_69 = arith.constant 0 : index
    %130 = vector.load %arg5[%c0_68, %c0_69] : memref<2x22xf32, #tpu.memory_space<vmem>>, vector<2x22xf32>
    %c0_70 = arith.constant 0 : index
    %c0_71 = arith.constant 0 : index
    %131 = vector.load %arg21[%c0_70, %c0_71] : memref<22x32xf32, #tpu.memory_space<vmem>>, vector<22x32xf32>
    %cst_72 = arith.constant dense<0.000000e+00> : vector<2x32xf32>
    %132 = tpu.matmul %130, %131, %cst_72 {dimension_numbers = #tpu.dot_dimension_numbers<[1], [0], [0], [1], [0, 0, 1, 1], [], []>} : vector<2x22xf32>, vector<22x32xf32>, vector<2x32xf32> -> vector<2x32xf32>
    %133 = arith.addf %129, %132 : vector<2x32xf32>
    %c0_73 = arith.constant 0 : index
    %c0_74 = arith.constant 0 : index
    %134 = vector.load %arg22[%c0_73, %c0_74] : memref<1x32xf32, #tpu.memory_space<vmem>>, vector<1x32xf32>
    %135 = vector.broadcast %134 : vector<1x32xf32> to vector<2x32xf32>
    %136 = arith.addf %133, %135 : vector<2x32xf32>
    %cst_75 = arith.constant 0.000000e+00 : f32
    %137 = vector.broadcast %cst_75 : f32 to vector<2x32xf32>
    %138 = arith.maximumf %136, %137 : vector<2x32xf32>
    %c0_76 = arith.constant 0 : index
    %c0_77 = arith.constant 0 : index
    %139 = vector.load %arg23[%c0_76, %c0_77] : memref<32x16xf32, #tpu.memory_space<vmem>>, vector<32x16xf32>
    %cst_78 = arith.constant dense<0.000000e+00> : vector<2x16xf32>
    %140 = tpu.matmul %138, %139, %cst_78 {dimension_numbers = #tpu.dot_dimension_numbers<[1], [0], [0], [1], [0, 0, 1, 1], [], []>} : vector<2x32xf32>, vector<32x16xf32>, vector<2x16xf32> -> vector<2x16xf32>
    %c0_79 = arith.constant 0 : index
    %c0_80 = arith.constant 0 : index
    %141 = vector.load %arg24[%c0_79, %c0_80] : memref<1x16xf32, #tpu.memory_space<vmem>>, vector<1x16xf32>
    %142 = vector.broadcast %141 : vector<1x16xf32> to vector<2x16xf32>
    %143 = arith.addf %140, %142 : vector<2x16xf32>
    %cst_81 = arith.constant 0.000000e+00 : f32
    %144 = vector.broadcast %cst_81 : f32 to vector<2x16xf32>
    %145 = arith.maximumf %143, %144 : vector<2x16xf32>
    %c0_82 = arith.constant 0 : index
    %c0_83 = arith.constant 0 : index
    %146 = vector.load %arg25[%c0_82, %c0_83] : memref<16x8xf32, #tpu.memory_space<vmem>>, vector<16x8xf32>
    %cst_84 = arith.constant dense<0.000000e+00> : vector<2x8xf32>
    %147 = tpu.matmul %145, %146, %cst_84 {dimension_numbers = #tpu.dot_dimension_numbers<[1], [0], [0], [1], [0, 0, 1, 1], [], []>} : vector<2x16xf32>, vector<16x8xf32>, vector<2x8xf32> -> vector<2x8xf32>
    %c0_85 = arith.constant 0 : index
    %c0_86 = arith.constant 0 : index
    %148 = vector.load %arg26[%c0_85, %c0_86] : memref<1x8xf32, #tpu.memory_space<vmem>>, vector<1x8xf32>
    %149 = vector.broadcast %148 : vector<1x8xf32> to vector<2x8xf32>
    %150 = arith.addf %147, %149 : vector<2x8xf32>
    %cst_87 = arith.constant 0.000000e+00 : f32
    %151 = vector.broadcast %cst_87 : f32 to vector<2x8xf32>
    %152 = arith.maximumf %150, %151 : vector<2x8xf32>
    %c0_88 = arith.constant 0 : index
    %c0_89 = arith.constant 0 : index
    %153 = vector.load %arg27[%c0_88, %c0_89] : memref<8x4xf32, #tpu.memory_space<vmem>>, vector<8x4xf32>
    %cst_90 = arith.constant dense<0.000000e+00> : vector<2x4xf32>
    %154 = tpu.matmul %152, %153, %cst_90 {dimension_numbers = #tpu.dot_dimension_numbers<[1], [0], [0], [1], [0, 0, 1, 1], [], []>} : vector<2x8xf32>, vector<8x4xf32>, vector<2x4xf32> -> vector<2x4xf32>
    %c0_91 = arith.constant 0 : index
    %c0_92 = arith.constant 0 : index
    %155 = vector.load %arg28[%c0_91, %c0_92] : memref<1x4xf32, #tpu.memory_space<vmem>>, vector<1x4xf32>
    %156 = vector.broadcast %155 : vector<1x4xf32> to vector<2x4xf32>
    %157 = arith.addf %154, %156 : vector<2x4xf32>
    %cst_93 = arith.constant 0.000000e+00 : f32
    %158 = vector.broadcast %cst_93 : f32 to vector<2x4xf32>
    %159 = arith.maximumf %157, %158 : vector<2x4xf32>
    %c0_94 = arith.constant 0 : index
    %c0_95 = arith.constant 0 : index
    %160 = vector.load %arg29[%c0_94, %c0_95] : memref<4x2xf32, #tpu.memory_space<vmem>>, vector<4x2xf32>
    %cst_96 = arith.constant dense<0.000000e+00> : vector<2x2xf32>
    %161 = tpu.matmul %159, %160, %cst_96 {dimension_numbers = #tpu.dot_dimension_numbers<[1], [0], [0], [1], [0, 0, 1, 1], [], []>} : vector<2x4xf32>, vector<4x2xf32>, vector<2x2xf32> -> vector<2x2xf32>
    %c0_97 = arith.constant 0 : index
    %c0_98 = arith.constant 0 : index
    %162 = vector.load %arg30[%c0_97, %c0_98] : memref<1x2xf32, #tpu.memory_space<vmem>>, vector<1x2xf32>
    %163 = vector.broadcast %162 : vector<1x2xf32> to vector<2x2xf32>
    %164 = arith.addf %161, %163 : vector<2x2xf32>
    %c0_99 = arith.constant 0 : index
    %c0_100 = arith.constant 0 : index
    %165 = vector.load %arg31[%c0_99, %c0_100] : memref<2x2xf32, #tpu.memory_space<vmem>>, vector<2x2xf32>
    tpu.vector_store %arg31[%c0_99, %c0_100], %164 {strides = array<i32>} : memref<2x2xf32, #tpu.memory_space<vmem>>, vector<2x2xf32>,
    return
  }
}

</mosaic_0001>

<llo_original>
// kernel: bitter_gcn_forward.1
$region0: #{bitter_gcn_forward.1}
  #allocation0 [shape = 'u32[]', space=smem, size = 0x4, offset = 0x4, fixed_abs, tag = 'smem constant byte address 0x4 - core index']
  #allocation1 [shape = 'u32[72,128]{1,0:T(1,128)}', space=vmem, size = 0x9000, scoped, tag = 'internal scratch']
  %s0 = inlined_call_operand.smem [shape: u32[32], index: -1, kind: input, shape index: {}]
  %s1 = sld [smem:[%s0]]
  %s2 = scalar_lea.smem %s0, 1
  %s3 = sld [smem:[%s2]]
  %s4 = scalar_lea.smem %s0, 2
  %s5 = sld [smem:[%s4]]
  %s6 = scalar_lea.smem %s0, 3
  %s7 = sld [smem:[%s6]]
  %s8 = scalar_lea.smem %s0, 4
  %s9 = sld [smem:[%s8]]
  %s10 = scalar_lea.smem %s0, 5
  %s11 = sld [smem:[%s10]]
  %s12 = scalar_lea.smem %s0, 6
  %s13 = sld [smem:[%s12]]
  %s14 = scalar_lea.smem %s0, 7
  %s15 = sld [smem:[%s14]]
  %s16 = scalar_lea.smem %s0, 8
  %s17 = sld [smem:[%s16]]
  %s18 = scalar_lea.smem %s0, 9
  %s19 = sld [smem:[%s18]]
  %s20 = scalar_lea.smem %s0, 10
  %s21 = sld [smem:[%s20]]
  %s22 = scalar_lea.smem %s0, 11
  %s23 = sld [smem:[%s22]]
  %s24 = scalar_lea.smem %s0, 12
  %s25 = sld [smem:[%s24]]
  %s26 = scalar_lea.smem %s0, 13
  %s27 = sld [smem:[%s26]]
  %s28 = scalar_lea.smem %s0, 14
  %s29 = sld [smem:[%s28]]
  %s30 = scalar_lea.smem %s0, 15
  %s31 = sld [smem:[%s30]]
  %s32 = scalar_lea.smem %s0, 16
  %s33 = sld [smem:[%s32]]
  %s34 = scalar_lea.smem %s0, 17
  %s35 = sld [smem:[%s34]]
  %s36 = scalar_lea.smem %s0, 18
  %s37 = sld [smem:[%s36]]
  %s38 = scalar_lea.smem %s0, 19
  %s39 = sld [smem:[%s38]]
  %s40 = scalar_lea.smem %s0, 20
  %s41 = sld [smem:[%s40]]
  %s42 = scalar_lea.smem %s0, 21
  %s43 = sld [smem:[%s42]]
  %s44 = scalar_lea.smem %s0, 22
  %s45 = sld [smem:[%s44]]
  %s46 = scalar_lea.smem %s0, 23
  %s47 = sld [smem:[%s46]]
  %s48 = scalar_lea.smem %s0, 24
  %s49 = sld [smem:[%s48]]
  %s50 = scalar_lea.smem %s0, 25
  %s51 = sld [smem:[%s50]]
  %s52 = scalar_lea.smem %s0, 26
  %s53 = sld [smem:[%s52]]
  %s54 = scalar_lea.smem %s0, 27
  %s55 = sld [smem:[%s54]]
  %s56 = scalar_lea.smem %s0, 28
  %s57 = sld [smem:[%s56]]
  %s58 = scalar_lea.smem %s0, 29
  %s59 = sld [smem:[%s58]]
  %s60 = scalar_lea.smem %s0, 30
  %s61 = sld [smem:[%s60]]
  %s62 = scalar_lea.smem %s0, 31
  %s63 = sld [smem:[%s62]]
  %s64 = sld [smem:[#allocation0]]
  $region134: #{bitter_gcn_forward.1} parent=0
    _
  %s66 = ssub.s32 1, %s64
  %s67 = scalar_select 0, %s66, %s64
  $region1: #{bitter_gcn_forward.1} parent=0
    #allocation2 [shape = 'u8[1024]{0}', space=vmem, size = 0x400, scoped, tag = 'output window, operand 0, single buffered']
    #allocation3 [shape = 's32[1]{0}', space=sflag, size = 0x4, scoped, tag = 'scoped memory for bitter_gcn_forward.1']
    %68 = vsyncpa [#allocation3], 0
    // Predicated region
    $region2: #{bitter_gcn_forward.1} parent=1 // pred_check
      _
    $region3: #{bitter_gcn_forward.1} parent=1 // pred_check_branch
      %70 = sbr.rel (0) target = $region5
    $region4: #{bitter_gcn_forward.1} parent=1 // pred_region
      _
    $region5: #{bitter_gcn_forward.1} parent=1 // pred_fallthru
      _
    // Predicated region
    $region6: #{bitter_gcn_forward.1} parent=1 // pred_check
      _
    $region7: #{bitter_gcn_forward.1} parent=1 // pred_check_branch
      %72 = sbr.rel (0) target = $region9
    $region8: #{bitter_gcn_forward.1} parent=1 // pred_region
      _
    $region9: #{bitter_gcn_forward.1} parent=1 // pred_fallthru
      _
    // Predicated region
    $region10: #{bitter_gcn_forward.1} parent=1 // pred_check
      _
    $region11: #{bitter_gcn_forward.1} parent=1 // pred_check_branch
      %74 = sbr.rel (0) target = $region13
    $region12: #{bitter_gcn_forward.1} parent=1 // pred_region
      _
    $region13: #{bitter_gcn_forward.1} parent=1 // pred_fallthru
      _
    // Predicated region
    $region14: #{bitter_gcn_forward.1} parent=1 // pred_check
      _
    $region15: #{bitter_gcn_forward.1} parent=1 // pred_check_branch
      %76 = sbr.rel (0) target = $region17
    $region16: #{bitter_gcn_forward.1} parent=1 // pred_region
      _
    $region17: #{bitter_gcn_forward.1} parent=1 // pred_fallthru
      _
    // Predicated region
    $region18: #{bitter_gcn_forward.1} parent=1 // pred_check
      _
    $region19: #{bitter_gcn_forward.1} parent=1 // pred_check_branch
      %78 = sbr.rel (0) target = $region21
    $region20: #{bitter_gcn_forward.1} parent=1 // pred_region
      _
    $region21: #{bitter_gcn_forward.1} parent=1 // pred_fallthru
      _
    // Predicated region
    $region22: #{bitter_gcn_forward.1} parent=1 // pred_check
      _
    $region23: #{bitter_gcn_forward.1} parent=1 // pred_check_branch
      %80 = sbr.rel (0) target = $region25
    $region24: #{bitter_gcn_forward.1} parent=1 // pred_region
      _
    $region25: #{bitter_gcn_forward.1} parent=1 // pred_fallthru
      _
    // Predicated region
    $region26: #{bitter_gcn_forward.1} parent=1 // pred_check
      _
    $region27: #{bitter_gcn_forward.1} parent=1 // pred_check_branch
      %82 = sbr.rel (0) target = $region29
    $region28: #{bitter_gcn_forward.1} parent=1 // pred_region
      _
    $region29: #{bitter_gcn_forward.1} parent=1 // pred_fallthru
      _
    // Predicated region
    $region30: #{bitter_gcn_forward.1} parent=1 // pred_check
      _
    $region31: #{bitter_gcn_forward.1} parent=1 // pred_check_branch
      %84 = sbr.rel (0) target = $region33
    $region32: #{bitter_gcn_forward.1} parent=1 // pred_region
      _
    $region33: #{bitter_gcn_forward.1} parent=1 // pred_fallthru
      _
    // Predicated region
    $region34: #{bitter_gcn_forward.1} parent=1 // pred_check
      _
    $region35: #{bitter_gcn_forward.1} parent=1 // pred_check_branch
      %86 = sbr.rel (0) target = $region37
    $region36: #{bitter_gcn_forward.1} parent=1 // pred_region
      _
    $region37: #{bitter_gcn_forward.1} parent=1 // pred_fallthru
      _
    // Predicated region
    $region38: #{bitter_gcn_forward.1} parent=1 // pred_check
      _
    $region39: #{bitter_gcn_forward.1} parent=1 // pred_check_branch
      %88 = sbr.rel (0) target = $region41
    $region40: #{bitter_gcn_forward.1} parent=1 // pred_region
      _
    $region41: #{bitter_gcn_forward.1} parent=1 // pred_fallthru
      _
    // Predicated region
    $region42: #{bitter_gcn_forward.1} parent=1 // pred_check
      _
    $region43: #{bitter_gcn_forward.1} parent=1 // pred_check_branch
      %90 = sbr.rel (0) target = $region45
    $region44: #{bitter_gcn_forward.1} parent=1 // pred_region
      _
    $region45: #{bitter_gcn_forward.1} parent=1 // pred_fallthru
      _
    // Predicated region
    $region46: #{bitter_gcn_forward.1} parent=1 // pred_check
      _
    $region47: #{bitter_gcn_forward.1} parent=1 // pred_check_branch
      %92 = sbr.rel (0) target = $region49
    $region48: #{bitter_gcn_forward.1} parent=1 // pred_region
      _
    $region49: #{bitter_gcn_forward.1} parent=1 // pred_fallthru
      _
    // Predicated region
    $region50: #{bitter_gcn_forward.1} parent=1 // pred_check
      _
    $region51: #{bitter_gcn_forward.1} parent=1 // pred_check_branch
      %94 = sbr.rel (0) target = $region53
    $region52: #{bitter_gcn_forward.1} parent=1 // pred_region
      _
    $region53: #{bitter_gcn_forward.1} parent=1 // pred_fallthru
      _
    // Predicated region
    $region54: #{bitter_gcn_forward.1} parent=1 // pred_check
      _
    $region55: #{bitter_gcn_forward.1} parent=1 // pred_check_branch
      %96 = sbr.rel (0) target = $region57
    $region56: #{bitter_gcn_forward.1} parent=1 // pred_region
      _
    $region57: #{bitter_gcn_forward.1} parent=1 // pred_fallthru
      _
    // Predicated region
    $region58: #{bitter_gcn_forward.1} parent=1 // pred_check
      _
    $region59: #{bitter_gcn_forward.1} parent=1 // pred_check_branch
      %98 = sbr.rel (0) target = $region61
    $region60: #{bitter_gcn_forward.1} parent=1 // pred_region
      _
    $region61: #{bitter_gcn_forward.1} parent=1 // pred_fallthru
      _
    // Predicated region
    $region62: #{bitter_gcn_forward.1} parent=1 // pred_check
      _
    $region63: #{bitter_gcn_forward.1} parent=1 // pred_check_branch
      %100 = sbr.rel (0) target = $region65
    $region64: #{bitter_gcn_forward.1} parent=1 // pred_region
      _
    $region65: #{bitter_gcn_forward.1} parent=1 // pred_fallthru
      _
    // Predicated region
    $region66: #{bitter_gcn_forward.1} parent=1 // pred_check
      _
    $region67: #{bitter_gcn_forward.1} parent=1 // pred_check_branch
      %102 = sbr.rel (0) target = $region69
    $region68: #{bitter_gcn_forward.1} parent=1 // pred_region
      _
    $region69: #{bitter_gcn_forward.1} parent=1 // pred_fallthru
      _
    // Predicated region
    $region70: #{bitter_gcn_forward.1} parent=1 // pred_check
      _
    $region71: #{bitter_gcn_forward.1} parent=1 // pred_check_branch
      %104 = sbr.rel (0) target = $region73
    $region72: #{bitter_gcn_forward.1} parent=1 // pred_region
      _
    $region73: #{bitter_gcn_forward.1} parent=1 // pred_fallthru
      _
    // Predicated region
    $region74: #{bitter_gcn_forward.1} parent=1 // pred_check
      _
    $region75: #{bitter_gcn_forward.1} parent=1 // pred_check_branch
      %106 = sbr.rel (0) target = $region77
    $region76: #{bitter_gcn_forward.1} parent=1 // pred_region
      _
    $region77: #{bitter_gcn_forward.1} parent=1 // pred_fallthru
      _
    // Predicated region
    $region78: #{bitter_gcn_forward.1} parent=1 // pred_check
      _
    $region79: #{bitter_gcn_forward.1} parent=1 // pred_check_branch
      %108 = sbr.rel (0) target = $region81
    $region80: #{bitter_gcn_forward.1} parent=1 // pred_region
      _
    $region81: #{bitter_gcn_forward.1} parent=1 // pred_fallthru
      _
    // Predicated region
    $region82: #{bitter_gcn_forward.1} parent=1 // pred_check
      _
    $region83: #{bitter_gcn_forward.1} parent=1 // pred_check_branch
      %110 = sbr.rel (0) target = $region85
    $region84: #{bitter_gcn_forward.1} parent=1 // pred_region
      _
    $region85: #{bitter_gcn_forward.1} parent=1 // pred_fallthru
      _
    // Predicated region
    $region86: #{bitter_gcn_forward.1} parent=1 // pred_check
      _
    $region87: #{bitter_gcn_forward.1} parent=1 // pred_check_branch
      %112 = sbr.rel (0) target = $region89
    $region88: #{bitter_gcn_forward.1} parent=1 // pred_region
      _
    $region89: #{bitter_gcn_forward.1} parent=1 // pred_fallthru
      _
    // Predicated region
    $region90: #{bitter_gcn_forward.1} parent=1 // pred_check
      _
    $region91: #{bitter_gcn_forward.1} parent=1 // pred_check_branch
      %114 = sbr.rel (0) target = $region93
    $region92: #{bitter_gcn_forward.1} parent=1 // pred_region
      _
    $region93: #{bitter_gcn_forward.1} parent=1 // pred_fallthru
      _
    // Predicated region
    $region94: #{bitter_gcn_forward.1} parent=1 // pred_check
      _
    $region95: #{bitter_gcn_forward.1} parent=1 // pred_check_branch
      %116 = sbr.rel (0) target = $region97
    $region96: #{bitter_gcn_forward.1} parent=1 // pred_region
      _
    $region97: #{bitter_gcn_forward.1} parent=1 // pred_fallthru
      _
    // Predicated region
    $region98: #{bitter_gcn_forward.1} parent=1 // pred_check
      _
    $region99: #{bitter_gcn_forward.1} parent=1 // pred_check_branch
      %118 = sbr.rel (0) target = $region101
    $region100: #{bitter_gcn_forward.1} parent=1 // pred_region
      _
    $region101: #{bitter_gcn_forward.1} parent=1 // pred_fallthru
      _
    // Predicated region
    $region102: #{bitter_gcn_forward.1} parent=1 // pred_check
      _
    $region103: #{bitter_gcn_forward.1} parent=1 // pred_check_branch
      %120 = sbr.rel (0) target = $region105
    $region104: #{bitter_gcn_forward.1} parent=1 // pred_region
      _
    $region105: #{bitter_gcn_forward.1} parent=1 // pred_fallthru
      _
    // Predicated region
    $region106: #{bitter_gcn_forward.1} parent=1 // pred_check
      _
    $region107: #{bitter_gcn_forward.1} parent=1 // pred_check_branch
      %122 = sbr.rel (0) target = $region109
    $region108: #{bitter_gcn_forward.1} parent=1 // pred_region
      _
    $region109: #{bitter_gcn_forward.1} parent=1 // pred_fallthru
      _
    // Predicated region
    $region110: #{bitter_gcn_forward.1} parent=1 // pred_check
      _
    $region111: #{bitter_gcn_forward.1} parent=1 // pred_check_branch
      %124 = sbr.rel (0) target = $region113
    $region112: #{bitter_gcn_forward.1} parent=1 // pred_region
      _
    $region113: #{bitter_gcn_forward.1} parent=1 // pred_fallthru
      _
    // Predicated region
    $region114: #{bitter_gcn_forward.1} parent=1 // pred_check
      _
    $region115: #{bitter_gcn_forward.1} parent=1 // pred_check_branch
      %126 = sbr.rel (0) target = $region117
    $region116: #{bitter_gcn_forward.1} parent=1 // pred_region
      _
    $region117: #{bitter_gcn_forward.1} parent=1 // pred_fallthru
      _
    // Predicated region
    $region118: #{bitter_gcn_forward.1} parent=1 // pred_check
      _
    $region119: #{bitter_gcn_forward.1} parent=1 // pred_check_branch
      %128 = sbr.rel (0) target = $region121
    $region120: #{bitter_gcn_forward.1} parent=1 // pred_region
      _
    $region121: #{bitter_gcn_forward.1} parent=1 // pred_fallthru
      _
    // Predicated region
    $region122: #{bitter_gcn_forward.1} parent=1 // pred_check
      _
    $region123: #{bitter_gcn_forward.1} parent=1 // pred_check_branch
      %130 = sbr.rel (0) target = $region125
    $region124: #{bitter_gcn_forward.1} parent=1 // pred_region
      _
    $region125: #{bitter_gcn_forward.1} parent=1 // pred_fallthru
      _
    %v131 = vld [vmem:[%s5] sm:$0xff]
    %v132 = vld [vmem:[%s5 + $0x8] sm:$0xff]
    %v133 = vld [vmem:[%s5 + $0x10] sm:$0xff]
    %v134 = vld [vmem:[%s5 + $0x18] sm:$0xff]
    %v135 = vld [vmem:[%s5 + $0x20] sm:$0xff]
    %v136 = vld [vmem:[%s5 + $0x28] sm:$0xff]
    %v137 = vld [vmem:[%s5 + $0x30] sm:$0xff]
    %v138 = vld [vmem:[%s5 + $0x38] sm:$0xff]
    %v139 = vld [vmem:[%s5 + $0x40] sm:$0xff]
    %v140 = vld [vmem:[%s5 + $0x48] sm:$0xff]
    %v141 = vld [vmem:[%s5 + $0x50] sm:$0xff]
    %v142 = vld [vmem:[%s5 + $0x58] sm:$0xff]
    %v143 = vld [vmem:[%s5 + $0x60] sm:$0xff]
    %v144 = vld [vmem:[%s5 + $0x68] sm:$0xff]
    %v145 = vld [vmem:[%s5 + $0x70] sm:$0xff]
    %v146 = vld [vmem:[%s5 + $0x78] sm:$0xff]
    %v147 = vld [vmem:[%s5 + $0x80] sm:$0xff]
    %v148 = vld [vmem:[%s5 + $0x88] sm:$0xff]
    %v149 = vld [vmem:[%s5 + $0x90] sm:$0xff]
    %v150 = vld [vmem:[%s5 + $0x98] sm:$0xff]
    %v151 = vld [vmem:[%s5 + $0xa0] sm:$0xff]
    %v152 = vld [vmem:[%s5 + $0xa8] sm:$0xff]
    %v153 = vld [vmem:[%s5 + $0xb0] sm:$0xff]
    %v154 = vld [vmem:[%s5 + $0xb8] sm:$0xff]
    %v155 = vld [vmem:[%s5 + $0xc0] sm:$0xff]
    %v156 = vld [vmem:[%s5 + $0xc8] sm:$0xff]
    %v157 = vld [vmem:[%s5 + $0xd0] sm:$0xff]
    %v158 = vld [vmem:[%s5 + $0xd8] sm:$0xff]
    %v159 = vld [vmem:[%s5 + $0xe0] sm:$0xff]
    %v160 = vld [vmem:[%s5 + $0xe8] sm:$0xff]
    %v161 = vld [vmem:[%s5 + $0xf0] sm:$0xff]
    %v162 = vld [vmem:[%s5 + $0xf8] sm:$0xff]
    %v163 = vld [vmem:[%s7] sm:$0xff]
    %v164 = vld [vmem:[%s7 + $0x8] sm:$0xff]
    %v165 = vld [vmem:[%s7 + $0x10] sm:$0xff]
    %v166 = vld [vmem:[%s7 + $0x18] sm:$0xff]
    %v167 = vld [vmem:[%s7 + $0x20] sm:$0xff]
    %v168 = vld [vmem:[%s7 + $0x28] sm:$0xff]
    %v169 = vld [vmem:[%s7 + $0x30] sm:$0xff]
    %v170 = vld [vmem:[%s7 + $0x38] sm:$0xff]
    %v171 = vld [vmem:[%s7 + $0x40] sm:$0xff]
    %v172 = vld [vmem:[%s7 + $0x48] sm:$0xff]
    %v173 = vld [vmem:[%s7 + $0x50] sm:$0xff]
    %v174 = vld [vmem:[%s7 + $0x58] sm:$0xff]
    %v175 = vld [vmem:[%s7 + $0x60] sm:$0xff]
    %v176 = vld [vmem:[%s7 + $0x68] sm:$0xff]
    %v177 = vld [vmem:[%s7 + $0x70] sm:$0xff]
    %v178 = vld [vmem:[%s7 + $0x78] sm:$0xff]
    %v179 = vld [vmem:[%s3] sm:$0xff]
    %v180 = vld [vmem:[%s3 + $0x8] sm:$0xff]
    %v181 = vld [vmem:[%s3 + $0x10] sm:$0xff]
    %v182 = vld [vmem:[%s3 + $0x18] sm:$0xff]
    %v183 = vld [vmem:[%s3 + $0x20] sm:$0xff]
    %v184 = vld [vmem:[%s3 + $0x28] sm:$0xff]
    %v185 = vld [vmem:[%s3 + $0x30] sm:$0xff]
    %v186 = vld [vmem:[%s3 + $0x38] sm:$0xff]
    %v187 = vld [vmem:[%s3 + $0x40] sm:$0xff]
    %v188 = vld [vmem:[%s3 + $0x48] sm:$0xff]
    %v189 = vld [vmem:[%s3 + $0x50] sm:$0xff]
    %v190 = vld [vmem:[%s3 + $0x58] sm:$0xff]
    %v191 = vld [vmem:[%s3 + $0x60] sm:$0xff]
    %v192 = vld [vmem:[%s3 + $0x68] sm:$0xff]
    %v193 = vld [vmem:[%s3 + $0x70] sm:$0xff]
    %v194 = vld [vmem:[%s3 + $0x78] sm:$0xff]
    %v195 = vld [vmem:[%s1] sm:$0xff]
    %v196 = vld [vmem:[%s1 + $0x8] sm:$0xff]
    %v197 = vld [vmem:[%s1 + $0x10] sm:$0xff]
    %v198 = vld [vmem:[%s1 + $0x18] sm:$0xff]
    %v199 = vld [vmem:[%s1 + $0x20] sm:$0xff]
    %v200 = vld [vmem:[%s1 + $0x28] sm:$0xff]
    %v201 = vld [vmem:[%s1 + $0x30] sm:$0xff]
    %v202 = vld [vmem:[%s1 + $0x38] sm:$0xff]
    %v203 = vld [vmem:[%s1 + $0x40] sm:$0xff]
    %v204 = vld [vmem:[%s1 + $0x48] sm:$0xff]
    %v205 = vld [vmem:[%s1 + $0x50] sm:$0xff]
    %v206 = vld [vmem:[%s1 + $0x58] sm:$0xff]
    %v207 = vld [vmem:[%s1 + $0x60] sm:$0xff]
    %v208 = vld [vmem:[%s1 + $0x68] sm:$0xff]
    %v209 = vld [vmem:[%s1 + $0x70] sm:$0xff]
    %v210 = vld [vmem:[%s1 + $0x78] sm:$0xff]
    %v211 = vld [vmem:[%s13] sm:$0xff]
    %v212 = vld [vmem:[%s13 + $0x8] sm:$0xf]
    %v213 = vld [vmem:[%s15] sm:$0x1]
    %v215 = vperm.slane %v213, 0
    %vm217 = vcmask 97280
    %v219 = vsel %vm217, %v195, 0
    %v222 = vsel %vm217, %v196, 0
    %v225 = vsel %vm217, %v197, 0
    %v228 = vsel %vm217, %v198, 0
    %v231 = vsel %vm217, %v199, 0
    %v234 = vsel %vm217, %v200, 0
    %v237 = vsel %vm217, %v201, 0
    %v240 = vsel %vm217, %v202, 0
    %v243 = vsel %vm217, %v203, 0
    %v246 = vsel %vm217, %v204, 0
    %v249 = vsel %vm217, %v205, 0
    %v252 = vsel %vm217, %v206, 0
    %v255 = vsel %vm217, %v207, 0
    %v258 = vsel %vm217, %v208, 0
    %v261 = vsel %vm217, %v209, 0
    %v264 = vsel %vm217, %v210, 0
    %vm266 = vcmask 1043456
    %v268 = vsel %vm266, %v212, 0
    %270 = vmatpush.msra.mxu0 0.0
    %271 = vmatpush.msra.mxu0 0.0
    %272 = vmatpush.msra.mxu0 0.0
    %273 = vmatpush.msra.mxu0 0.0
    %274 = vmatpush.msra.mxu0 0.0
    %275 = vmatpush.msra.mxu0 0.0
    %276 = vmatpush.msra.mxu0 0.0
    %277 = vmatpush.msra.mxu0 0.0
    %278 = vmatpush.msra.mxu0 0.0
    %279 = vmatpush.msra.mxu0 0.0
    %280 = vmatpush.msra.mxu0 0.0
    %281 = vmatpush.msra.mxu0 0.0
    %282 = vmatpush.msra.mxu0 0.0
    %283 = vmatpush.msra.mxu0 0.0
    %284 = vmatpush.msra.mxu0 %v268
    %285 = vmatpush.msra.mxu0 %v211
    %286 = vmatmul.f32.gmra.mxu0 %v219
    %v287 = vpop.f32.mrf.mxu0
    %v288 = vadd.f32 %v215, %v287
    %289 = vmatmul.f32.gmra.mxu0 %v222
    %v290 = vpop.f32.mrf.mxu0
    %v291 = vadd.f32 %v215, %v290
    %292 = vmatmul.f32.gmra.mxu0 %v225
    %v293 = vpop.f32.mrf.mxu0
    %v294 = vadd.f32 %v215, %v293
    %295 = vmatmul.f32.gmra.mxu0 %v228
    %v296 = vpop.f32.mrf.mxu0
    %v297 = vadd.f32 %v215, %v296
    %298 = vmatmul.f32.gmra.mxu0 %v231
    %v299 = vpop.f32.mrf.mxu0
    %v300 = vadd.f32 %v215, %v299
    %301 = vmatmul.f32.gmra.mxu0 %v234
    %v302 = vpop.f32.mrf.mxu0
    %v303 = vadd.f32 %v215, %v302
    %304 = vmatmul.f32.gmra.mxu0 %v237
    %v305 = vpop.f32.mrf.mxu0
    %v306 = vadd.f32 %v215, %v305
    %307 = vmatmul.f32.gmra.mxu0 %v240
    %v308 = vpop.f32.mrf.mxu0
    %v309 = vadd.f32 %v215, %v308
    %310 = vmatmul.f32.gmra.mxu0 %v243
    %v311 = vpop.f32.mrf.mxu0
    %v312 = vadd.f32 %v215, %v311
    %313 = vmatmul.f32.gmra.mxu0 %v246
    %v314 = vpop.f32.mrf.mxu0
    %v315 = vadd.f32 %v215, %v314
    %316 = vmatmul.f32.gmra.mxu0 %v249
    %v317 = vpop.f32.mrf.mxu0
    %v318 = vadd.f32 %v215, %v317
    %319 = vmatmul.f32.gmra.mxu0 %v252
    %v320 = vpop.f32.mrf.mxu0
    %v321 = vadd.f32 %v215, %v320
    %322 = vmatmul.f32.gmra.mxu0 %v255
    %v323 = vpop.f32.mrf.mxu0
    %v324 = vadd.f32 %v215, %v323
    %325 = vmatmul.f32.gmra.mxu0 %v258
    %v326 = vpop.f32.mrf.mxu0
    %v327 = vadd.f32 %v215, %v326
    %328 = vmatmul.f32.gmra.mxu0 %v261
    %v329 = vpop.f32.mrf.mxu0
    %v330 = vadd.f32 %v215, %v329
    %331 = vmatmul.f32.gmra.mxu0 %v264
    %v332 = vpop.f32.mrf.mxu0
    %v333 = vadd.f32 %v215, %v332
    %334 = vdwg.mxu0
    %351 = vrot.lane.b32.xlu0 %v288, 32
    %v352 = vpop.permute.xlu0 %351
    %353 = vrot.lane.b32.xlu0 %v291, 32
    %v354 = vpop.permute.xlu0 %353
    %355 = vrot.lane.b32.xlu0 %v294, 32
    %v356 = vpop.permute.xlu0 %355
    %357 = vrot.lane.b32.xlu0 %v297, 32
    %v358 = vpop.permute.xlu0 %357
    %359 = vrot.lane.b32.xlu0 %v300, 32
    %v360 = vpop.permute.xlu0 %359
    %361 = vrot.lane.b32.xlu0 %v303, 32
    %v362 = vpop.permute.xlu0 %361
    %363 = vrot.lane.b32.xlu0 %v306, 32
    %v364 = vpop.permute.xlu0 %363
    %365 = vrot.lane.b32.xlu0 %v309, 32
    %v366 = vpop.permute.xlu0 %365
    %367 = vrot.lane.b32.xlu0 %v312, 32
    %v368 = vpop.permute.xlu0 %367
    %369 = vrot.lane.b32.xlu0 %v315, 32
    %v370 = vpop.permute.xlu0 %369
    %371 = vrot.lane.b32.xlu0 %v318, 32
    %v372 = vpop.permute.xlu0 %371
    %373 = vrot.lane.b32.xlu0 %v321, 32
    %v374 = vpop.permute.xlu0 %373
    %375 = vrot.lane.b32.xlu0 %v324, 32
    %v376 = vpop.permute.xlu0 %375
    %377 = vrot.lane.b32.xlu0 %v327, 32
    %v378 = vpop.permute.xlu0 %377
    %379 = vrot.lane.b32.xlu0 %v330, 32
    %v380 = vpop.permute.xlu0 %379
    %381 = vrot.lane.b32.xlu0 %v333, 32
    %v382 = vpop.permute.xlu0 %381
    %vm399 = vcmask 261120
    %v400 = vsel %vm399, %v288, %v352
    %v401 = vsel %vm399, %v291, %v354
    %v402 = vsel %vm399, %v294, %v356
    %v403 = vsel %vm399, %v297, %v358
    %v404 = vsel %vm399, %v300, %v360
    %v405 = vsel %vm399, %v303, %v362
    %v406 = vsel %vm399, %v306, %v364
    %v407 = vsel %vm399, %v309, %v366
    %v408 = vsel %vm399, %v312, %v368
    %v409 = vsel %vm399, %v315, %v370
    %v410 = vsel %vm399, %v318, %v372
    %v411 = vsel %vm399, %v321, %v374
    %v412 = vsel %vm399, %v324, %v376
    %v413 = vsel %vm399, %v327, %v378
    %v414 = vsel %vm399, %v330, %v380
    %v415 = vsel %vm399, %v333, %v382
    %416 = vrot.lane.b32.xlu0 %v288, 96
    %v417 = vpop.permute.xlu0 %416
    %418 = vrot.lane.b32.xlu0 %v291, 96
    %v419 = vpop.permute.xlu0 %418
    %420 = vrot.lane.b32.xlu0 %v294, 96
    %v421 = vpop.permute.xlu0 %420
    %422 = vrot.lane.b32.xlu0 %v297, 96
    %v423 = vpop.permute.xlu0 %422
    %424 = vrot.lane.b32.xlu0 %v300, 96
    %v425 = vpop.permute.xlu0 %424
    %426 = vrot.lane.b32.xlu0 %v303, 96
    %v427 = vpop.permute.xlu0 %426
    %428 = vrot.lane.b32.xlu0 %v306, 96
    %v429 = vpop.permute.xlu0 %428
    %430 = vrot.lane.b32.xlu0 %v309, 96
    %v431 = vpop.permute.xlu0 %430
    %432 = vrot.lane.b32.xlu0 %v312, 96
    %v433 = vpop.permute.xlu0 %432
    %434 = vrot.lane.b32.xlu0 %v315, 96
    %v435 = vpop.permute.xlu0 %434
    %436 = vrot.lane.b32.xlu0 %v318, 96
    %v437 = vpop.permute.xlu0 %436
    %438 = vrot.lane.b32.xlu0 %v321, 96
    %v439 = vpop.permute.xlu0 %438
    %440 = vrot.lane.b32.xlu0 %v324, 96
    %v441 = vpop.permute.xlu0 %440
    %442 = vrot.lane.b32.xlu0 %v327, 96
    %v443 = vpop.permute.xlu0 %442
    %444 = vrot.lane.b32.xlu0 %v330, 96
    %v445 = vpop.permute.xlu0 %444
    %446 = vrot.lane.b32.xlu0 %v333, 96
    %v447 = vpop.permute.xlu0 %446
    %v464 = vsel %vm399, %v417, 0.0
    %v465 = vsel %vm399, %v419, 0.0
    %v466 = vsel %vm399, %v421, 0.0
    %v467 = vsel %vm399, %v423, 0.0
    %v468 = vsel %vm399, %v425, 0.0
    %v469 = vsel %vm399, %v427, 0.0
    %v470 = vsel %vm399, %v429, 0.0
    %v471 = vsel %vm399, %v431, 0.0
    %v472 = vsel %vm399, %v433, 0.0
    %v473 = vsel %vm399, %v435, 0.0
    %v474 = vsel %vm399, %v437, 0.0
    %v475 = vsel %vm399, %v439, 0.0
    %v476 = vsel %vm399, %v441, 0.0
    %v477 = vsel %vm399, %v443, 0.0
    %v478 = vsel %vm399, %v445, 0.0
    %v479 = vsel %vm399, %v447, 0.0
    %480 = vmatpush.msra.mxu0 %v415
    %481 = vmatpush.msra.mxu0 %v414
    %482 = vmatpush.msra.mxu0 %v413
    %483 = vmatpush.msra.mxu0 %v412
    %484 = vmatpush.msra.mxu0 %v411
    %485 = vmatpush.msra.mxu0 %v410
    %486 = vmatpush.msra.mxu0 %v409
    %487 = vmatpush.msra.mxu0 %v408
    %488 = vmatpush.msra.mxu0 %v407
    %489 = vmatpush.msra.mxu0 %v406
    %490 = vmatpush.msra.mxu0 %v405
    %491 = vmatpush.msra.mxu0 %v404
    %492 = vmatpush.msra.mxu0 %v403
    %493 = vmatpush.msra.mxu0 %v402
    %494 = vmatpush.msra.mxu0 %v401
    %495 = vmatpush.msra.mxu0 %v400
    %496 = vmatmul.f32.gmra.mxu0 %v131
    %v497 = vpop.f32.mrf.mxu0
    %v498 = vadd.f32 0.0, %v497
    %499 = vmatmul.f32.gmra.mxu0 %v133
    %v500 = vpop.f32.mrf.mxu0
    %v501 = vadd.f32 0.0, %v500
    %502 = vmatmul.f32.gmra.mxu0 %v135
    %v503 = vpop.f32.mrf.mxu0
    %v504 = vadd.f32 0.0, %v503
    %505 = vmatmul.f32.gmra.mxu0 %v137
    %v506 = vpop.f32.mrf.mxu0
    %v507 = vadd.f32 0.0, %v506
    %508 = vmatmul.f32.gmra.mxu0 %v139
    %v509 = vpop.f32.mrf.mxu0
    %v510 = vadd.f32 0.0, %v509
    %511 = vmatmul.f32.gmra.mxu0 %v141
    %v512 = vpop.f32.mrf.mxu0
    %v513 = vadd.f32 0.0, %v512
    %514 = vmatmul.f32.gmra.mxu0 %v143
    %v515 = vpop.f32.mrf.mxu0
    %v516 = vadd.f32 0.0, %v515
    %517 = vmatmul.f32.gmra.mxu0 %v145
    %v518 = vpop.f32.mrf.mxu0
    %v519 = vadd.f32 0.0, %v518
    %520 = vmatmul.f32.gmra.mxu0 %v147
    %v521 = vpop.f32.mrf.mxu0
    %v522 = vadd.f32 0.0, %v521
    %523 = vmatmul.f32.gmra.mxu0 %v149
    %v524 = vpop.f32.mrf.mxu0
    %v525 = vadd.f32 0.0, %v524
    %526 = vmatmul.f32.gmra.mxu0 %v151
    %v527 = vpop.f32.mrf.mxu0
    %v528 = vadd.f32 0.0, %v527
    %529 = vmatmul.f32.gmra.mxu0 %v153
    %v530 = vpop.f32.mrf.mxu0
    %v531 = vadd.f32 0.0, %v530
    %532 = vmatmul.f32.gmra.mxu0 %v155
    %v533 = vpop.f32.mrf.mxu0
    %v534 = vadd.f32 0.0, %v533
    %535 = vmatmul.f32.gmra.mxu0 %v157
    %v536 = vpop.f32.mrf.mxu0
    %v537 = vadd.f32 0.0, %v536
    %538 = vmatmul.f32.gmra.mxu0 %v159
    %v539 = vpop.f32.mrf.mxu0
    %v540 = vadd.f32 0.0, %v539
    %541 = vmatmul.f32.gmra.mxu0 %v161
    %v542 = vpop.f32.mrf.mxu0
    %v543 = vadd.f32 0.0, %v542
    %544 = vdwg.mxu0
    %545 = vmatpush.msra.mxu0 %v479
    %546 = vmatpush.msra.mxu0 %v478
    %547 = vmatpush.msra.mxu0 %v477
    %548 = vmatpush.msra.mxu0 %v476
    %549 = vmatpush.msra.mxu0 %v475
    %550 = vmatpush.msra.mxu0 %v474
    %551 = vmatpush.msra.mxu0 %v473
    %552 = vmatpush.msra.mxu0 %v472
    %553 = vmatpush.msra.mxu0 %v471
    %554 = vmatpush.msra.mxu0 %v470
    %555 = vmatpush.msra.mxu0 %v469
    %556 = vmatpush.msra.mxu0 %v468
    %557 = vmatpush.msra.mxu0 %v467
    %558 = vmatpush.msra.mxu0 %v466
    %559 = vmatpush.msra.mxu0 %v465
    %560 = vmatpush.msra.mxu0 %v464
    %561 = vmatmul.f32.gmra.mxu0 %v132
    %v562 = vpop.f32.mrf.mxu0
    %v563 = vadd.f32 %v498, %v562
    %564 = vmatmul.f32.gmra.mxu0 %v134
    %v565 = vpop.f32.mrf.mxu0
    %v566 = vadd.f32 %v501, %v565
    %567 = vmatmul.f32.gmra.mxu0 %v136
    %v568 = vpop.f32.mrf.mxu0
    %v569 = vadd.f32 %v504, %v568
    %570 = vmatmul.f32.gmra.mxu0 %v138
    %v571 = vpop.f32.mrf.mxu0
    %v572 = vadd.f32 %v507, %v571
    %573 = vmatmul.f32.gmra.mxu0 %v140
    %v574 = vpop.f32.mrf.mxu0
    %v575 = vadd.f32 %v510, %v574
    %576 = vmatmul.f32.gmra.mxu0 %v142
    %v577 = vpop.f32.mrf.mxu0
    %v578 = vadd.f32 %v513, %v577
    %579 = vmatmul.f32.gmra.mxu0 %v144
    %v580 = vpop.f32.mrf.mxu0
    %v581 = vadd.f32 %v516, %v580
    %582 = vmatmul.f32.gmra.mxu0 %v146
    %v583 = vpop.f32.mrf.mxu0
    %v584 = vadd.f32 %v519, %v583
    %585 = vmatmul.f32.gmra.mxu0 %v148
    %v586 = vpop.f32.mrf.mxu0
    %v587 = vadd.f32 %v522, %v586
    %588 = vmatmul.f32.gmra.mxu0 %v150
    %v589 = vpop.f32.mrf.mxu0
    %v590 = vadd.f32 %v525, %v589
    %591 = vmatmul.f32.gmra.mxu0 %v152
    %v592 = vpop.f32.mrf.mxu0
    %v593 = vadd.f32 %v528, %v592
    %594 = vmatmul.f32.gmra.mxu0 %v154
    %v595 = vpop.f32.mrf.mxu0
    %v596 = vadd.f32 %v531, %v595
    %597 = vmatmul.f32.gmra.mxu0 %v156
    %v598 = vpop.f32.mrf.mxu0
    %v599 = vadd.f32 %v534, %v598
    %600 = vmatmul.f32.gmra.mxu0 %v158
    %v601 = vpop.f32.mrf.mxu0
    %v602 = vadd.f32 %v537, %v601
    %603 = vmatmul.f32.gmra.mxu0 %v160
    %v604 = vpop.f32.mrf.mxu0
    %v605 = vadd.f32 %v540, %v604
    %606 = vmatmul.f32.gmra.mxu0 %v162
    %v607 = vpop.f32.mrf.mxu0
    %v608 = vadd.f32 %v543, %v607
    %609 = vdwg.mxu0
    %v610 = vld [vmem:[%s17] sm:$0x3f]
    %vm611 = vcmask 48128
    %v613 = vsel %vm611, %v179, 0
    %v616 = vsel %vm611, %v180, 0
    %v619 = vsel %vm611, %v181, 0
    %v622 = vsel %vm611, %v182, 0
    %v625 = vsel %vm611, %v183, 0
    %v628 = vsel %vm611, %v184, 0
    %v631 = vsel %vm611, %v185, 0
    %v634 = vsel %vm611, %v186, 0
    %v637 = vsel %vm611, %v187, 0
    %v640 = vsel %vm611, %v188, 0
    %v643 = vsel %vm611, %v189, 0
    %v646 = vsel %vm611, %v190, 0
    %v649 = vsel %vm611, %v191, 0
    %v652 = vsel %vm611, %v192, 0
    %v655 = vsel %vm611, %v193, 0
    %v658 = vsel %vm611, %v194, 0
    %vm660 = vcmask 1045504
    %v662 = vsel %vm660, %v610, 0
    %664 = vmatpush.msra.mxu0 0.0
    %665 = vmatpush.msra.mxu0 0.0
    %666 = vmatpush.msra.mxu0 0.0
    %667 = vmatpush.msra.mxu0 0.0
    %668 = vmatpush.msra.mxu0 0.0
    %669 = vmatpush.msra.mxu0 0.0
    %670 = vmatpush.msra.mxu0 0.0
    %671 = vmatpush.msra.mxu0 0.0
    %672 = vmatpush.msra.mxu0 0.0
    %673 = vmatpush.msra.mxu0 0.0
    %674 = vmatpush.msra.mxu0 0.0
    %675 = vmatpush.msra.mxu0 0.0
    %676 = vmatpush.msra.mxu0 0.0
    %677 = vmatpush.msra.mxu0 0.0
    %678 = vmatpush.msra.mxu0 0.0
    %679 = vmatpush.msra.mxu0 %v662
    %680 = vmatmul.f32.gmra.mxu0 %v613
    %v681 = vpop.f32.mrf.mxu0
    %v682 = vadd.f32 0.0, %v681
    %683 = vmatmul.f32.gmra.mxu0 %v616
    %v684 = vpop.f32.mrf.mxu0
    %v685 = vadd.f32 0.0, %v684
    %686 = vmatmul.f32.gmra.mxu0 %v619
    %v687 = vpop.f32.mrf.mxu0
    %v688 = vadd.f32 0.0, %v687
    %689 = vmatmul.f32.gmra.mxu0 %v622
    %v690 = vpop.f32.mrf.mxu0
    %v691 = vadd.f32 0.0, %v690
    %692 = vmatmul.f32.gmra.mxu0 %v625
    %v693 = vpop.f32.mrf.mxu0
    %v694 = vadd.f32 0.0, %v693
    %695 = vmatmul.f32.gmra.mxu0 %v628
    %v696 = vpop.f32.mrf.mxu0
    %v697 = vadd.f32 0.0, %v696
    %698 = vmatmul.f32.gmra.mxu0 %v631
    %v699 = vpop.f32.mrf.mxu0
    %v700 = vadd.f32 0.0, %v699
    %701 = vmatmul.f32.gmra.mxu0 %v634
    %v702 = vpop.f32.mrf.mxu0
    %v703 = vadd.f32 0.0, %v702
    %704 = vmatmul.f32.gmra.mxu0 %v637
    %v705 = vpop.f32.mrf.mxu0
    %v706 = vadd.f32 0.0, %v705
    %707 = vmatmul.f32.gmra.mxu0 %v640
    %v708 = vpop.f32.mrf.mxu0
    %v709 = vadd.f32 0.0, %v708
    %710 = vmatmul.f32.gmra.mxu0 %v643
    %v711 = vpop.f32.mrf.mxu0
    %v712 = vadd.f32 0.0, %v711
    %713 = vmatmul.f32.gmra.mxu0 %v646
    %v714 = vpop.f32.mrf.mxu0
    %v715 = vadd.f32 0.0, %v714
    %716 = vmatmul.f32.gmra.mxu0 %v649
    %v717 = vpop.f32.mrf.mxu0
    %v718 = vadd.f32 0.0, %v717
    %719 = vmatmul.f32.gmra.mxu0 %v652
    %v720 = vpop.f32.mrf.mxu0
    %v721 = vadd.f32 0.0, %v720
    %722 = vmatmul.f32.gmra.mxu0 %v655
    %v723 = vpop.f32.mrf.mxu0
    %v724 = vadd.f32 0.0, %v723
    %725 = vmatmul.f32.gmra.mxu0 %v658
    %v726 = vpop.f32.mrf.mxu0
    %v727 = vadd.f32 0.0, %v726
    %728 = vdwg.mxu0
    %v729 = vadd.f32 %v563, %v682
    %v730 = vadd.f32 %v566, %v685
    %v731 = vadd.f32 %v569, %v688
    %v732 = vadd.f32 %v572, %v691
    %v733 = vadd.f32 %v575, %v694
    %v734 = vadd.f32 %v578, %v697
    %v735 = vadd.f32 %v581, %v700
    %v736 = vadd.f32 %v584, %v703
    %v737 = vadd.f32 %v587, %v706
    %v738 = vadd.f32 %v590, %v709
    %v739 = vadd.f32 %v593, %v712
    %v740 = vadd.f32 %v596, %v715
    %v741 = vadd.f32 %v599, %v718
    %v742 = vadd.f32 %v602, %v721
    %v743 = vadd.f32 %v605, %v724
    %v744 = vadd.f32 %v608, %v727
    %vm745 = vcmp.gt.f32.partialorder %v729, 0.0
    %vm746 = vcmp.gt.f32.partialorder %v730, 0.0
    %vm747 = vcmp.gt.f32.partialorder %v731, 0.0
    %vm748 = vcmp.gt.f32.partialorder %v732, 0.0
    %vm749 = vcmp.gt.f32.partialorder %v733, 0.0
    %vm750 = vcmp.gt.f32.partialorder %v734, 0.0
    %vm751 = vcmp.gt.f32.partialorder %v735, 0.0
    %vm752 = vcmp.gt.f32.partialorder %v736, 0.0
    %vm753 = vcmp.gt.f32.partialorder %v737, 0.0
    %vm754 = vcmp.gt.f32.partialorder %v738, 0.0
    %vm755 = vcmp.gt.f32.partialorder %v739, 0.0
    %vm756 = vcmp.gt.f32.partialorder %v740, 0.0
    %vm757 = vcmp.gt.f32.partialorder %v741, 0.0
    %vm758 = vcmp.gt.f32.partialorder %v742, 0.0
    %vm759 = vcmp.gt.f32.partialorder %v743, 0.0
    %vm760 = vcmp.gt.f32.partialorder %v744, 0.0
    %v761 = vmul.f32 %v729, 0.2
    %v762 = vmul.f32 %v730, 0.2
    %v763 = vmul.f32 %v731, 0.2
    %v764 = vmul.f32 %v732, 0.2
    %v765 = vmul.f32 %v733, 0.2
    %v766 = vmul.f32 %v734, 0.2
    %v767 = vmul.f32 %v735, 0.2
    %v768 = vmul.f32 %v736, 0.2
    %v769 = vmul.f32 %v737, 0.2
    %v770 = vmul.f32 %v738, 0.2
    %v771 = vmul.f32 %v739, 0.2
    %v772 = vmul.f32 %v740, 0.2
    %v773 = vmul.f32 %v741, 0.2
    %v774 = vmul.f32 %v742, 0.2
    %v775 = vmul.f32 %v743, 0.2
    %v776 = vmul.f32 %v744, 0.2
    %v777 = vsel %vm745, %v729, %v761
    %v778 = vsel %vm746, %v730, %v762
    %v779 = vsel %vm747, %v731, %v763
    %v780 = vsel %vm748, %v732, %v764
    %v781 = vsel %vm749, %v733, %v765
    %v782 = vsel %vm750, %v734, %v766
    %v783 = vsel %vm751, %v735, %v767
    %v784 = vsel %vm752, %v736, %v768
    %v785 = vsel %vm753, %v737, %v769
    %v786 = vsel %vm754, %v738, %v770
    %v787 = vsel %vm755, %v739, %v771
    %v788 = vsel %vm756, %v740, %v772
    %v789 = vsel %vm757, %v741, %v773
    %v790 = vsel %vm758, %v742, %v774
    %v791 = vsel %vm759, %v743, %v775
    %v792 = vsel %vm760, %v744, %v776
    %v793 = vld [vmem:[%s19] sm:$0x1]
    %v795 = vperm.slane %v793, 0
    %v797 = vmul.f32 %v777, %v795
    %v798 = vmul.f32 %v778, %v795
    %v799 = vmul.f32 %v779, %v795
    %v800 = vmul.f32 %v780, %v795
    %v801 = vmul.f32 %v781, %v795
    %v802 = vmul.f32 %v782, %v795
    %v803 = vmul.f32 %v783, %v795
    %v804 = vmul.f32 %v784, %v795
    %v805 = vmul.f32 %v785, %v795
    %v806 = vmul.f32 %v786, %v795
    %v807 = vmul.f32 %v787, %v795
    %v808 = vmul.f32 %v788, %v795
    %v809 = vmul.f32 %v789, %v795
    %v810 = vmul.f32 %v790, %v795
    %v811 = vmul.f32 %v791, %v795
    %v812 = vmul.f32 %v792, %v795
    %v813 = vsel %vm399, %v797, 0.0
    %814 = vadd.xlane.f32.xlu0 %v813
    %v815 = vpop.xlane.xlu0 %814
    %v816 = vsel %vm399, %v798, 0.0
    %817 = vadd.xlane.f32.xlu0 %v816
    %v818 = vpop.xlane.xlu0 %817
    %v819 = vsel %vm399, %v799, 0.0
    %820 = vadd.xlane.f32.xlu0 %v819
    %v821 = vpop.xlane.xlu0 %820
    %v822 = vsel %vm399, %v800, 0.0
    %823 = vadd.xlane.f32.xlu0 %v822
    %v824 = vpop.xlane.xlu0 %823
    %v825 = vsel %vm399, %v801, 0.0
    %826 = vadd.xlane.f32.xlu0 %v825
    %v827 = vpop.xlane.xlu0 %826
    %v828 = vsel %vm399, %v802, 0.0
    %829 = vadd.xlane.f32.xlu0 %v828
    %v830 = vpop.xlane.xlu0 %829
    %v831 = vsel %vm399, %v803, 0.0
    %832 = vadd.xlane.f32.xlu0 %v831
    %v833 = vpop.xlane.xlu0 %832
    %v834 = vsel %vm399, %v804, 0.0
    %835 = vadd.xlane.f32.xlu0 %v834
    %v836 = vpop.xlane.xlu0 %835
    %v837 = vsel %vm399, %v805, 0.0
    %838 = vadd.xlane.f32.xlu0 %v837
    %v839 = vpop.xlane.xlu0 %838
    %v840 = vsel %vm399, %v806, 0.0
    %841 = vadd.xlane.f32.xlu0 %v840
    %v842 = vpop.xlane.xlu0 %841
    %v843 = vsel %vm399, %v807, 0.0
    %844 = vadd.xlane.f32.xlu0 %v843
    %v845 = vpop.xlane.xlu0 %844
    %v846 = vsel %vm399, %v808, 0.0
    %847 = vadd.xlane.f32.xlu0 %v846
    %v848 = vpop.xlane.xlu0 %847
    %v849 = vsel %vm399, %v809, 0.0
    %850 = vadd.xlane.f32.xlu0 %v849
    %v851 = vpop.xlane.xlu0 %850
    %v852 = vsel %vm399, %v810, 0.0
    %853 = vadd.xlane.f32.xlu0 %v852
    %v854 = vpop.xlane.xlu0 %853
    %v855 = vsel %vm399, %v811, 0.0
    %856 = vadd.xlane.f32.xlu0 %v855
    %v857 = vpop.xlane.xlu0 %856
    %v858 = vsel %vm399, %v812, 0.0
    %859 = vadd.xlane.f32.xlu0 %v858
    %v860 = vpop.xlane.xlu0 %859
    %vm861 = vcmp.gt.f32.partialorder %v132, 0.0
    %vm862 = vcmp.gt.f32.partialorder %v134, 0.0
    %vm863 = vcmp.gt.f32.partialorder %v136, 0.0
    %vm864 = vcmp.gt.f32.partialorder %v138, 0.0
    %vm865 = vcmp.gt.f32.partialorder %v140, 0.0
    %vm866 = vcmp.gt.f32.partialorder %v142, 0.0
    %vm867 = vcmp.gt.f32.partialorder %v144, 0.0
    %vm868 = vcmp.gt.f32.partialorder %v146, 0.0
    %vm869 = vcmp.gt.f32.partialorder %v148, 0.0
    %vm870 = vcmp.gt.f32.partialorder %v150, 0.0
    %vm871 = vcmp.gt.f32.partialorder %v152, 0.0
    %vm872 = vcmp.gt.f32.partialorder %v154, 0.0
    %vm873 = vcmp.gt.f32.partialorder %v156, 0.0
    %vm874 = vcmp.gt.f32.partialorder %v158, 0.0
    %vm875 = vcmp.gt.f32.partialorder %v160, 0.0
    %vm876 = vcmp.gt.f32.partialorder %v162, 0.0
    %v877 = vsel %vm861, %v815, -1e+30
    %v878 = vsel %vm862, %v818, -1e+30
    %v879 = vsel %vm863, %v821, -1e+30
    %v880 = vsel %vm864, %v824, -1e+30
    %v881 = vsel %vm865, %v827, -1e+30
    %v882 = vsel %vm866, %v830, -1e+30
    %v883 = vsel %vm867, %v833, -1e+30
    %v884 = vsel %vm868, %v836, -1e+30
    %v885 = vsel %vm869, %v839, -1e+30
    %v886 = vsel %vm870, %v842, -1e+30
    %v887 = vsel %vm871, %v845, -1e+30
    %v888 = vsel %vm872, %v848, -1e+30
    %v889 = vsel %vm873, %v851, -1e+30
    %v890 = vsel %vm874, %v854, -1e+30
    %v891 = vsel %vm875, %v857, -1e+30
    %v892 = vsel %vm876, %v860, -1e+30
    %v893 = vmax.f32 %v877, %v881
    %v894 = vmax.f32 %v878, %v882
    %v895 = vmax.f32 %v879, %v883
    %v896 = vmax.f32 %v880, %v884
    %v897 = vmax.f32 %v893, %v885
    %v898 = vmax.f32 %v894, %v886
    %v899 = vmax.f32 %v895, %v887
    %v900 = vmax.f32 %v896, %v888
    %v901 = vmax.f32 %v897, %v889
    %v902 = vmax.f32 %v898, %v890
    %v903 = vmax.f32 %v899, %v891
    %v904 = vmax.f32 %v900, %v892
    %v905 = vmax.f32 %v901, %v902
    %v906 = vmax.f32 %v903, %v904
    %v907 = vmax.f32 %v905, %v906
    %v908 = vrot.slane %v907, 4
    %v909 = vmax.f32 %v907, %v908
    %v910 = vrot.slane %v909, 2
    %v911 = vmax.f32 %v909, %v910
    %v912 = vrot.slane %v911, 1
    %v913 = vmax.f32 %v911, %v912
    %v914 = vmul.f32 %v132, %v913
    %v915 = vmul.f32 %v134, %v913
    %v916 = vmul.f32 %v136, %v913
    %v917 = vmul.f32 %v138, %v913
    %v918 = vmul.f32 %v140, %v913
    %v919 = vmul.f32 %v142, %v913
    %v920 = vmul.f32 %v144, %v913
    %v921 = vmul.f32 %v146, %v913
    %v922 = vmul.f32 %v148, %v913
    %v923 = vmul.f32 %v150, %v913
    %v924 = vmul.f32 %v152, %v913
    %v925 = vmul.f32 %v154, %v913
    %v926 = vmul.f32 %v156, %v913
    %v927 = vmul.f32 %v158, %v913
    %v928 = vmul.f32 %v160, %v913
    %v929 = vmul.f32 %v162, %v913
    %930 = vadd.xlane.f32.xlu0 %v914
    %v931 = vpop.xlane.xlu0 %930
    %932 = vadd.xlane.f32.xlu0 %v915
    %v933 = vpop.xlane.xlu0 %932
    %934 = vadd.xlane.f32.xlu0 %v916
    %v935 = vpop.xlane.xlu0 %934
    %936 = vadd.xlane.f32.xlu0 %v917
    %v937 = vpop.xlane.xlu0 %936
    %938 = vadd.xlane.f32.xlu0 %v918
    %v939 = vpop.xlane.xlu0 %938
    %940 = vadd.xlane.f32.xlu0 %v919
    %v941 = vpop.xlane.xlu0 %940
    %942 = vadd.xlane.f32.xlu0 %v920
    %v943 = vpop.xlane.xlu0 %942
    %944 = vadd.xlane.f32.xlu0 %v921
    %v945 = vpop.xlane.xlu0 %944
    %946 = vadd.xlane.f32.xlu0 %v922
    %v947 = vpop.xlane.xlu0 %946
    %948 = vadd.xlane.f32.xlu0 %v923
    %v949 = vpop.xlane.xlu0 %948
    %950 = vadd.xlane.f32.xlu0 %v924
    %v951 = vpop.xlane.xlu0 %950
    %952 = vadd.xlane.f32.xlu0 %v925
    %v953 = vpop.xlane.xlu0 %952
    %954 = vadd.xlane.f32.xlu0 %v926
    %v955 = vpop.xlane.xlu0 %954
    %956 = vadd.xlane.f32.xlu0 %v927
    %v957 = vpop.xlane.xlu0 %956
    %958 = vadd.xlane.f32.xlu0 %v928
    %v959 = vpop.xlane.xlu0 %958
    %960 = vadd.xlane.f32.xlu0 %v929
    %v961 = vpop.xlane.xlu0 %960
    %v962 = vsub.f32 %v815, %v931
    %v963 = vsub.f32 %v818, %v933
    %v964 = vsub.f32 %v821, %v935
    %v965 = vsub.f32 %v824, %v937
    %v966 = vsub.f32 %v827, %v939
    %v967 = vsub.f32 %v830, %v941
    %v968 = vsub.f32 %v833, %v943
    %v969 = vsub.f32 %v836, %v945
    %v970 = vsub.f32 %v839, %v947
    %v971 = vsub.f32 %v842, %v949
    %v972 = vsub.f32 %v845, %v951
    %v973 = vsub.f32 %v848, %v953
    %v974 = vsub.f32 %v851, %v955
    %v975 = vsub.f32 %v854, %v957
    %v976 = vsub.f32 %v857, %v959
    %v977 = vsub.f32 %v860, %v961
    %v978 = vmul.f32 %v962, 1.442695
    %v979 = vpow.pop %v978
    %v980 = vmul.f32 %v963, 1.442695
    %v981 = vpow.pop %v980
    %v982 = vmul.f32 %v964, 1.442695
    %v983 = vpow.pop %v982
    %v984 = vmul.f32 %v965, 1.442695
    %v985 = vpow.pop %v984
    %v986 = vmul.f32 %v966, 1.442695
    %v987 = vpow.pop %v986
    %v988 = vmul.f32 %v967, 1.442695
    %v989 = vpow.pop %v988
    %v990 = vmul.f32 %v968, 1.442695
    %v991 = vpow.pop %v990
    %v992 = vmul.f32 %v969, 1.442695
    %v993 = vpow.pop %v992
    %v994 = vmul.f32 %v970, 1.442695
    %v995 = vpow.pop %v994
    %v996 = vmul.f32 %v971, 1.442695
    %v997 = vpow.pop %v996
    %v998 = vmul.f32 %v972, 1.442695
    %v999 = vpow.pop %v998
    %v1000 = vmul.f32 %v973, 1.442695
    %v1001 = vpow.pop %v1000
    %v1002 = vmul.f32 %v974, 1.442695
    %v1003 = vpow.pop %v1002
    %v1004 = vmul.f32 %v975, 1.442695
    %v1005 = vpow.pop %v1004
    %v1006 = vmul.f32 %v976, 1.442695
    %v1007 = vpow.pop %v1006
    %v1008 = vmul.f32 %v977, 1.442695
    %v1009 = vpow.pop %v1008
    %v1010 = vmul.f32 %v979, %v563
    %v1011 = vmul.f32 %v981, %v566
    %v1012 = vmul.f32 %v983, %v569
    %v1013 = vmul.f32 %v985, %v572
    %v1014 = vmul.f32 %v987, %v575
    %v1015 = vmul.f32 %v989, %v578
    %v1016 = vmul.f32 %v991, %v581
    %v1017 = vmul.f32 %v993, %v584
    %v1018 = vmul.f32 %v995, %v587
    %v1019 = vmul.f32 %v997, %v590
    %v1020 = vmul.f32 %v999, %v593
    %v1021 = vmul.f32 %v1001, %v596
    %v1022 = vmul.f32 %v1003, %v599
    %v1023 = vmul.f32 %v1005, %v602
    %v1024 = vmul.f32 %v1007, %v605
    %v1025 = vmul.f32 %v1009, %v608
    %1042 = vrot.lane.b32.xlu0 %v1010, 96
    %v1043 = vpop.permute.xlu0 %1042
    %1044 = vrot.lane.b32.xlu0 %v1011, 96
    %v1045 = vpop.permute.xlu0 %1044
    %1046 = vrot.lane.b32.xlu0 %v1012, 96
    %v1047 = vpop.permute.xlu0 %1046
    %1048 = vrot.lane.b32.xlu0 %v1013, 96
    %v1049 = vpop.permute.xlu0 %1048
    %1050 = vrot.lane.b32.xlu0 %v1014, 96
    %v1051 = vpop.permute.xlu0 %1050
    %1052 = vrot.lane.b32.xlu0 %v1015, 96
    %v1053 = vpop.permute.xlu0 %1052
    %1054 = vrot.lane.b32.xlu0 %v1016, 96
    %v1055 = vpop.permute.xlu0 %1054
    %1056 = vrot.lane.b32.xlu0 %v1017, 96
    %v1057 = vpop.permute.xlu0 %1056
    %1058 = vrot.lane.b32.xlu0 %v1018, 96
    %v1059 = vpop.permute.xlu0 %1058
    %1060 = vrot.lane.b32.xlu0 %v1019, 96
    %v1061 = vpop.permute.xlu0 %1060
    %1062 = vrot.lane.b32.xlu0 %v1020, 96
    %v1063 = vpop.permute.xlu0 %1062
    %1064 = vrot.lane.b32.xlu0 %v1021, 96
    %v1065 = vpop.permute.xlu0 %1064
    %1066 = vrot.lane.b32.xlu0 %v1022, 96
    %v1067 = vpop.permute.xlu0 %1066
    %1068 = vrot.lane.b32.xlu0 %v1023, 96
    %v1069 = vpop.permute.xlu0 %1068
    %1070 = vrot.lane.b32.xlu0 %v1024, 96
    %v1071 = vpop.permute.xlu0 %1070
    %1072 = vrot.lane.b32.xlu0 %v1025, 96
    %v1073 = vpop.permute.xlu0 %1072
    %v1090 = vsel %vm399, %v1043, %v979
    %v1091 = vsel %vm399, %v1045, %v981
    %v1092 = vsel %vm399, %v1047, %v983
    %v1093 = vsel %vm399, %v1049, %v985
    %v1094 = vsel %vm399, %v1051, %v987
    %v1095 = vsel %vm399, %v1053, %v989
    %v1096 = vsel %vm399, %v1055, %v991
    %v1097 = vsel %vm399, %v1057, %v993
    %v1098 = vsel %vm399, %v1059, %v995
    %v1099 = vsel %vm399, %v1061, %v997
    %v1100 = vsel %vm399, %v1063, %v999
    %v1101 = vsel %vm399, %v1065, %v1001
    %v1102 = vsel %vm399, %v1067, %v1003
    %v1103 = vsel %vm399, %v1069, %v1005
    %v1104 = vsel %vm399, %v1071, %v1007
    %v1105 = vsel %vm399, %v1073, %v1009
    %1106 = vmatpush.msra.mxu0 %v1105
    %1107 = vmatpush.msra.mxu0 %v1104
    %1108 = vmatpush.msra.mxu0 %v1103
    %1109 = vmatpush.msra.mxu0 %v1102
    %1110 = vmatpush.msra.mxu0 %v1101
    %1111 = vmatpush.msra.mxu0 %v1100
    %1112 = vmatpush.msra.mxu0 %v1099
    %1113 = vmatpush.msra.mxu0 %v1098
    %1114 = vmatpush.msra.mxu0 %v1097
    %1115 = vmatpush.msra.mxu0 %v1096
    %1116 = vmatpush.msra.mxu0 %v1095
    %1117 = vmatpush.msra.mxu0 %v1094
    %1118 = vmatpush.msra.mxu0 %v1093
    %1119 = vmatpush.msra.mxu0 %v1092
    %1120 = vmatpush.msra.mxu0 %v1091
    %1121 = vmatpush.msra.mxu0 %v1090
    %1122 = vmatmul.f32.gmra.mxu0 %v163
    %v1123 = vpop.f32.mrf.mxu0
    %v1124 = vadd.f32 0.0, %v1123
    %1125 = vmatmul.f32.gmra.mxu0 %v164
    %v1126 = vpop.f32.mrf.mxu0
    %v1127 = vadd.f32 0.0, %v1126
    %1128 = vmatmul.f32.gmra.mxu0 %v165
    %v1129 = vpop.f32.mrf.mxu0
    %v1130 = vadd.f32 0.0, %v1129
    %1131 = vmatmul.f32.gmra.mxu0 %v166
    %v1132 = vpop.f32.mrf.mxu0
    %v1133 = vadd.f32 0.0, %v1132
    %1134 = vmatmul.f32.gmra.mxu0 %v167
    %v1135 = vpop.f32.mrf.mxu0
    %v1136 = vadd.f32 0.0, %v1135
    %1137 = vmatmul.f32.gmra.mxu0 %v168
    %v1138 = vpop.f32.mrf.mxu0
    %v1139 = vadd.f32 0.0, %v1138
    %1140 = vmatmul.f32.gmra.mxu0 %v169
    %v1141 = vpop.f32.mrf.mxu0
    %v1142 = vadd.f32 0.0, %v1141
    %1143 = vmatmul.f32.gmra.mxu0 %v170
    %v1144 = vpop.f32.mrf.mxu0
    %v1145 = vadd.f32 0.0, %v1144
    %1146 = vmatmul.f32.gmra.mxu0 %v171
    %v1147 = vpop.f32.mrf.mxu0
    %v1148 = vadd.f32 0.0, %v1147
    %1149 = vmatmul.f32.gmra.mxu0 %v172
    %v1150 = vpop.f32.mrf.mxu0
    %v1151 = vadd.f32 0.0, %v1150
    %1152 = vmatmul.f32.gmra.mxu0 %v173
    %v1153 = vpop.f32.mrf.mxu0
    %v1154 = vadd.f32 0.0, %v1153
    %1155 = vmatmul.f32.gmra.mxu0 %v174
    %v1156 = vpop.f32.mrf.mxu0
    %v1157 = vadd.f32 0.0, %v1156
    %1158 = vmatmul.f32.gmra.mxu0 %v175
    %v1159 = vpop.f32.mrf.mxu0
    %v1160 = vadd.f32 0.0, %v1159
    %1161 = vmatmul.f32.gmra.mxu0 %v176
    %v1162 = vpop.f32.mrf.mxu0
    %v1163 = vadd.f32 0.0, %v1162
    %1164 = vmatmul.f32.gmra.mxu0 %v177
    %v1165 = vpop.f32.mrf.mxu0
    %v1166 = vadd.f32 0.0, %v1165
    %1167 = vmatmul.f32.gmra.mxu0 %v178
    %v1168 = vpop.f32.mrf.mxu0
    %v1169 = vadd.f32 0.0, %v1168
    %1170 = vdwg.mxu0
    %v1171 = vadd.f32 %v1124, 1e-16
    %v1172 = vadd.f32 %v1127, 1e-16
    %v1173 = vadd.f32 %v1130, 1e-16
    %v1174 = vadd.f32 %v1133, 1e-16
    %v1175 = vadd.f32 %v1136, 1e-16
    %v1176 = vadd.f32 %v1139, 1e-16
    %v1177 = vadd.f32 %v1142, 1e-16
    %v1178 = vadd.f32 %v1145, 1e-16
    %v1179 = vadd.f32 %v1148, 1e-16
    %v1180 = vadd.f32 %v1151, 1e-16
    %v1181 = vadd.f32 %v1154, 1e-16
    %v1182 = vadd.f32 %v1157, 1e-16
    %v1183 = vadd.f32 %v1160, 1e-16
    %v1184 = vadd.f32 %v1163, 1e-16
    %v1185 = vadd.f32 %v1166, 1e-16
    %v1186 = vadd.f32 %v1169, 1e-16
    %1188 = vset.pattern.permute.xlu0 32
    %1189 = vperm.xlu0 %1188, %v1171
    %v1190 = vpop.permute.xlu0 %1189
    %1193 = vset.pattern.permute.xlu0 32
    %1194 = vperm.xlu0 %1193, %v1172
    %v1195 = vpop.permute.xlu0 %1194
    %1198 = vset.pattern.permute.xlu0 32
    %1199 = vperm.xlu0 %1198, %v1173
    %v1200 = vpop.permute.xlu0 %1199
    %1203 = vset.pattern.permute.xlu0 32
    %1204 = vperm.xlu0 %1203, %v1174
    %v1205 = vpop.permute.xlu0 %1204
    %1208 = vset.pattern.permute.xlu0 32
    %1209 = vperm.xlu0 %1208, %v1175
    %v1210 = vpop.permute.xlu0 %1209
    %1213 = vset.pattern.permute.xlu0 32
    %1214 = vperm.xlu0 %1213, %v1176
    %v1215 = vpop.permute.xlu0 %1214
    %1218 = vset.pattern.permute.xlu0 32
    %1219 = vperm.xlu0 %1218, %v1177
    %v1220 = vpop.permute.xlu0 %1219
    %1223 = vset.pattern.permute.xlu0 32
    %1224 = vperm.xlu0 %1223, %v1178
    %v1225 = vpop.permute.xlu0 %1224
    %1228 = vset.pattern.permute.xlu0 32
    %1229 = vperm.xlu0 %1228, %v1179
    %v1230 = vpop.permute.xlu0 %1229
    %1233 = vset.pattern.permute.xlu0 32
    %1234 = vperm.xlu0 %1233, %v1180
    %v1235 = vpop.permute.xlu0 %1234
    %1238 = vset.pattern.permute.xlu0 32
    %1239 = vperm.xlu0 %1238, %v1181
    %v1240 = vpop.permute.xlu0 %1239
    %1243 = vset.pattern.permute.xlu0 32
    %1244 = vperm.xlu0 %1243, %v1182
    %v1245 = vpop.permute.xlu0 %1244
    %1248 = vset.pattern.permute.xlu0 32
    %1249 = vperm.xlu0 %1248, %v1183
    %v1250 = vpop.permute.xlu0 %1249
    %1253 = vset.pattern.permute.xlu0 32
    %1254 = vperm.xlu0 %1253, %v1184
    %v1255 = vpop.permute.xlu0 %1254
    %1258 = vset.pattern.permute.xlu0 32
    %1259 = vperm.xlu0 %1258, %v1185
    %v1260 = vpop.permute.xlu0 %1259
    %1263 = vset.pattern.permute.xlu0 32
    %1264 = vperm.xlu0 %1263, %v1186
    %v1265 = vpop.permute.xlu0 %1264
    %v1267 = vrcp.pop %v1190
    %v1268 = vmul.f32 %v1190, %v1267
    %v1269 = vsub.f32 1.0, %v1268
    %v1270 = vmul.f32 %v1267, %v1269
    %v1271 = vadd.f32 %v1267, %v1270
    %vm1272 = vweird.f32 %v1190
    %vm1273 = vweird.f32 %v1267
    %vm1274 = vmor %vm1272, %vm1273
    %v1275 = vsel %vm1274, %v1267, %v1271
    %v1276 = vand.u32 2147483647, %v1190
    %vm1277 = vcmp.eq.f32.partialorder %v1276, 8.507059e+37
    %v1278 = vand.u32 %v1190, 2147483648
    %v1279 = vor.u32 1.1754944e-38, %v1278
    %v1280 = vsel %vm1277, %v1279, %v1275
    %v1281 = vmul.f32 %v1124, %v1280
    %v1282 = vrcp.pop %v1195
    %v1283 = vmul.f32 %v1195, %v1282
    %v1284 = vsub.f32 1.0, %v1283
    %v1285 = vmul.f32 %v1282, %v1284
    %v1286 = vadd.f32 %v1282, %v1285
    %vm1287 = vweird.f32 %v1195
    %vm1288 = vweird.f32 %v1282
    %vm1289 = vmor %vm1287, %vm1288
    %v1290 = vsel %vm1289, %v1282, %v1286
    %v1291 = vand.u32 2147483647, %v1195
    %vm1292 = vcmp.eq.f32.partialorder %v1291, 8.507059e+37
    %v1293 = vand.u32 %v1195, 2147483648
    %v1294 = vor.u32 1.1754944e-38, %v1293
    %v1295 = vsel %vm1292, %v1294, %v1290
    %v1296 = vmul.f32 %v1127, %v1295
    %v1297 = vrcp.pop %v1200
    %v1298 = vmul.f32 %v1200, %v1297
    %v1299 = vsub.f32 1.0, %v1298
    %v1300 = vmul.f32 %v1297, %v1299
    %v1301 = vadd.f32 %v1297, %v1300
    %vm1302 = vweird.f32 %v1200
    %vm1303 = vweird.f32 %v1297
    %vm1304 = vmor %vm1302, %vm1303
    %v1305 = vsel %vm1304, %v1297, %v1301
    %v1306 = vand.u32 2147483647, %v1200
    %vm1307 = vcmp.eq.f32.partialorder %v1306, 8.507059e+37
    %v1308 = vand.u32 %v1200, 2147483648
    %v1309 = vor.u32 1.1754944e-38, %v1308
    %v1310 = vsel %vm1307, %v1309, %v1305
    %v1311 = vmul.f32 %v1130, %v1310
    %v1312 = vrcp.pop %v1205
    %v1313 = vmul.f32 %v1205, %v1312
    %v1314 = vsub.f32 1.0, %v1313
    %v1315 = vmul.f32 %v1312, %v1314
    %v1316 = vadd.f32 %v1312, %v1315
    %vm1317 = vweird.f32 %v1205
    %vm1318 = vweird.f32 %v1312
    %vm1319 = vmor %vm1317, %vm1318
    %v1320 = vsel %vm1319, %v1312, %v1316
    %v1321 = vand.u32 2147483647, %v1205
    %vm1322 = vcmp.eq.f32.partialorder %v1321, 8.507059e+37
    %v1323 = vand.u32 %v1205, 2147483648
    %v1324 = vor.u32 1.1754944e-38, %v1323
    %v1325 = vsel %vm1322, %v1324, %v1320
    %v1326 = vmul.f32 %v1133, %v1325
    %v1327 = vrcp.pop %v1210
    %v1328 = vmul.f32 %v1210, %v1327
    %v1329 = vsub.f32 1.0, %v1328
    %v1330 = vmul.f32 %v1327, %v1329
    %v1331 = vadd.f32 %v1327, %v1330
    %vm1332 = vweird.f32 %v1210
    %vm1333 = vweird.f32 %v1327
    %vm1334 = vmor %vm1332, %vm1333
    %v1335 = vsel %vm1334, %v1327, %v1331
    %v1336 = vand.u32 2147483647, %v1210
    %vm1337 = vcmp.eq.f32.partialorder %v1336, 8.507059e+37
    %v1338 = vand.u32 %v1210, 2147483648
    %v1339 = vor.u32 1.1754944e-38, %v1338
    %v1340 = vsel %vm1337, %v1339, %v1335
    %v1341 = vmul.f32 %v1136, %v1340
    %v1342 = vrcp.pop %v1215
    %v1343 = vmul.f32 %v1215, %v1342
    %v1344 = vsub.f32 1.0, %v1343
    %v1345 = vmul.f32 %v1342, %v1344
    %v1346 = vadd.f32 %v1342, %v1345
    %vm1347 = vweird.f32 %v1215
    %vm1348 = vweird.f32 %v1342
    %vm1349 = vmor %vm1347, %vm1348
    %v1350 = vsel %vm1349, %v1342, %v1346
    %v1351 = vand.u32 2147483647, %v1215
    %vm1352 = vcmp.eq.f32.partialorder %v1351, 8.507059e+37
    %v1353 = vand.u32 %v1215, 2147483648
    %v1354 = vor.u32 1.1754944e-38, %v1353
    %v1355 = vsel %vm1352, %v1354, %v1350
    %v1356 = vmul.f32 %v1139, %v1355
    %v1357 = vrcp.pop %v1220
    %v1358 = vmul.f32 %v1220, %v1357
    %v1359 = vsub.f32 1.0, %v1358
    %v1360 = vmul.f32 %v1357, %v1359
    %v1361 = vadd.f32 %v1357, %v1360
    %vm1362 = vweird.f32 %v1220
    %vm1363 = vweird.f32 %v1357
    %vm1364 = vmor %vm1362, %vm1363
    %v1365 = vsel %vm1364, %v1357, %v1361
    %v1366 = vand.u32 2147483647, %v1220
    %vm1367 = vcmp.eq.f32.partialorder %v1366, 8.507059e+37
    %v1368 = vand.u32 %v1220, 2147483648
    %v1369 = vor.u32 1.1754944e-38, %v1368
    %v1370 = vsel %vm1367, %v1369, %v1365
    %v1371 = vmul.f32 %v1142, %v1370
    %v1372 = vrcp.pop %v1225
    %v1373 = vmul.f32 %v1225, %v1372
    %v1374 = vsub.f32 1.0, %v1373
    %v1375 = vmul.f32 %v1372, %v1374
    %v1376 = vadd.f32 %v1372, %v1375
    %vm1377 = vweird.f32 %v1225
    %vm1378 = vweird.f32 %v1372
    %vm1379 = vmor %vm1377, %vm1378
    %v1380 = vsel %vm1379, %v1372, %v1376
    %v1381 = vand.u32 2147483647, %v1225
    %vm1382 = vcmp.eq.f32.partialorder %v1381, 8.507059e+37
    %v1383 = vand.u32 %v1225, 2147483648
    %v1384 = vor.u32 1.1754944e-38, %v1383
    %v1385 = vsel %vm1382, %v1384, %v1380
    %v1386 = vmul.f32 %v1145, %v1385
    %v1387 = vrcp.pop %v1230
    %v1388 = vmul.f32 %v1230, %v1387
    %v1389 = vsub.f32 1.0, %v1388
    %v1390 = vmul.f32 %v1387, %v1389
    %v1391 = vadd.f32 %v1387, %v1390
    %vm1392 = vweird.f32 %v1230
    %vm1393 = vweird.f32 %v1387
    %vm1394 = vmor %vm1392, %vm1393
    %v1395 = vsel %vm1394, %v1387, %v1391
    %v1396 = vand.u32 2147483647, %v1230
    %vm1397 = vcmp.eq.f32.partialorder %v1396, 8.507059e+37
    %v1398 = vand.u32 %v1230, 2147483648
    %v1399 = vor.u32 1.1754944e-38, %v1398
    %v1400 = vsel %vm1397, %v1399, %v1395
    %v1401 = vmul.f32 %v1148, %v1400
    %v1402 = vrcp.pop %v1235
    %v1403 = vmul.f32 %v1235, %v1402
    %v1404 = vsub.f32 1.0, %v1403
    %v1405 = vmul.f32 %v1402, %v1404
    %v1406 = vadd.f32 %v1402, %v1405
    %vm1407 = vweird.f32 %v1235
    %vm1408 = vweird.f32 %v1402
    %vm1409 = vmor %vm1407, %vm1408
    %v1410 = vsel %vm1409, %v1402, %v1406
    %v1411 = vand.u32 2147483647, %v1235
    %vm1412 = vcmp.eq.f32.partialorder %v1411, 8.507059e+37
    %v1413 = vand.u32 %v1235, 2147483648
    %v1414 = vor.u32 1.1754944e-38, %v1413
    %v1415 = vsel %vm1412, %v1414, %v1410
    %v1416 = vmul.f32 %v1151, %v1415
    %v1417 = vrcp.pop %v1240
    %v1418 = vmul.f32 %v1240, %v1417
    %v1419 = vsub.f32 1.0, %v1418
    %v1420 = vmul.f32 %v1417, %v1419
    %v1421 = vadd.f32 %v1417, %v1420
    %vm1422 = vweird.f32 %v1240
    %vm1423 = vweird.f32 %v1417
    %vm1424 = vmor %vm1422, %vm1423
    %v1425 = vsel %vm1424, %v1417, %v1421
    %v1426 = vand.u32 2147483647, %v1240
    %vm1427 = vcmp.eq.f32.partialorder %v1426, 8.507059e+37
    %v1428 = vand.u32 %v1240, 2147483648
    %v1429 = vor.u32 1.1754944e-38, %v1428
    %v1430 = vsel %vm1427, %v1429, %v1425
    %v1431 = vmul.f32 %v1154, %v1430
    %v1432 = vrcp.pop %v1245
    %v1433 = vmul.f32 %v1245, %v1432
    %v1434 = vsub.f32 1.0, %v1433
    %v1435 = vmul.f32 %v1432, %v1434
    %v1436 = vadd.f32 %v1432, %v1435
    %vm1437 = vweird.f32 %v1245
    %vm1438 = vweird.f32 %v1432
    %vm1439 = vmor %vm1437, %vm1438
    %v1440 = vsel %vm1439, %v1432, %v1436
    %v1441 = vand.u32 2147483647, %v1245
    %vm1442 = vcmp.eq.f32.partialorder %v1441, 8.507059e+37
    %v1443 = vand.u32 %v1245, 2147483648
    %v1444 = vor.u32 1.1754944e-38, %v1443
    %v1445 = vsel %vm1442, %v1444, %v1440
    %v1446 = vmul.f32 %v1157, %v1445
    %v1447 = vrcp.pop %v1250
    %v1448 = vmul.f32 %v1250, %v1447
    %v1449 = vsub.f32 1.0, %v1448
    %v1450 = vmul.f32 %v1447, %v1449
    %v1451 = vadd.f32 %v1447, %v1450
    %vm1452 = vweird.f32 %v1250
    %vm1453 = vweird.f32 %v1447
    %vm1454 = vmor %vm1452, %vm1453
    %v1455 = vsel %vm1454, %v1447, %v1451
    %v1456 = vand.u32 2147483647, %v1250
    %vm1457 = vcmp.eq.f32.partialorder %v1456, 8.507059e+37
    %v1458 = vand.u32 %v1250, 2147483648
    %v1459 = vor.u32 1.1754944e-38, %v1458
    %v1460 = vsel %vm1457, %v1459, %v1455
    %v1461 = vmul.f32 %v1160, %v1460
    %v1462 = vrcp.pop %v1255
    %v1463 = vmul.f32 %v1255, %v1462
    %v1464 = vsub.f32 1.0, %v1463
    %v1465 = vmul.f32 %v1462, %v1464
    %v1466 = vadd.f32 %v1462, %v1465
    %vm1467 = vweird.f32 %v1255
    %vm1468 = vweird.f32 %v1462
    %vm1469 = vmor %vm1467, %vm1468
    %v1470 = vsel %vm1469, %v1462, %v1466
    %v1471 = vand.u32 2147483647, %v1255
    %vm1472 = vcmp.eq.f32.partialorder %v1471, 8.507059e+37
    %v1473 = vand.u32 %v1255, 2147483648
    %v1474 = vor.u32 1.1754944e-38, %v1473
    %v1475 = vsel %vm1472, %v1474, %v1470
    %v1476 = vmul.f32 %v1163, %v1475
    %v1477 = vrcp.pop %v1260
    %v1478 = vmul.f32 %v1260, %v1477
    %v1479 = vsub.f32 1.0, %v1478
    %v1480 = vmul.f32 %v1477, %v1479
    %v1481 = vadd.f32 %v1477, %v1480
    %vm1482 = vweird.f32 %v1260
    %vm1483 = vweird.f32 %v1477
    %vm1484 = vmor %vm1482, %vm1483
    %v1485 = vsel %vm1484, %v1477, %v1481
    %v1486 = vand.u32 2147483647, %v1260
    %vm1487 = vcmp.eq.f32.partialorder %v1486, 8.507059e+37
    %v1488 = vand.u32 %v1260, 2147483648
    %v1489 = vor.u32 1.1754944e-38, %v1488
    %v1490 = vsel %vm1487, %v1489, %v1485
    %v1491 = vmul.f32 %v1166, %v1490
    %v1492 = vrcp.pop %v1265
    %v1493 = vmul.f32 %v1265, %v1492
    %v1494 = vsub.f32 1.0, %v1493
    %v1495 = vmul.f32 %v1492, %v1494
    %v1496 = vadd.f32 %v1492, %v1495
    %vm1497 = vweird.f32 %v1265
    %vm1498 = vweird.f32 %v1492
    %vm1499 = vmor %vm1497, %vm1498
    %v1500 = vsel %vm1499, %v1492, %v1496
    %v1501 = vand.u32 2147483647, %v1265
    %vm1502 = vcmp.eq.f32.partialorder %v1501, 8.507059e+37
    %v1503 = vand.u32 %v1265, 2147483648
    %v1504 = vor.u32 1.1754944e-38, %v1503
    %v1505 = vsel %vm1502, %v1504, %v1500
    %v1506 = vmul.f32 %v1169, %v1505
    %v1507 = vld [vmem:[%s21] sm:$0x1]
    %v1509 = vperm.slane %v1507, 0
    %v1511 = vadd.f32 %v1281, %v1509
    %v1512 = vadd.f32 %v1296, %v1509
    %v1513 = vadd.f32 %v1311, %v1509
    %v1514 = vadd.f32 %v1326, %v1509
    %v1515 = vadd.f32 %v1341, %v1509
    %v1516 = vadd.f32 %v1356, %v1509
    %v1517 = vadd.f32 %v1371, %v1509
    %v1518 = vadd.f32 %v1386, %v1509
    %v1519 = vadd.f32 %v1401, %v1509
    %v1520 = vadd.f32 %v1416, %v1509
    %v1521 = vadd.f32 %v1431, %v1509
    %v1522 = vadd.f32 %v1446, %v1509
    %v1523 = vadd.f32 %v1461, %v1509
    %v1524 = vadd.f32 %v1476, %v1509
    %v1525 = vadd.f32 %v1491, %v1509
    %v1526 = vadd.f32 %v1506, %v1509
    %v1527 = vmax.f32 %v1511, 0.0
    %v1528 = vmax.f32 %v1512, 0.0
    %v1529 = vmax.f32 %v1513, 0.0
    %v1530 = vmax.f32 %v1514, 0.0
    %v1531 = vmax.f32 %v1515, 0.0
    %v1532 = vmax.f32 %v1516, 0.0
    %v1533 = vmax.f32 %v1517, 0.0
    %v1534 = vmax.f32 %v1518, 0.0
    %v1535 = vmax.f32 %v1519, 0.0
    %v1536 = vmax.f32 %v1520, 0.0
    %v1537 = vmax.f32 %v1521, 0.0
    %v1538 = vmax.f32 %v1522, 0.0
    %v1539 = vmax.f32 %v1523, 0.0
    %v1540 = vmax.f32 %v1524, 0.0
    %v1541 = vmax.f32 %v1525, 0.0
    %v1542 = vmax.f32 %v1526, 0.0
    %v1543 = vld [vmem:[%s23] sm:$0x1]
    %v1545 = vperm.slane %v1543, 0
    %v1547 = vmul.f32 %v1527, %v1545
    %v1548 = vmul.f32 %v1528, %v1545
    %v1549 = vmul.f32 %v1529, %v1545
    %v1550 = vmul.f32 %v1530, %v1545
    %v1551 = vmul.f32 %v1531, %v1545
    %v1552 = vmul.f32 %v1532, %v1545
    %v1553 = vmul.f32 %v1533, %v1545
    %v1554 = vmul.f32 %v1534, %v1545
    %v1555 = vmul.f32 %v1535, %v1545
    %v1556 = vmul.f32 %v1536, %v1545
    %v1557 = vmul.f32 %v1537, %v1545
    %v1558 = vmul.f32 %v1538, %v1545
    %v1559 = vmul.f32 %v1539, %v1545
    %v1560 = vmul.f32 %v1540, %v1545
    %v1561 = vmul.f32 %v1541, %v1545
    %v1562 = vmul.f32 %v1542, %v1545
    %v1563 = vld [vmem:[%s25] sm:$0x1]
    %v1565 = vperm.slane %v1563, 0
    %v1567 = vadd.f32 %v1547, %v1565
    %v1568 = vadd.f32 %v1548, %v1565
    %v1569 = vadd.f32 %v1549, %v1565
    %v1570 = vadd.f32 %v1550, %v1565
    %v1571 = vadd.f32 %v1551, %v1565
    %v1572 = vadd.f32 %v1552, %v1565
    %v1573 = vadd.f32 %v1553, %v1565
    %v1574 = vadd.f32 %v1554, %v1565
    %v1575 = vadd.f32 %v1555, %v1565
    %v1576 = vadd.f32 %v1556, %v1565
    %v1577 = vadd.f32 %v1557, %v1565
    %v1578 = vadd.f32 %v1558, %v1565
    %v1579 = vadd.f32 %v1559, %v1565
    %v1580 = vadd.f32 %v1560, %v1565
    %v1581 = vadd.f32 %v1561, %v1565
    %v1582 = vadd.f32 %v1562, %v1565
    %v1583 = vld [vmem:[%s27] sm:$0xff]
    %v1584 = vld [vmem:[%s27 + $0x8] sm:$0xff]
    %v1585 = vld [vmem:[%s27 + $0x10] sm:$0xff]
    %v1586 = vld [vmem:[%s27 + $0x18] sm:$0xff]
    %v1587 = vld [vmem:[%s29] sm:$0x1]
    %v1589 = vperm.slane %v1587, 0
    %v1592 = vsel %vm399, %v1567, 0
    %v1595 = vsel %vm399, %v1568, 0
    %v1598 = vsel %vm399, %v1569, 0
    %v1601 = vsel %vm399, %v1570, 0
    %v1604 = vsel %vm399, %v1571, 0
    %v1607 = vsel %vm399, %v1572, 0
    %v1610 = vsel %vm399, %v1573, 0
    %v1613 = vsel %vm399, %v1574, 0
    %v1616 = vsel %vm399, %v1575, 0
    %v1619 = vsel %vm399, %v1576, 0
    %v1622 = vsel %vm399, %v1577, 0
    %v1625 = vsel %vm399, %v1578, 0
    %v1628 = vsel %vm399, %v1579, 0
    %v1631 = vsel %vm399, %v1580, 0
    %v1634 = vsel %vm399, %v1581, 0
    %v1637 = vsel %vm399, %v1582, 0
    %1639 = vmatpush.msra.mxu0 0.0
    %1640 = vmatpush.msra.mxu0 0.0
    %1641 = vmatpush.msra.mxu0 0.0
    %1642 = vmatpush.msra.mxu0 0.0
    %1643 = vmatpush.msra.mxu0 0.0
    %1644 = vmatpush.msra.mxu0 0.0
    %1645 = vmatpush.msra.mxu0 0.0
    %1646 = vmatpush.msra.mxu0 0.0
    %1647 = vmatpush.msra.mxu0 0.0
    %1648 = vmatpush.msra.mxu0 0.0
    %1649 = vmatpush.msra.mxu0 0.0
    %1650 = vmatpush.msra.mxu0 0.0
    %1651 = vmatpush.msra.mxu0 %v1586
    %1652 = vmatpush.msra.mxu0 %v1585
    %1653 = vmatpush.msra.mxu0 %v1584
    %1654 = vmatpush.msra.mxu0 %v1583
    %1655 = vmatmul.f32.gmra.mxu0 %v1592
    %v1656 = vpop.f32.mrf.mxu0
    %v1657 = vadd.f32 %v1589, %v1656
    %1658 = vmatmul.f32.gmra.mxu0 %v1595
    %v1659 = vpop.f32.mrf.mxu0
    %v1660 = vadd.f32 %v1589, %v1659
    %1661 = vmatmul.f32.gmra.mxu0 %v1598
    %v1662 = vpop.f32.mrf.mxu0
    %v1663 = vadd.f32 %v1589, %v1662
    %1664 = vmatmul.f32.gmra.mxu0 %v1601
    %v1665 = vpop.f32.mrf.mxu0
    %v1666 = vadd.f32 %v1589, %v1665
    %1667 = vmatmul.f32.gmra.mxu0 %v1604
    %v1668 = vpop.f32.mrf.mxu0
    %v1669 = vadd.f32 %v1589, %v1668
    %1670 = vmatmul.f32.gmra.mxu0 %v1607
    %v1671 = vpop.f32.mrf.mxu0
    %v1672 = vadd.f32 %v1589, %v1671
    %1673 = vmatmul.f32.gmra.mxu0 %v1610
    %v1674 = vpop.f32.mrf.mxu0
    %v1675 = vadd.f32 %v1589, %v1674
    %1676 = vmatmul.f32.gmra.mxu0 %v1613
    %v1677 = vpop.f32.mrf.mxu0
    %v1678 = vadd.f32 %v1589, %v1677
    %1679 = vmatmul.f32.gmra.mxu0 %v1616
    %v1680 = vpop.f32.mrf.mxu0
    %v1681 = vadd.f32 %v1589, %v1680
    %1682 = vmatmul.f32.gmra.mxu0 %v1619
    %v1683 = vpop.f32.mrf.mxu0
    %v1684 = vadd.f32 %v1589, %v1683
    %1685 = vmatmul.f32.gmra.mxu0 %v1622
    %v1686 = vpop.f32.mrf.mxu0
    %v1687 = vadd.f32 %v1589, %v1686
    %1688 = vmatmul.f32.gmra.mxu0 %v1625
    %v1689 = vpop.f32.mrf.mxu0
    %v1690 = vadd.f32 %v1589, %v1689
    %1691 = vmatmul.f32.gmra.mxu0 %v1628
    %v1692 = vpop.f32.mrf.mxu0
    %v1693 = vadd.f32 %v1589, %v1692
    %1694 = vmatmul.f32.gmra.mxu0 %v1631
    %v1695 = vpop.f32.mrf.mxu0
    %v1696 = vadd.f32 %v1589, %v1695
    %1697 = vmatmul.f32.gmra.mxu0 %v1634
    %v1698 = vpop.f32.mrf.mxu0
    %v1699 = vadd.f32 %v1589, %v1698
    %1700 = vmatmul.f32.gmra.mxu0 %v1637
    %v1701 = vpop.f32.mrf.mxu0
    %v1702 = vadd.f32 %v1589, %v1701
    %1703 = vdwg.mxu0
    %1720 = vrot.lane.b32.xlu0 %v1657, 8
    %v1721 = vpop.permute.xlu0 %1720
    %1722 = vrot.lane.b32.xlu0 %v1660, 8
    %v1723 = vpop.permute.xlu0 %1722
    %1724 = vrot.lane.b32.xlu0 %v1663, 8
    %v1725 = vpop.permute.xlu0 %1724
    %1726 = vrot.lane.b32.xlu0 %v1666, 8
    %v1727 = vpop.permute.xlu0 %1726
    %1728 = vrot.lane.b32.xlu0 %v1669, 8
    %v1729 = vpop.permute.xlu0 %1728
    %1730 = vrot.lane.b32.xlu0 %v1672, 8
    %v1731 = vpop.permute.xlu0 %1730
    %1732 = vrot.lane.b32.xlu0 %v1675, 8
    %v1733 = vpop.permute.xlu0 %1732
    %1734 = vrot.lane.b32.xlu0 %v1678, 8
    %v1735 = vpop.permute.xlu0 %1734
    %1736 = vrot.lane.b32.xlu0 %v1681, 8
    %v1737 = vpop.permute.xlu0 %1736
    %1738 = vrot.lane.b32.xlu0 %v1684, 8
    %v1739 = vpop.permute.xlu0 %1738
    %1740 = vrot.lane.b32.xlu0 %v1687, 8
    %v1741 = vpop.permute.xlu0 %1740
    %1742 = vrot.lane.b32.xlu0 %v1690, 8
    %v1743 = vpop.permute.xlu0 %1742
    %1744 = vrot.lane.b32.xlu0 %v1693, 8
    %v1745 = vpop.permute.xlu0 %1744
    %1746 = vrot.lane.b32.xlu0 %v1696, 8
    %v1747 = vpop.permute.xlu0 %1746
    %1748 = vrot.lane.b32.xlu0 %v1699, 8
    %v1749 = vpop.permute.xlu0 %1748
    %1750 = vrot.lane.b32.xlu0 %v1702, 8
    %v1751 = vpop.permute.xlu0 %1750
    %vm1768 = vcmask 64512
    %v1769 = vsel %vm1768, %v1657, %v1721
    %v1770 = vsel %vm1768, %v1660, %v1723
    %v1771 = vsel %vm1768, %v1663, %v1725
    %v1772 = vsel %vm1768, %v1666, %v1727
    %v1773 = vsel %vm1768, %v1669, %v1729
    %v1774 = vsel %vm1768, %v1672, %v1731
    %v1775 = vsel %vm1768, %v1675, %v1733
    %v1776 = vsel %vm1768, %v1678, %v1735
    %v1777 = vsel %vm1768, %v1681, %v1737
    %v1778 = vsel %vm1768, %v1684, %v1739
    %v1779 = vsel %vm1768, %v1687, %v1741
    %v1780 = vsel %vm1768, %v1690, %v1743
    %v1781 = vsel %vm1768, %v1693, %v1745
    %v1782 = vsel %vm1768, %v1696, %v1747
    %v1783 = vsel %vm1768, %v1699, %v1749
    %v1784 = vsel %vm1768, %v1702, %v1751
    %1785 = vrot.lane.b32.xlu0 %v1657, 120
    %v1786 = vpop.permute.xlu0 %1785
    %1787 = vrot.lane.b32.xlu0 %v1660, 120
    %v1788 = vpop.permute.xlu0 %1787
    %1789 = vrot.lane.b32.xlu0 %v1663, 120
    %v1790 = vpop.permute.xlu0 %1789
    %1791 = vrot.lane.b32.xlu0 %v1666, 120
    %v1792 = vpop.permute.xlu0 %1791
    %1793 = vrot.lane.b32.xlu0 %v1669, 120
    %v1794 = vpop.permute.xlu0 %1793
    %1795 = vrot.lane.b32.xlu0 %v1672, 120
    %v1796 = vpop.permute.xlu0 %1795
    %1797 = vrot.lane.b32.xlu0 %v1675, 120
    %v1798 = vpop.permute.xlu0 %1797
    %1799 = vrot.lane.b32.xlu0 %v1678, 120
    %v1800 = vpop.permute.xlu0 %1799
    %1801 = vrot.lane.b32.xlu0 %v1681, 120
    %v1802 = vpop.permute.xlu0 %1801
    %1803 = vrot.lane.b32.xlu0 %v1684, 120
    %v1804 = vpop.permute.xlu0 %1803
    %1805 = vrot.lane.b32.xlu0 %v1687, 120
    %v1806 = vpop.permute.xlu0 %1805
    %1807 = vrot.lane.b32.xlu0 %v1690, 120
    %v1808 = vpop.permute.xlu0 %1807
    %1809 = vrot.lane.b32.xlu0 %v1693, 120
    %v1810 = vpop.permute.xlu0 %1809
    %1811 = vrot.lane.b32.xlu0 %v1696, 120
    %v1812 = vpop.permute.xlu0 %1811
    %1813 = vrot.lane.b32.xlu0 %v1699, 120
    %v1814 = vpop.permute.xlu0 %1813
    %1815 = vrot.lane.b32.xlu0 %v1702, 120
    %v1816 = vpop.permute.xlu0 %1815
    %v1833 = vsel %vm1768, %v1786, 0.0
    %v1834 = vsel %vm1768, %v1788, 0.0
    %v1835 = vsel %vm1768, %v1790, 0.0
    %v1836 = vsel %vm1768, %v1792, 0.0
    %v1837 = vsel %vm1768, %v1794, 0.0
    %v1838 = vsel %vm1768, %v1796, 0.0
    %v1839 = vsel %vm1768, %v1798, 0.0
    %v1840 = vsel %vm1768, %v1800, 0.0
    %v1841 = vsel %vm1768, %v1802, 0.0
    %v1842 = vsel %vm1768, %v1804, 0.0
    %v1843 = vsel %vm1768, %v1806, 0.0
    %v1844 = vsel %vm1768, %v1808, 0.0
    %v1845 = vsel %vm1768, %v1810, 0.0
    %v1846 = vsel %vm1768, %v1812, 0.0
    %v1847 = vsel %vm1768, %v1814, 0.0
    %v1848 = vsel %vm1768, %v1816, 0.0
    %1849 = vmatpush.msra.mxu0 %v1784
    %1850 = vmatpush.msra.mxu0 %v1783
    %1851 = vmatpush.msra.mxu0 %v1782
    %1852 = vmatpush.msra.mxu0 %v1781
    %1853 = vmatpush.msra.mxu0 %v1780
    %1854 = vmatpush.msra.mxu0 %v1779
    %1855 = vmatpush.msra.mxu0 %v1778
    %1856 = vmatpush.msra.mxu0 %v1777
    %1857 = vmatpush.msra.mxu0 %v1776
    %1858 = vmatpush.msra.mxu0 %v1775
    %1859 = vmatpush.msra.mxu0 %v1774
    %1860 = vmatpush.msra.mxu0 %v1773
    %1861 = vmatpush.msra.mxu0 %v1772
    %1862 = vmatpush.msra.mxu0 %v1771
    %1863 = vmatpush.msra.mxu0 %v1770
    %1864 = vmatpush.msra.mxu0 %v1769
    %1865 = vmatmul.f32.gmra.mxu0 %v131
    %v1866 = vpop.f32.mrf.mxu0
    %v1867 = vadd.f32 0.0, %v1866
    %1868 = vmatmul.f32.gmra.mxu0 %v133
    %v1869 = vpop.f32.mrf.mxu0
    %v1870 = vadd.f32 0.0, %v1869
    %1871 = vmatmul.f32.gmra.mxu0 %v135
    %v1872 = vpop.f32.mrf.mxu0
    %v1873 = vadd.f32 0.0, %v1872
    %1874 = vmatmul.f32.gmra.mxu0 %v137
    %v1875 = vpop.f32.mrf.mxu0
    %v1876 = vadd.f32 0.0, %v1875
    %1877 = vmatmul.f32.gmra.mxu0 %v139
    %v1878 = vpop.f32.mrf.mxu0
    %v1879 = vadd.f32 0.0, %v1878
    %1880 = vmatmul.f32.gmra.mxu0 %v141
    %v1881 = vpop.f32.mrf.mxu0
    %v1882 = vadd.f32 0.0, %v1881
    %1883 = vmatmul.f32.gmra.mxu0 %v143
    %v1884 = vpop.f32.mrf.mxu0
    %v1885 = vadd.f32 0.0, %v1884
    %1886 = vmatmul.f32.gmra.mxu0 %v145
    %v1887 = vpop.f32.mrf.mxu0
    %v1888 = vadd.f32 0.0, %v1887
    %1889 = vmatmul.f32.gmra.mxu0 %v147
    %v1890 = vpop.f32.mrf.mxu0
    %v1891 = vadd.f32 0.0, %v1890
    %1892 = vmatmul.f32.gmra.mxu0 %v149
    %v1893 = vpop.f32.mrf.mxu0
    %v1894 = vadd.f32 0.0, %v1893
    %1895 = vmatmul.f32.gmra.mxu0 %v151
    %v1896 = vpop.f32.mrf.mxu0
    %v1897 = vadd.f32 0.0, %v1896
    %1898 = vmatmul.f32.gmra.mxu0 %v153
    %v1899 = vpop.f32.mrf.mxu0
    %v1900 = vadd.f32 0.0, %v1899
    %1901 = vmatmul.f32.gmra.mxu0 %v155
    %v1902 = vpop.f32.mrf.mxu0
    %v1903 = vadd.f32 0.0, %v1902
    %1904 = vmatmul.f32.gmra.mxu0 %v157
    %v1905 = vpop.f32.mrf.mxu0
    %v1906 = vadd.f32 0.0, %v1905
    %1907 = vmatmul.f32.gmra.mxu0 %v159
    %v1908 = vpop.f32.mrf.mxu0
    %v1909 = vadd.f32 0.0, %v1908
    %1910 = vmatmul.f32.gmra.mxu0 %v161
    %v1911 = vpop.f32.mrf.mxu0
    %v1912 = vadd.f32 0.0, %v1911
    %1913 = vdwg.mxu0
    %1914 = vmatpush.msra.mxu0 %v1848
    %1915 = vmatpush.msra.mxu0 %v1847
    %1916 = vmatpush.msra.mxu0 %v1846
    %1917 = vmatpush.msra.mxu0 %v1845
    %1918 = vmatpush.msra.mxu0 %v1844
    %1919 = vmatpush.msra.mxu0 %v1843
    %1920 = vmatpush.msra.mxu0 %v1842
    %1921 = vmatpush.msra.mxu0 %v1841
    %1922 = vmatpush.msra.mxu0 %v1840
    %1923 = vmatpush.msra.mxu0 %v1839
    %1924 = vmatpush.msra.mxu0 %v1838
    %1925 = vmatpush.msra.mxu0 %v1837
    %1926 = vmatpush.msra.mxu0 %v1836
    %1927 = vmatpush.msra.mxu0 %v1835
    %1928 = vmatpush.msra.mxu0 %v1834
    %1929 = vmatpush.msra.mxu0 %v1833
    %1930 = vmatmul.f32.gmra.mxu0 %v132
    %v1931 = vpop.f32.mrf.mxu0
    %v1932 = vadd.f32 %v1867, %v1931
    %1933 = vmatmul.f32.gmra.mxu0 %v134
    %v1934 = vpop.f32.mrf.mxu0
    %v1935 = vadd.f32 %v1870, %v1934
    %1936 = vmatmul.f32.gmra.mxu0 %v136
    %v1937 = vpop.f32.mrf.mxu0
    %v1938 = vadd.f32 %v1873, %v1937
    %1939 = vmatmul.f32.gmra.mxu0 %v138
    %v1940 = vpop.f32.mrf.mxu0
    %v1941 = vadd.f32 %v1876, %v1940
    %1942 = vmatmul.f32.gmra.mxu0 %v140
    %v1943 = vpop.f32.mrf.mxu0
    %v1944 = vadd.f32 %v1879, %v1943
    %1945 = vmatmul.f32.gmra.mxu0 %v142
    %v1946 = vpop.f32.mrf.mxu0
    %v1947 = vadd.f32 %v1882, %v1946
    %1948 = vmatmul.f32.gmra.mxu0 %v144
    %v1949 = vpop.f32.mrf.mxu0
    %v1950 = vadd.f32 %v1885, %v1949
    %1951 = vmatmul.f32.gmra.mxu0 %v146
    %v1952 = vpop.f32.mrf.mxu0
    %v1953 = vadd.f32 %v1888, %v1952
    %1954 = vmatmul.f32.gmra.mxu0 %v148
    %v1955 = vpop.f32.mrf.mxu0
    %v1956 = vadd.f32 %v1891, %v1955
    %1957 = vmatmul.f32.gmra.mxu0 %v150
    %v1958 = vpop.f32.mrf.mxu0
    %v1959 = vadd.f32 %v1894, %v1958
    %1960 = vmatmul.f32.gmra.mxu0 %v152
    %v1961 = vpop.f32.mrf.mxu0
    %v1962 = vadd.f32 %v1897, %v1961
    %1963 = vmatmul.f32.gmra.mxu0 %v154
    %v1964 = vpop.f32.mrf.mxu0
    %v1965 = vadd.f32 %v1900, %v1964
    %1966 = vmatmul.f32.gmra.mxu0 %v156
    %v1967 = vpop.f32.mrf.mxu0
    %v1968 = vadd.f32 %v1903, %v1967
    %1969 = vmatmul.f32.gmra.mxu0 %v158
    %v1970 = vpop.f32.mrf.mxu0
    %v1971 = vadd.f32 %v1906, %v1970
    %1972 = vmatmul.f32.gmra.mxu0 %v160
    %v1973 = vpop.f32.mrf.mxu0
    %v1974 = vadd.f32 %v1909, %v1973
    %1975 = vmatmul.f32.gmra.mxu0 %v162
    %v1976 = vpop.f32.mrf.mxu0
    %v1977 = vadd.f32 %v1912, %v1976
    %1978 = vdwg.mxu0
    %v1979 = vld [vmem:[%s31] sm:$0x3f]
    %v1981 = vsel %vm660, %v1979, 0
    %1983 = vmatpush.msra.mxu0 0.0
    %1984 = vmatpush.msra.mxu0 0.0
    %1985 = vmatpush.msra.mxu0 0.0
    %1986 = vmatpush.msra.mxu0 0.0
    %1987 = vmatpush.msra.mxu0 0.0
    %1988 = vmatpush.msra.mxu0 0.0
    %1989 = vmatpush.msra.mxu0 0.0
    %1990 = vmatpush.msra.mxu0 0.0
    %1991 = vmatpush.msra.mxu0 0.0
    %1992 = vmatpush.msra.mxu0 0.0
    %1993 = vmatpush.msra.mxu0 0.0
    %1994 = vmatpush.msra.mxu0 0.0
    %1995 = vmatpush.msra.mxu0 0.0
    %1996 = vmatpush.msra.mxu0 0.0
    %1997 = vmatpush.msra.mxu0 0.0
    %1998 = vmatpush.msra.mxu0 %v1981
    %1999 = vmatmul.f32.gmra.mxu0 %v613
    %v2000 = vpop.f32.mrf.mxu0
    %v2001 = vadd.f32 0.0, %v2000
    %2002 = vmatmul.f32.gmra.mxu0 %v616
    %v2003 = vpop.f32.mrf.mxu0
    %v2004 = vadd.f32 0.0, %v2003
    %2005 = vmatmul.f32.gmra.mxu0 %v619
    %v2006 = vpop.f32.mrf.mxu0
    %v2007 = vadd.f32 0.0, %v2006
    %2008 = vmatmul.f32.gmra.mxu0 %v622
    %v2009 = vpop.f32.mrf.mxu0
    %v2010 = vadd.f32 0.0, %v2009
    %2011 = vmatmul.f32.gmra.mxu0 %v625
    %v2012 = vpop.f32.mrf.mxu0
    %v2013 = vadd.f32 0.0, %v2012
    %2014 = vmatmul.f32.gmra.mxu0 %v628
    %v2015 = vpop.f32.mrf.mxu0
    %v2016 = vadd.f32 0.0, %v2015
    %2017 = vmatmul.f32.gmra.mxu0 %v631
    %v2018 = vpop.f32.mrf.mxu0
    %v2019 = vadd.f32 0.0, %v2018
    %2020 = vmatmul.f32.gmra.mxu0 %v634
    %v2021 = vpop.f32.mrf.mxu0
    %v2022 = vadd.f32 0.0, %v2021
    %2023 = vmatmul.f32.gmra.mxu0 %v637
    %v2024 = vpop.f32.mrf.mxu0
    %v2025 = vadd.f32 0.0, %v2024
    %2026 = vmatmul.f32.gmra.mxu0 %v640
    %v2027 = vpop.f32.mrf.mxu0
    %v2028 = vadd.f32 0.0, %v2027
    %2029 = vmatmul.f32.gmra.mxu0 %v643
    %v2030 = vpop.f32.mrf.mxu0
    %v2031 = vadd.f32 0.0, %v2030
    %2032 = vmatmul.f32.gmra.mxu0 %v646
    %v2033 = vpop.f32.mrf.mxu0
    %v2034 = vadd.f32 0.0, %v2033
    %2035 = vmatmul.f32.gmra.mxu0 %v649
    %v2036 = vpop.f32.mrf.mxu0
    %v2037 = vadd.f32 0.0, %v2036
    %2038 = vmatmul.f32.gmra.mxu0 %v652
    %v2039 = vpop.f32.mrf.mxu0
    %v2040 = vadd.f32 0.0, %v2039
    %2041 = vmatmul.f32.gmra.mxu0 %v655
    %v2042 = vpop.f32.mrf.mxu0
    %v2043 = vadd.f32 0.0, %v2042
    %2044 = vmatmul.f32.gmra.mxu0 %v658
    %v2045 = vpop.f32.mrf.mxu0
    %v2046 = vadd.f32 0.0, %v2045
    %2047 = vdwg.mxu0
    %v2048 = vadd.f32 %v1932, %v2001
    %v2049 = vadd.f32 %v1935, %v2004
    %v2050 = vadd.f32 %v1938, %v2007
    %v2051 = vadd.f32 %v1941, %v2010
    %v2052 = vadd.f32 %v1944, %v2013
    %v2053 = vadd.f32 %v1947, %v2016
    %v2054 = vadd.f32 %v1950, %v2019
    %v2055 = vadd.f32 %v1953, %v2022
    %v2056 = vadd.f32 %v1956, %v2025
    %v2057 = vadd.f32 %v1959, %v2028
    %v2058 = vadd.f32 %v1962, %v2031
    %v2059 = vadd.f32 %v1965, %v2034
    %v2060 = vadd.f32 %v1968, %v2037
    %v2061 = vadd.f32 %v1971, %v2040
    %v2062 = vadd.f32 %v1974, %v2043
    %v2063 = vadd.f32 %v1977, %v2046
    %vm2064 = vcmp.gt.f32.partialorder %v2048, 0.0
    %vm2065 = vcmp.gt.f32.partialorder %v2049, 0.0
    %vm2066 = vcmp.gt.f32.partialorder %v2050, 0.0
    %vm2067 = vcmp.gt.f32.partialorder %v2051, 0.0
    %vm2068 = vcmp.gt.f32.partialorder %v2052, 0.0
    %vm2069 = vcmp.gt.f32.partialorder %v2053, 0.0
    %vm2070 = vcmp.gt.f32.partialorder %v2054, 0.0
    %vm2071 = vcmp.gt.f32.partialorder %v2055, 0.0
    %vm2072 = vcmp.gt.f32.partialorder %v2056, 0.0
    %vm2073 = vcmp.gt.f32.partialorder %v2057, 0.0
    %vm2074 = vcmp.gt.f32.partialorder %v2058, 0.0
    %vm2075 = vcmp.gt.f32.partialorder %v2059, 0.0
    %vm2076 = vcmp.gt.f32.partialorder %v2060, 0.0
    %vm2077 = vcmp.gt.f32.partialorder %v2061, 0.0
    %vm2078 = vcmp.gt.f32.partialorder %v2062, 0.0
    %vm2079 = vcmp.gt.f32.partialorder %v2063, 0.0
    %v2080 = vmul.f32 %v2048, 0.2
    %v2081 = vmul.f32 %v2049, 0.2
    %v2082 = vmul.f32 %v2050, 0.2
    %v2083 = vmul.f32 %v2051, 0.2
    %v2084 = vmul.f32 %v2052, 0.2
    %v2085 = vmul.f32 %v2053, 0.2
    %v2086 = vmul.f32 %v2054, 0.2
    %v2087 = vmul.f32 %v2055, 0.2
    %v2088 = vmul.f32 %v2056, 0.2
    %v2089 = vmul.f32 %v2057, 0.2
    %v2090 = vmul.f32 %v2058, 0.2
    %v2091 = vmul.f32 %v2059, 0.2
    %v2092 = vmul.f32 %v2060, 0.2
    %v2093 = vmul.f32 %v2061, 0.2
    %v2094 = vmul.f32 %v2062, 0.2
    %v2095 = vmul.f32 %v2063, 0.2
    %v2096 = vsel %vm2064, %v2048, %v2080
    %v2097 = vsel %vm2065, %v2049, %v2081
    %v2098 = vsel %vm2066, %v2050, %v2082
    %v2099 = vsel %vm2067, %v2051, %v2083
    %v2100 = vsel %vm2068, %v2052, %v2084
    %v2101 = vsel %vm2069, %v2053, %v2085
    %v2102 = vsel %vm2070, %v2054, %v2086
    %v2103 = vsel %vm2071, %v2055, %v2087
    %v2104 = vsel %vm2072, %v2056, %v2088
    %v2105 = vsel %vm2073, %v2057, %v2089
    %v2106 = vsel %vm2074, %v2058, %v2090
    %v2107 = vsel %vm2075, %v2059, %v2091
    %v2108 = vsel %vm2076, %v2060, %v2092
    %v2109 = vsel %vm2077, %v2061, %v2093
    %v2110 = vsel %vm2078, %v2062, %v2094
    %v2111 = vsel %vm2079, %v2063, %v2095
    %v2112 = vld [vmem:[%s33] sm:$0x1]
    %v2114 = vperm.slane %v2112, 0
    %v2116 = vmul.f32 %v2096, %v2114
    %v2117 = vmul.f32 %v2097, %v2114
    %v2118 = vmul.f32 %v2098, %v2114
    %v2119 = vmul.f32 %v2099, %v2114
    %v2120 = vmul.f32 %v2100, %v2114
    %v2121 = vmul.f32 %v2101, %v2114
    %v2122 = vmul.f32 %v2102, %v2114
    %v2123 = vmul.f32 %v2103, %v2114
    %v2124 = vmul.f32 %v2104, %v2114
    %v2125 = vmul.f32 %v2105, %v2114
    %v2126 = vmul.f32 %v2106, %v2114
    %v2127 = vmul.f32 %v2107, %v2114
    %v2128 = vmul.f32 %v2108, %v2114
    %v2129 = vmul.f32 %v2109, %v2114
    %v2130 = vmul.f32 %v2110, %v2114
    %v2131 = vmul.f32 %v2111, %v2114
    %v2132 = vsel %vm1768, %v2116, 0.0
    %2133 = vadd.xlane.f32.xlu0 %v2132
    %v2134 = vpop.xlane.xlu0 %2133
    %v2135 = vsel %vm1768, %v2117, 0.0
    %2136 = vadd.xlane.f32.xlu0 %v2135
    %v2137 = vpop.xlane.xlu0 %2136
    %v2138 = vsel %vm1768, %v2118, 0.0
    %2139 = vadd.xlane.f32.xlu0 %v2138
    %v2140 = vpop.xlane.xlu0 %2139
    %v2141 = vsel %vm1768, %v2119, 0.0
    %2142 = vadd.xlane.f32.xlu0 %v2141
    %v2143 = vpop.xlane.xlu0 %2142
    %v2144 = vsel %vm1768, %v2120, 0.0
    %2145 = vadd.xlane.f32.xlu0 %v2144
    %v2146 = vpop.xlane.xlu0 %2145
    %v2147 = vsel %vm1768, %v2121, 0.0
    %2148 = vadd.xlane.f32.xlu0 %v2147
    %v2149 = vpop.xlane.xlu0 %2148
    %v2150 = vsel %vm1768, %v2122, 0.0
    %2151 = vadd.xlane.f32.xlu0 %v2150
    %v2152 = vpop.xlane.xlu0 %2151
    %v2153 = vsel %vm1768, %v2123, 0.0
    %2154 = vadd.xlane.f32.xlu0 %v2153
    %v2155 = vpop.xlane.xlu0 %2154
    %v2156 = vsel %vm1768, %v2124, 0.0
    %2157 = vadd.xlane.f32.xlu0 %v2156
    %v2158 = vpop.xlane.xlu0 %2157
    %v2159 = vsel %vm1768, %v2125, 0.0
    %2160 = vadd.xlane.f32.xlu0 %v2159
    %v2161 = vpop.xlane.xlu0 %2160
    %v2162 = vsel %vm1768, %v2126, 0.0
    %2163 = vadd.xlane.f32.xlu0 %v2162
    %v2164 = vpop.xlane.xlu0 %2163
    %v2165 = vsel %vm1768, %v2127, 0.0
    %2166 = vadd.xlane.f32.xlu0 %v2165
    %v2167 = vpop.xlane.xlu0 %2166
    %v2168 = vsel %vm1768, %v2128, 0.0
    %2169 = vadd.xlane.f32.xlu0 %v2168
    %v2170 = vpop.xlane.xlu0 %2169
    %v2171 = vsel %vm1768, %v2129, 0.0
    %2172 = vadd.xlane.f32.xlu0 %v2171
    %v2173 = vpop.xlane.xlu0 %2172
    %v2174 = vsel %vm1768, %v2130, 0.0
    %2175 = vadd.xlane.f32.xlu0 %v2174
    %v2176 = vpop.xlane.xlu0 %2175
    %v2177 = vsel %vm1768, %v2131, 0.0
    %2178 = vadd.xlane.f32.xlu0 %v2177
    %v2179 = vpop.xlane.xlu0 %2178
    %v2180 = vsel %vm861, %v2134, -1e+30
    %v2181 = vsel %vm862, %v2137, -1e+30
    %v2182 = vsel %vm863, %v2140, -1e+30
    %v2183 = vsel %vm864, %v2143, -1e+30
    %v2184 = vsel %vm865, %v2146, -1e+30
    %v2185 = vsel %vm866, %v2149, -1e+30
    %v2186 = vsel %vm867, %v2152, -1e+30
    %v2187 = vsel %vm868, %v2155, -1e+30
    %v2188 = vsel %vm869, %v2158, -1e+30
    %v2189 = vsel %vm870, %v2161, -1e+30
    %v2190 = vsel %vm871, %v2164, -1e+30
    %v2191 = vsel %vm872, %v2167, -1e+30
    %v2192 = vsel %vm873, %v2170, -1e+30
    %v2193 = vsel %vm874, %v2173, -1e+30
    %v2194 = vsel %vm875, %v2176, -1e+30
    %v2195 = vsel %vm876, %v2179, -1e+30
    %v2196 = vmax.f32 %v2180, %v2184
    %v2197 = vmax.f32 %v2181, %v2185
    %v2198 = vmax.f32 %v2182, %v2186
    %v2199 = vmax.f32 %v2183, %v2187
    %v2200 = vmax.f32 %v2196, %v2188
    %v2201 = vmax.f32 %v2197, %v2189
    %v2202 = vmax.f32 %v2198, %v2190
    %v2203 = vmax.f32 %v2199, %v2191
    %v2204 = vmax.f32 %v2200, %v2192
    %v2205 = vmax.f32 %v2201, %v2193
    %v2206 = vmax.f32 %v2202, %v2194
    %v2207 = vmax.f32 %v2203, %v2195
    %v2208 = vmax.f32 %v2204, %v2205
    %v2209 = vmax.f32 %v2206, %v2207
    %v2210 = vmax.f32 %v2208, %v2209
    %v2211 = vrot.slane %v2210, 4
    %v2212 = vmax.f32 %v2210, %v2211
    %v2213 = vrot.slane %v2212, 2
    %v2214 = vmax.f32 %v2212, %v2213
    %v2215 = vrot.slane %v2214, 1
    %v2216 = vmax.f32 %v2214, %v2215
    %v2217 = vmul.f32 %v132, %v2216
    %v2218 = vmul.f32 %v134, %v2216
    %v2219 = vmul.f32 %v136, %v2216
    %v2220 = vmul.f32 %v138, %v2216
    %v2221 = vmul.f32 %v140, %v2216
    %v2222 = vmul.f32 %v142, %v2216
    %v2223 = vmul.f32 %v144, %v2216
    %v2224 = vmul.f32 %v146, %v2216
    %v2225 = vmul.f32 %v148, %v2216
    %v2226 = vmul.f32 %v150, %v2216
    %v2227 = vmul.f32 %v152, %v2216
    %v2228 = vmul.f32 %v154, %v2216
    %v2229 = vmul.f32 %v156, %v2216
    %v2230 = vmul.f32 %v158, %v2216
    %v2231 = vmul.f32 %v160, %v2216
    %v2232 = vmul.f32 %v162, %v2216
    %2233 = vadd.xlane.f32.xlu0 %v2217
    %v2234 = vpop.xlane.xlu0 %2233
    %2235 = vadd.xlane.f32.xlu0 %v2218
    %v2236 = vpop.xlane.xlu0 %2235
    %2237 = vadd.xlane.f32.xlu0 %v2219
    %v2238 = vpop.xlane.xlu0 %2237
    %2239 = vadd.xlane.f32.xlu0 %v2220
    %v2240 = vpop.xlane.xlu0 %2239
    %2241 = vadd.xlane.f32.xlu0 %v2221
    %v2242 = vpop.xlane.xlu0 %2241
    %2243 = vadd.xlane.f32.xlu0 %v2222
    %v2244 = vpop.xlane.xlu0 %2243
    %2245 = vadd.xlane.f32.xlu0 %v2223
    %v2246 = vpop.xlane.xlu0 %2245
    %2247 = vadd.xlane.f32.xlu0 %v2224
    %v2248 = vpop.xlane.xlu0 %2247
    %2249 = vadd.xlane.f32.xlu0 %v2225
    %v2250 = vpop.xlane.xlu0 %2249
    %2251 = vadd.xlane.f32.xlu0 %v2226
    %v2252 = vpop.xlane.xlu0 %2251
    %2253 = vadd.xlane.f32.xlu0 %v2227
    %v2254 = vpop.xlane.xlu0 %2253
    %2255 = vadd.xlane.f32.xlu0 %v2228
    %v2256 = vpop.xlane.xlu0 %2255
    %2257 = vadd.xlane.f32.xlu0 %v2229
    %v2258 = vpop.xlane.xlu0 %2257
    %2259 = vadd.xlane.f32.xlu0 %v2230
    %v2260 = vpop.xlane.xlu0 %2259
    %2261 = vadd.xlane.f32.xlu0 %v2231
    %v2262 = vpop.xlane.xlu0 %2261
    %2263 = vadd.xlane.f32.xlu0 %v2232
    %v2264 = vpop.xlane.xlu0 %2263
    %v2265 = vsub.f32 %v2134, %v2234
    %v2266 = vsub.f32 %v2137, %v2236
    %v2267 = vsub.f32 %v2140, %v2238
    %v2268 = vsub.f32 %v2143, %v2240
    %v2269 = vsub.f32 %v2146, %v2242
    %v2270 = vsub.f32 %v2149, %v2244
    %v2271 = vsub.f32 %v2152, %v2246
    %v2272 = vsub.f32 %v2155, %v2248
    %v2273 = vsub.f32 %v2158, %v2250
    %v2274 = vsub.f32 %v2161, %v2252
    %v2275 = vsub.f32 %v2164, %v2254
    %v2276 = vsub.f32 %v2167, %v2256
    %v2277 = vsub.f32 %v2170, %v2258
    %v2278 = vsub.f32 %v2173, %v2260
    %v2279 = vsub.f32 %v2176, %v2262
    %v2280 = vsub.f32 %v2179, %v2264
    %v2281 = vmul.f32 %v2265, 1.442695
    %v2282 = vpow.pop %v2281
    %v2283 = vmul.f32 %v2266, 1.442695
    %v2284 = vpow.pop %v2283
    %v2285 = vmul.f32 %v2267, 1.442695
    %v2286 = vpow.pop %v2285
    %v2287 = vmul.f32 %v2268, 1.442695
    %v2288 = vpow.pop %v2287
    %v2289 = vmul.f32 %v2269, 1.442695
    %v2290 = vpow.pop %v2289
    %v2291 = vmul.f32 %v2270, 1.442695
    %v2292 = vpow.pop %v2291
    %v2293 = vmul.f32 %v2271, 1.442695
    %v2294 = vpow.pop %v2293
    %v2295 = vmul.f32 %v2272, 1.442695
    %v2296 = vpow.pop %v2295
    %v2297 = vmul.f32 %v2273, 1.442695
    %v2298 = vpow.pop %v2297
    %v2299 = vmul.f32 %v2274, 1.442695
    %v2300 = vpow.pop %v2299
    %v2301 = vmul.f32 %v2275, 1.442695
    %v2302 = vpow.pop %v2301
    %v2303 = vmul.f32 %v2276, 1.442695
    %v2304 = vpow.pop %v2303
    %v2305 = vmul.f32 %v2277, 1.442695
    %v2306 = vpow.pop %v2305
    %v2307 = vmul.f32 %v2278, 1.442695
    %v2308 = vpow.pop %v2307
    %v2309 = vmul.f32 %v2279, 1.442695
    %v2310 = vpow.pop %v2309
    %v2311 = vmul.f32 %v2280, 1.442695
    %v2312 = vpow.pop %v2311
    %v2313 = vmul.f32 %v2282, %v1932
    %v2314 = vmul.f32 %v2284, %v1935
    %v2315 = vmul.f32 %v2286, %v1938
    %v2316 = vmul.f32 %v2288, %v1941
    %v2317 = vmul.f32 %v2290, %v1944
    %v2318 = vmul.f32 %v2292, %v1947
    %v2319 = vmul.f32 %v2294, %v1950
    %v2320 = vmul.f32 %v2296, %v1953
    %v2321 = vmul.f32 %v2298, %v1956
    %v2322 = vmul.f32 %v2300, %v1959
    %v2323 = vmul.f32 %v2302, %v1962
    %v2324 = vmul.f32 %v2304, %v1965
    %v2325 = vmul.f32 %v2306, %v1968
    %v2326 = vmul.f32 %v2308, %v1971
    %v2327 = vmul.f32 %v2310, %v1974
    %v2328 = vmul.f32 %v2312, %v1977
    %2345 = vrot.lane.b32.xlu0 %v2313, 120
    %v2346 = vpop.permute.xlu0 %2345
    %2347 = vrot.lane.b32.xlu0 %v2314, 120
    %v2348 = vpop.permute.xlu0 %2347
    %2349 = vrot.lane.b32.xlu0 %v2315, 120
    %v2350 = vpop.permute.xlu0 %2349
    %2351 = vrot.lane.b32.xlu0 %v2316, 120
    %v2352 = vpop.permute.xlu0 %2351
    %2353 = vrot.lane.b32.xlu0 %v2317, 120
    %v2354 = vpop.permute.xlu0 %2353
    %2355 = vrot.lane.b32.xlu0 %v2318, 120
    %v2356 = vpop.permute.xlu0 %2355
    %2357 = vrot.lane.b32.xlu0 %v2319, 120
    %v2358 = vpop.permute.xlu0 %2357
    %2359 = vrot.lane.b32.xlu0 %v2320, 120
    %v2360 = vpop.permute.xlu0 %2359
    %2361 = vrot.lane.b32.xlu0 %v2321, 120
    %v2362 = vpop.permute.xlu0 %2361
    %2363 = vrot.lane.b32.xlu0 %v2322, 120
    %v2364 = vpop.permute.xlu0 %2363
    %2365 = vrot.lane.b32.xlu0 %v2323, 120
    %v2366 = vpop.permute.xlu0 %2365
    %2367 = vrot.lane.b32.xlu0 %v2324, 120
    %v2368 = vpop.permute.xlu0 %2367
    %2369 = vrot.lane.b32.xlu0 %v2325, 120
    %v2370 = vpop.permute.xlu0 %2369
    %2371 = vrot.lane.b32.xlu0 %v2326, 120
    %v2372 = vpop.permute.xlu0 %2371
    %2373 = vrot.lane.b32.xlu0 %v2327, 120
    %v2374 = vpop.permute.xlu0 %2373
    %2375 = vrot.lane.b32.xlu0 %v2328, 120
    %v2376 = vpop.permute.xlu0 %2375
    %v2393 = vsel %vm1768, %v2346, %v2282
    %v2394 = vsel %vm1768, %v2348, %v2284
    %v2395 = vsel %vm1768, %v2350, %v2286
    %v2396 = vsel %vm1768, %v2352, %v2288
    %v2397 = vsel %vm1768, %v2354, %v2290
    %v2398 = vsel %vm1768, %v2356, %v2292
    %v2399 = vsel %vm1768, %v2358, %v2294
    %v2400 = vsel %vm1768, %v2360, %v2296
    %v2401 = vsel %vm1768, %v2362, %v2298
    %v2402 = vsel %vm1768, %v2364, %v2300
    %v2403 = vsel %vm1768, %v2366, %v2302
    %v2404 = vsel %vm1768, %v2368, %v2304
    %v2405 = vsel %vm1768, %v2370, %v2306
    %v2406 = vsel %vm1768, %v2372, %v2308
    %v2407 = vsel %vm1768, %v2374, %v2310
    %v2408 = vsel %vm1768, %v2376, %v2312
    %2409 = vmatpush.msra.mxu0 %v2408
    %2410 = vmatpush.msra.mxu0 %v2407
    %2411 = vmatpush.msra.mxu0 %v2406
    %2412 = vmatpush.msra.mxu0 %v2405
    %2413 = vmatpush.msra.mxu0 %v2404
    %2414 = vmatpush.msra.mxu0 %v2403
    %2415 = vmatpush.msra.mxu0 %v2402
    %2416 = vmatpush.msra.mxu0 %v2401
    %2417 = vmatpush.msra.mxu0 %v2400
    %2418 = vmatpush.msra.mxu0 %v2399
    %2419 = vmatpush.msra.mxu0 %v2398
    %2420 = vmatpush.msra.mxu0 %v2397
    %2421 = vmatpush.msra.mxu0 %v2396
    %2422 = vmatpush.msra.mxu0 %v2395
    %2423 = vmatpush.msra.mxu0 %v2394
    %2424 = vmatpush.msra.mxu0 %v2393
    %2425 = vmatmul.f32.gmra.mxu0 %v163
    %v2426 = vpop.f32.mrf.mxu0
    %v2427 = vadd.f32 0.0, %v2426
    %2428 = vmatmul.f32.gmra.mxu0 %v164
    %v2429 = vpop.f32.mrf.mxu0
    %v2430 = vadd.f32 0.0, %v2429
    %2431 = vmatmul.f32.gmra.mxu0 %v165
    %v2432 = vpop.f32.mrf.mxu0
    %v2433 = vadd.f32 0.0, %v2432
    %2434 = vmatmul.f32.gmra.mxu0 %v166
    %v2435 = vpop.f32.mrf.mxu0
    %v2436 = vadd.f32 0.0, %v2435
    %2437 = vmatmul.f32.gmra.mxu0 %v167
    %v2438 = vpop.f32.mrf.mxu0
    %v2439 = vadd.f32 0.0, %v2438
    %2440 = vmatmul.f32.gmra.mxu0 %v168
    %v2441 = vpop.f32.mrf.mxu0
    %v2442 = vadd.f32 0.0, %v2441
    %2443 = vmatmul.f32.gmra.mxu0 %v169
    %v2444 = vpop.f32.mrf.mxu0
    %v2445 = vadd.f32 0.0, %v2444
    %2446 = vmatmul.f32.gmra.mxu0 %v170
    %v2447 = vpop.f32.mrf.mxu0
    %v2448 = vadd.f32 0.0, %v2447
    %2449 = vmatmul.f32.gmra.mxu0 %v171
    %v2450 = vpop.f32.mrf.mxu0
    %v2451 = vadd.f32 0.0, %v2450
    %2452 = vmatmul.f32.gmra.mxu0 %v172
    %v2453 = vpop.f32.mrf.mxu0
    %v2454 = vadd.f32 0.0, %v2453
    %2455 = vmatmul.f32.gmra.mxu0 %v173
    %v2456 = vpop.f32.mrf.mxu0
    %v2457 = vadd.f32 0.0, %v2456
    %2458 = vmatmul.f32.gmra.mxu0 %v174
    %v2459 = vpop.f32.mrf.mxu0
    %v2460 = vadd.f32 0.0, %v2459
    %2461 = vmatmul.f32.gmra.mxu0 %v175
    %v2462 = vpop.f32.mrf.mxu0
    %v2463 = vadd.f32 0.0, %v2462
    %2464 = vmatmul.f32.gmra.mxu0 %v176
    %v2465 = vpop.f32.mrf.mxu0
    %v2466 = vadd.f32 0.0, %v2465
    %2467 = vmatmul.f32.gmra.mxu0 %v177
    %v2468 = vpop.f32.mrf.mxu0
    %v2469 = vadd.f32 0.0, %v2468
    %2470 = vmatmul.f32.gmra.mxu0 %v178
    %v2471 = vpop.f32.mrf.mxu0
    %v2472 = vadd.f32 0.0, %v2471
    %2473 = vdwg.mxu0
    %v2474 = vadd.f32 %v2427, 1e-16
    %v2475 = vadd.f32 %v2430, 1e-16
    %v2476 = vadd.f32 %v2433, 1e-16
    %v2477 = vadd.f32 %v2436, 1e-16
    %v2478 = vadd.f32 %v2439, 1e-16
    %v2479 = vadd.f32 %v2442, 1e-16
    %v2480 = vadd.f32 %v2445, 1e-16
    %v2481 = vadd.f32 %v2448, 1e-16
    %v2482 = vadd.f32 %v2451, 1e-16
    %v2483 = vadd.f32 %v2454, 1e-16
    %v2484 = vadd.f32 %v2457, 1e-16
    %v2485 = vadd.f32 %v2460, 1e-16
    %v2486 = vadd.f32 %v2463, 1e-16
    %v2487 = vadd.f32 %v2466, 1e-16
    %v2488 = vadd.f32 %v2469, 1e-16
    %v2489 = vadd.f32 %v2472, 1e-16
    %2491 = vset.pattern.permute.xlu0 8
    %2492 = vperm.xlu0 %2491, %v2474
    %v2493 = vpop.permute.xlu0 %2492
    %2496 = vset.pattern.permute.xlu0 8
    %2497 = vperm.xlu0 %2496, %v2475
    %v2498 = vpop.permute.xlu0 %2497
    %2501 = vset.pattern.permute.xlu0 8
    %2502 = vperm.xlu0 %2501, %v2476
    %v2503 = vpop.permute.xlu0 %2502
    %2506 = vset.pattern.permute.xlu0 8
    %2507 = vperm.xlu0 %2506, %v2477
    %v2508 = vpop.permute.xlu0 %2507
    %2511 = vset.pattern.permute.xlu0 8
    %2512 = vperm.xlu0 %2511, %v2478
    %v2513 = vpop.permute.xlu0 %2512
    %2516 = vset.pattern.permute.xlu0 8
    %2517 = vperm.xlu0 %2516, %v2479
    %v2518 = vpop.permute.xlu0 %2517
    %2521 = vset.pattern.permute.xlu0 8
    %2522 = vperm.xlu0 %2521, %v2480
    %v2523 = vpop.permute.xlu0 %2522
    %2526 = vset.pattern.permute.xlu0 8
    %2527 = vperm.xlu0 %2526, %v2481
    %v2528 = vpop.permute.xlu0 %2527
    %2531 = vset.pattern.permute.xlu0 8
    %2532 = vperm.xlu0 %2531, %v2482
    %v2533 = vpop.permute.xlu0 %2532
    %2536 = vset.pattern.permute.xlu0 8
    %2537 = vperm.xlu0 %2536, %v2483
    %v2538 = vpop.permute.xlu0 %2537
    %2541 = vset.pattern.permute.xlu0 8
    %2542 = vperm.xlu0 %2541, %v2484
    %v2543 = vpop.permute.xlu0 %2542
    %2546 = vset.pattern.permute.xlu0 8
    %2547 = vperm.xlu0 %2546, %v2485
    %v2548 = vpop.permute.xlu0 %2547
    %2551 = vset.pattern.permute.xlu0 8
    %2552 = vperm.xlu0 %2551, %v2486
    %v2553 = vpop.permute.xlu0 %2552
    %2556 = vset.pattern.permute.xlu0 8
    %2557 = vperm.xlu0 %2556, %v2487
    %v2558 = vpop.permute.xlu0 %2557
    %2561 = vset.pattern.permute.xlu0 8
    %2562 = vperm.xlu0 %2561, %v2488
    %v2563 = vpop.permute.xlu0 %2562
    %2566 = vset.pattern.permute.xlu0 8
    %2567 = vperm.xlu0 %2566, %v2489
    %v2568 = vpop.permute.xlu0 %2567
    %v2570 = vrcp.pop %v2493
    %v2571 = vmul.f32 %v2493, %v2570
    %v2572 = vsub.f32 1.0, %v2571
    %v2573 = vmul.f32 %v2570, %v2572
    %v2574 = vadd.f32 %v2570, %v2573
    %vm2575 = vweird.f32 %v2493
    %vm2576 = vweird.f32 %v2570
    %vm2577 = vmor %vm2575, %vm2576
    %v2578 = vsel %vm2577, %v2570, %v2574
    %v2579 = vand.u32 2147483647, %v2493
    %vm2580 = vcmp.eq.f32.partialorder %v2579, 8.507059e+37
    %v2581 = vand.u32 %v2493, 2147483648
    %v2582 = vor.u32 1.1754944e-38, %v2581
    %v2583 = vsel %vm2580, %v2582, %v2578
    %v2584 = vmul.f32 %v2427, %v2583
    %v2585 = vrcp.pop %v2498
    %v2586 = vmul.f32 %v2498, %v2585
    %v2587 = vsub.f32 1.0, %v2586
    %v2588 = vmul.f32 %v2585, %v2587
    %v2589 = vadd.f32 %v2585, %v2588
    %vm2590 = vweird.f32 %v2498
    %vm2591 = vweird.f32 %v2585
    %vm2592 = vmor %vm2590, %vm2591
    %v2593 = vsel %vm2592, %v2585, %v2589
    %v2594 = vand.u32 2147483647, %v2498
    %vm2595 = vcmp.eq.f32.partialorder %v2594, 8.507059e+37
    %v2596 = vand.u32 %v2498, 2147483648
    %v2597 = vor.u32 1.1754944e-38, %v2596
    %v2598 = vsel %vm2595, %v2597, %v2593
    %v2599 = vmul.f32 %v2430, %v2598
    %v2600 = vrcp.pop %v2503
    %v2601 = vmul.f32 %v2503, %v2600
    %v2602 = vsub.f32 1.0, %v2601
    %v2603 = vmul.f32 %v2600, %v2602
    %v2604 = vadd.f32 %v2600, %v2603
    %vm2605 = vweird.f32 %v2503
    %vm2606 = vweird.f32 %v2600
    %vm2607 = vmor %vm2605, %vm2606
    %v2608 = vsel %vm2607, %v2600, %v2604
    %v2609 = vand.u32 2147483647, %v2503
    %vm2610 = vcmp.eq.f32.partialorder %v2609, 8.507059e+37
    %v2611 = vand.u32 %v2503, 2147483648
    %v2612 = vor.u32 1.1754944e-38, %v2611
    %v2613 = vsel %vm2610, %v2612, %v2608
    %v2614 = vmul.f32 %v2433, %v2613
    %v2615 = vrcp.pop %v2508
    %v2616 = vmul.f32 %v2508, %v2615
    %v2617 = vsub.f32 1.0, %v2616
    %v2618 = vmul.f32 %v2615, %v2617
    %v2619 = vadd.f32 %v2615, %v2618
    %vm2620 = vweird.f32 %v2508
    %vm2621 = vweird.f32 %v2615
    %vm2622 = vmor %vm2620, %vm2621
    %v2623 = vsel %vm2622, %v2615, %v2619
    %v2624 = vand.u32 2147483647, %v2508
    %vm2625 = vcmp.eq.f32.partialorder %v2624, 8.507059e+37
    %v2626 = vand.u32 %v2508, 2147483648
    %v2627 = vor.u32 1.1754944e-38, %v2626
    %v2628 = vsel %vm2625, %v2627, %v2623
    %v2629 = vmul.f32 %v2436, %v2628
    %v2630 = vrcp.pop %v2513
    %v2631 = vmul.f32 %v2513, %v2630
    %v2632 = vsub.f32 1.0, %v2631
    %v2633 = vmul.f32 %v2630, %v2632
    %v2634 = vadd.f32 %v2630, %v2633
    %vm2635 = vweird.f32 %v2513
    %vm2636 = vweird.f32 %v2630
    %vm2637 = vmor %vm2635, %vm2636
    %v2638 = vsel %vm2637, %v2630, %v2634
    %v2639 = vand.u32 2147483647, %v2513
    %vm2640 = vcmp.eq.f32.partialorder %v2639, 8.507059e+37
    %v2641 = vand.u32 %v2513, 2147483648
    %v2642 = vor.u32 1.1754944e-38, %v2641
    %v2643 = vsel %vm2640, %v2642, %v2638
    %v2644 = vmul.f32 %v2439, %v2643
    %v2645 = vrcp.pop %v2518
    %v2646 = vmul.f32 %v2518, %v2645
    %v2647 = vsub.f32 1.0, %v2646
    %v2648 = vmul.f32 %v2645, %v2647
    %v2649 = vadd.f32 %v2645, %v2648
    %vm2650 = vweird.f32 %v2518
    %vm2651 = vweird.f32 %v2645
    %vm2652 = vmor %vm2650, %vm2651
    %v2653 = vsel %vm2652, %v2645, %v2649
    %v2654 = vand.u32 2147483647, %v2518
    %vm2655 = vcmp.eq.f32.partialorder %v2654, 8.507059e+37
    %v2656 = vand.u32 %v2518, 2147483648
    %v2657 = vor.u32 1.1754944e-38, %v2656
    %v2658 = vsel %vm2655, %v2657, %v2653
    %v2659 = vmul.f32 %v2442, %v2658
    %v2660 = vrcp.pop %v2523
    %v2661 = vmul.f32 %v2523, %v2660
    %v2662 = vsub.f32 1.0, %v2661
    %v2663 = vmul.f32 %v2660, %v2662
    %v2664 = vadd.f32 %v2660, %v2663
    %vm2665 = vweird.f32 %v2523
    %vm2666 = vweird.f32 %v2660
    %vm2667 = vmor %vm2665, %vm2666
    %v2668 = vsel %vm2667, %v2660, %v2664
    %v2669 = vand.u32 2147483647, %v2523
    %vm2670 = vcmp.eq.f32.partialorder %v2669, 8.507059e+37
    %v2671 = vand.u32 %v2523, 2147483648
    %v2672 = vor.u32 1.1754944e-38, %v2671
    %v2673 = vsel %vm2670, %v2672, %v2668
    %v2674 = vmul.f32 %v2445, %v2673
    %v2675 = vrcp.pop %v2528
    %v2676 = vmul.f32 %v2528, %v2675
    %v2677 = vsub.f32 1.0, %v2676
    %v2678 = vmul.f32 %v2675, %v2677
    %v2679 = vadd.f32 %v2675, %v2678
    %vm2680 = vweird.f32 %v2528
    %vm2681 = vweird.f32 %v2675
    %vm2682 = vmor %vm2680, %vm2681
    %v2683 = vsel %vm2682, %v2675, %v2679
    %v2684 = vand.u32 2147483647, %v2528
    %vm2685 = vcmp.eq.f32.partialorder %v2684, 8.507059e+37
    %v2686 = vand.u32 %v2528, 2147483648
    %v2687 = vor.u32 1.1754944e-38, %v2686
    %v2688 = vsel %vm2685, %v2687, %v2683
    %v2689 = vmul.f32 %v2448, %v2688
    %v2690 = vrcp.pop %v2533
    %v2691 = vmul.f32 %v2533, %v2690
    %v2692 = vsub.f32 1.0, %v2691
    %v2693 = vmul.f32 %v2690, %v2692
    %v2694 = vadd.f32 %v2690, %v2693
    %vm2695 = vweird.f32 %v2533
    %vm2696 = vweird.f32 %v2690
    %vm2697 = vmor %vm2695, %vm2696
    %v2698 = vsel %vm2697, %v2690, %v2694
    %v2699 = vand.u32 2147483647, %v2533
    %vm2700 = vcmp.eq.f32.partialorder %v2699, 8.507059e+37
    %v2701 = vand.u32 %v2533, 2147483648
    %v2702 = vor.u32 1.1754944e-38, %v2701
    %v2703 = vsel %vm2700, %v2702, %v2698
    %v2704 = vmul.f32 %v2451, %v2703
    %v2705 = vrcp.pop %v2538
    %v2706 = vmul.f32 %v2538, %v2705
    %v2707 = vsub.f32 1.0, %v2706
    %v2708 = vmul.f32 %v2705, %v2707
    %v2709 = vadd.f32 %v2705, %v2708
    %vm2710 = vweird.f32 %v2538
    %vm2711 = vweird.f32 %v2705
    %vm2712 = vmor %vm2710, %vm2711
    %v2713 = vsel %vm2712, %v2705, %v2709
    %v2714 = vand.u32 2147483647, %v2538
    %vm2715 = vcmp.eq.f32.partialorder %v2714, 8.507059e+37
    %v2716 = vand.u32 %v2538, 2147483648
    %v2717 = vor.u32 1.1754944e-38, %v2716
    %v2718 = vsel %vm2715, %v2717, %v2713
    %v2719 = vmul.f32 %v2454, %v2718
    %v2720 = vrcp.pop %v2543
    %v2721 = vmul.f32 %v2543, %v2720
    %v2722 = vsub.f32 1.0, %v2721
    %v2723 = vmul.f32 %v2720, %v2722
    %v2724 = vadd.f32 %v2720, %v2723
    %vm2725 = vweird.f32 %v2543
    %vm2726 = vweird.f32 %v2720
    %vm2727 = vmor %vm2725, %vm2726
    %v2728 = vsel %vm2727, %v2720, %v2724
    %v2729 = vand.u32 2147483647, %v2543
    %vm2730 = vcmp.eq.f32.partialorder %v2729, 8.507059e+37
    %v2731 = vand.u32 %v2543, 2147483648
    %v2732 = vor.u32 1.1754944e-38, %v2731
    %v2733 = vsel %vm2730, %v2732, %v2728
    %v2734 = vmul.f32 %v2457, %v2733
    %v2735 = vrcp.pop %v2548
    %v2736 = vmul.f32 %v2548, %v2735
    %v2737 = vsub.f32 1.0, %v2736
    %v2738 = vmul.f32 %v2735, %v2737
    %v2739 = vadd.f32 %v2735, %v2738
    %vm2740 = vweird.f32 %v2548
    %vm2741 = vweird.f32 %v2735
    %vm2742 = vmor %vm2740, %vm2741
    %v2743 = vsel %vm2742, %v2735, %v2739
    %v2744 = vand.u32 2147483647, %v2548
    %vm2745 = vcmp.eq.f32.partialorder %v2744, 8.507059e+37
    %v2746 = vand.u32 %v2548, 2147483648
    %v2747 = vor.u32 1.1754944e-38, %v2746
    %v2748 = vsel %vm2745, %v2747, %v2743
    %v2749 = vmul.f32 %v2460, %v2748
    %v2750 = vrcp.pop %v2553
    %v2751 = vmul.f32 %v2553, %v2750
    %v2752 = vsub.f32 1.0, %v2751
    %v2753 = vmul.f32 %v2750, %v2752
    %v2754 = vadd.f32 %v2750, %v2753
    %vm2755 = vweird.f32 %v2553
    %vm2756 = vweird.f32 %v2750
    %vm2757 = vmor %vm2755, %vm2756
    %v2758 = vsel %vm2757, %v2750, %v2754
    %v2759 = vand.u32 2147483647, %v2553
    %vm2760 = vcmp.eq.f32.partialorder %v2759, 8.507059e+37
    %v2761 = vand.u32 %v2553, 2147483648
    %v2762 = vor.u32 1.1754944e-38, %v2761
    %v2763 = vsel %vm2760, %v2762, %v2758
    %v2764 = vmul.f32 %v2463, %v2763
    %v2765 = vrcp.pop %v2558
    %v2766 = vmul.f32 %v2558, %v2765
    %v2767 = vsub.f32 1.0, %v2766
    %v2768 = vmul.f32 %v2765, %v2767
    %v2769 = vadd.f32 %v2765, %v2768
    %vm2770 = vweird.f32 %v2558
    %vm2771 = vweird.f32 %v2765
    %vm2772 = vmor %vm2770, %vm2771
    %v2773 = vsel %vm2772, %v2765, %v2769
    %v2774 = vand.u32 2147483647, %v2558
    %vm2775 = vcmp.eq.f32.partialorder %v2774, 8.507059e+37
    %v2776 = vand.u32 %v2558, 2147483648
    %v2777 = vor.u32 1.1754944e-38, %v2776
    %v2778 = vsel %vm2775, %v2777, %v2773
    %v2779 = vmul.f32 %v2466, %v2778
    %v2780 = vrcp.pop %v2563
    %v2781 = vmul.f32 %v2563, %v2780
    %v2782 = vsub.f32 1.0, %v2781
    %v2783 = vmul.f32 %v2780, %v2782
    %v2784 = vadd.f32 %v2780, %v2783
    %vm2785 = vweird.f32 %v2563
    %vm2786 = vweird.f32 %v2780
    %vm2787 = vmor %vm2785, %vm2786
    %v2788 = vsel %vm2787, %v2780, %v2784
    %v2789 = vand.u32 2147483647, %v2563
    %vm2790 = vcmp.eq.f32.partialorder %v2789, 8.507059e+37
    %v2791 = vand.u32 %v2563, 2147483648
    %v2792 = vor.u32 1.1754944e-38, %v2791
    %v2793 = vsel %vm2790, %v2792, %v2788
    %v2794 = vmul.f32 %v2469, %v2793
    %v2795 = vrcp.pop %v2568
    %v2796 = vmul.f32 %v2568, %v2795
    %v2797 = vsub.f32 1.0, %v2796
    %v2798 = vmul.f32 %v2795, %v2797
    %v2799 = vadd.f32 %v2795, %v2798
    %vm2800 = vweird.f32 %v2568
    %vm2801 = vweird.f32 %v2795
    %vm2802 = vmor %vm2800, %vm2801
    %v2803 = vsel %vm2802, %v2795, %v2799
    %v2804 = vand.u32 2147483647, %v2568
    %vm2805 = vcmp.eq.f32.partialorder %v2804, 8.507059e+37
    %v2806 = vand.u32 %v2568, 2147483648
    %v2807 = vor.u32 1.1754944e-38, %v2806
    %v2808 = vsel %vm2805, %v2807, %v2803
    %v2809 = vmul.f32 %v2472, %v2808
    %v2810 = vld [vmem:[%s35] sm:$0x1]
    %v2812 = vperm.slane %v2810, 0
    %v2814 = vadd.f32 %v2584, %v2812
    %v2815 = vadd.f32 %v2599, %v2812
    %v2816 = vadd.f32 %v2614, %v2812
    %v2817 = vadd.f32 %v2629, %v2812
    %v2818 = vadd.f32 %v2644, %v2812
    %v2819 = vadd.f32 %v2659, %v2812
    %v2820 = vadd.f32 %v2674, %v2812
    %v2821 = vadd.f32 %v2689, %v2812
    %v2822 = vadd.f32 %v2704, %v2812
    %v2823 = vadd.f32 %v2719, %v2812
    %v2824 = vadd.f32 %v2734, %v2812
    %v2825 = vadd.f32 %v2749, %v2812
    %v2826 = vadd.f32 %v2764, %v2812
    %v2827 = vadd.f32 %v2779, %v2812
    %v2828 = vadd.f32 %v2794, %v2812
    %v2829 = vadd.f32 %v2809, %v2812
    %v2830 = vxor.u32 %v2814, 2147483648
    %v2831 = vxor.u32 %v2815, 2147483648
    %v2832 = vxor.u32 %v2816, 2147483648
    %v2833 = vxor.u32 %v2817, 2147483648
    %v2834 = vxor.u32 %v2818, 2147483648
    %v2835 = vxor.u32 %v2819, 2147483648
    %v2836 = vxor.u32 %v2820, 2147483648
    %v2837 = vxor.u32 %v2821, 2147483648
    %v2838 = vxor.u32 %v2822, 2147483648
    %v2839 = vxor.u32 %v2823, 2147483648
    %v2840 = vxor.u32 %v2824, 2147483648
    %v2841 = vxor.u32 %v2825, 2147483648
    %v2842 = vxor.u32 %v2826, 2147483648
    %v2843 = vxor.u32 %v2827, 2147483648
    %v2844 = vxor.u32 %v2828, 2147483648
    %v2845 = vxor.u32 %v2829, 2147483648
    %v2846 = vmul.f32 %v2830, 1.442695
    %v2847 = vpow.pop %v2846
    %v2848 = vmul.f32 %v2831, 1.442695
    %v2849 = vpow.pop %v2848
    %v2850 = vmul.f32 %v2832, 1.442695
    %v2851 = vpow.pop %v2850
    %v2852 = vmul.f32 %v2833, 1.442695
    %v2853 = vpow.pop %v2852
    %v2854 = vmul.f32 %v2834, 1.442695
    %v2855 = vpow.pop %v2854
    %v2856 = vmul.f32 %v2835, 1.442695
    %v2857 = vpow.pop %v2856
    %v2858 = vmul.f32 %v2836, 1.442695
    %v2859 = vpow.pop %v2858
    %v2860 = vmul.f32 %v2837, 1.442695
    %v2861 = vpow.pop %v2860
    %v2862 = vmul.f32 %v2838, 1.442695
    %v2863 = vpow.pop %v2862
    %v2864 = vmul.f32 %v2839, 1.442695
    %v2865 = vpow.pop %v2864
    %v2866 = vmul.f32 %v2840, 1.442695
    %v2867 = vpow.pop %v2866
    %v2868 = vmul.f32 %v2841, 1.442695
    %v2869 = vpow.pop %v2868
    %v2870 = vmul.f32 %v2842, 1.442695
    %v2871 = vpow.pop %v2870
    %v2872 = vmul.f32 %v2843, 1.442695
    %v2873 = vpow.pop %v2872
    %v2874 = vmul.f32 %v2844, 1.442695
    %v2875 = vpow.pop %v2874
    %v2876 = vmul.f32 %v2845, 1.442695
    %v2877 = vpow.pop %v2876
    %v2878 = vadd.f32 %v2847, 1.0
    %v2879 = vadd.f32 %v2849, 1.0
    %v2880 = vadd.f32 %v2851, 1.0
    %v2881 = vadd.f32 %v2853, 1.0
    %v2882 = vadd.f32 %v2855, 1.0
    %v2883 = vadd.f32 %v2857, 1.0
    %v2884 = vadd.f32 %v2859, 1.0
    %v2885 = vadd.f32 %v2861, 1.0
    %v2886 = vadd.f32 %v2863, 1.0
    %v2887 = vadd.f32 %v2865, 1.0
    %v2888 = vadd.f32 %v2867, 1.0
    %v2889 = vadd.f32 %v2869, 1.0
    %v2890 = vadd.f32 %v2871, 1.0
    %v2891 = vadd.f32 %v2873, 1.0
    %v2892 = vadd.f32 %v2875, 1.0
    %v2893 = vadd.f32 %v2877, 1.0
    %v2894 = vrcp.pop %v2878
    %v2895 = vmul.f32 %v2878, %v2894
    %v2896 = vsub.f32 1.0, %v2895
    %v2897 = vmul.f32 %v2894, %v2896
    %v2898 = vadd.f32 %v2894, %v2897
    %vm2899 = vweird.f32 %v2878
    %vm2900 = vweird.f32 %v2894
    %vm2901 = vmor %vm2899, %vm2900
    %v2902 = vsel %vm2901, %v2894, %v2898
    %v2903 = vand.u32 2147483647, %v2878
    %vm2904 = vcmp.eq.f32.partialorder %v2903, 8.507059e+37
    %v2905 = vand.u32 %v2878, 2147483648
    %v2906 = vor.u32 1.1754944e-38, %v2905
    %v2907 = vsel %vm2904, %v2906, %v2902
    %v2908 = vmul.f32 1.0, %v2907
    %v2909 = vrcp.pop %v2879
    %v2910 = vmul.f32 %v2879, %v2909
    %v2911 = vsub.f32 1.0, %v2910
    %v2912 = vmul.f32 %v2909, %v2911
    %v2913 = vadd.f32 %v2909, %v2912
    %vm2914 = vweird.f32 %v2879
    %vm2915 = vweird.f32 %v2909
    %vm2916 = vmor %vm2914, %vm2915
    %v2917 = vsel %vm2916, %v2909, %v2913
    %v2918 = vand.u32 2147483647, %v2879
    %vm2919 = vcmp.eq.f32.partialorder %v2918, 8.507059e+37
    %v2920 = vand.u32 %v2879, 2147483648
    %v2921 = vor.u32 1.1754944e-38, %v2920
    %v2922 = vsel %vm2919, %v2921, %v2917
    %v2923 = vmul.f32 1.0, %v2922
    %v2924 = vrcp.pop %v2880
    %v2925 = vmul.f32 %v2880, %v2924
    %v2926 = vsub.f32 1.0, %v2925
    %v2927 = vmul.f32 %v2924, %v2926
    %v2928 = vadd.f32 %v2924, %v2927
    %vm2929 = vweird.f32 %v2880
    %vm2930 = vweird.f32 %v2924
    %vm2931 = vmor %vm2929, %vm2930
    %v2932 = vsel %vm2931, %v2924, %v2928
    %v2933 = vand.u32 2147483647, %v2880
    %vm2934 = vcmp.eq.f32.partialorder %v2933, 8.507059e+37
    %v2935 = vand.u32 %v2880, 2147483648
    %v2936 = vor.u32 1.1754944e-38, %v2935
    %v2937 = vsel %vm2934, %v2936, %v2932
    %v2938 = vmul.f32 1.0, %v2937
    %v2939 = vrcp.pop %v2881
    %v2940 = vmul.f32 %v2881, %v2939
    %v2941 = vsub.f32 1.0, %v2940
    %v2942 = vmul.f32 %v2939, %v2941
    %v2943 = vadd.f32 %v2939, %v2942
    %vm2944 = vweird.f32 %v2881
    %vm2945 = vweird.f32 %v2939
    %vm2946 = vmor %vm2944, %vm2945
    %v2947 = vsel %vm2946, %v2939, %v2943
    %v2948 = vand.u32 2147483647, %v2881
    %vm2949 = vcmp.eq.f32.partialorder %v2948, 8.507059e+37
    %v2950 = vand.u32 %v2881, 2147483648
    %v2951 = vor.u32 1.1754944e-38, %v2950
    %v2952 = vsel %vm2949, %v2951, %v2947
    %v2953 = vmul.f32 1.0, %v2952
    %v2954 = vrcp.pop %v2882
    %v2955 = vmul.f32 %v2882, %v2954
    %v2956 = vsub.f32 1.0, %v2955
    %v2957 = vmul.f32 %v2954, %v2956
    %v2958 = vadd.f32 %v2954, %v2957
    %vm2959 = vweird.f32 %v2882
    %vm2960 = vweird.f32 %v2954
    %vm2961 = vmor %vm2959, %vm2960
    %v2962 = vsel %vm2961, %v2954, %v2958
    %v2963 = vand.u32 2147483647, %v2882
    %vm2964 = vcmp.eq.f32.partialorder %v2963, 8.507059e+37
    %v2965 = vand.u32 %v2882, 2147483648
    %v2966 = vor.u32 1.1754944e-38, %v2965
    %v2967 = vsel %vm2964, %v2966, %v2962
    %v2968 = vmul.f32 1.0, %v2967
    %v2969 = vrcp.pop %v2883
    %v2970 = vmul.f32 %v2883, %v2969
    %v2971 = vsub.f32 1.0, %v2970
    %v2972 = vmul.f32 %v2969, %v2971
    %v2973 = vadd.f32 %v2969, %v2972
    %vm2974 = vweird.f32 %v2883
    %vm2975 = vweird.f32 %v2969
    %vm2976 = vmor %vm2974, %vm2975
    %v2977 = vsel %vm2976, %v2969, %v2973
    %v2978 = vand.u32 2147483647, %v2883
    %vm2979 = vcmp.eq.f32.partialorder %v2978, 8.507059e+37
    %v2980 = vand.u32 %v2883, 2147483648
    %v2981 = vor.u32 1.1754944e-38, %v2980
    %v2982 = vsel %vm2979, %v2981, %v2977
    %v2983 = vmul.f32 1.0, %v2982
    %v2984 = vrcp.pop %v2884
    %v2985 = vmul.f32 %v2884, %v2984
    %v2986 = vsub.f32 1.0, %v2985
    %v2987 = vmul.f32 %v2984, %v2986
    %v2988 = vadd.f32 %v2984, %v2987
    %vm2989 = vweird.f32 %v2884
    %vm2990 = vweird.f32 %v2984
    %vm2991 = vmor %vm2989, %vm2990
    %v2992 = vsel %vm2991, %v2984, %v2988
    %v2993 = vand.u32 2147483647, %v2884
    %vm2994 = vcmp.eq.f32.partialorder %v2993, 8.507059e+37
    %v2995 = vand.u32 %v2884, 2147483648
    %v2996 = vor.u32 1.1754944e-38, %v2995
    %v2997 = vsel %vm2994, %v2996, %v2992
    %v2998 = vmul.f32 1.0, %v2997
    %v2999 = vrcp.pop %v2885
    %v3000 = vmul.f32 %v2885, %v2999
    %v3001 = vsub.f32 1.0, %v3000
    %v3002 = vmul.f32 %v2999, %v3001
    %v3003 = vadd.f32 %v2999, %v3002
    %vm3004 = vweird.f32 %v2885
    %vm3005 = vweird.f32 %v2999
    %vm3006 = vmor %vm3004, %vm3005
    %v3007 = vsel %vm3006, %v2999, %v3003
    %v3008 = vand.u32 2147483647, %v2885
    %vm3009 = vcmp.eq.f32.partialorder %v3008, 8.507059e+37
    %v3010 = vand.u32 %v2885, 2147483648
    %v3011 = vor.u32 1.1754944e-38, %v3010
    %v3012 = vsel %vm3009, %v3011, %v3007
    %v3013 = vmul.f32 1.0, %v3012
    %v3014 = vrcp.pop %v2886
    %v3015 = vmul.f32 %v2886, %v3014
    %v3016 = vsub.f32 1.0, %v3015
    %v3017 = vmul.f32 %v3014, %v3016
    %v3018 = vadd.f32 %v3014, %v3017
    %vm3019 = vweird.f32 %v2886
    %vm3020 = vweird.f32 %v3014
    %vm3021 = vmor %vm3019, %vm3020
    %v3022 = vsel %vm3021, %v3014, %v3018
    %v3023 = vand.u32 2147483647, %v2886
    %vm3024 = vcmp.eq.f32.partialorder %v3023, 8.507059e+37
    %v3025 = vand.u32 %v2886, 2147483648
    %v3026 = vor.u32 1.1754944e-38, %v3025
    %v3027 = vsel %vm3024, %v3026, %v3022
    %v3028 = vmul.f32 1.0, %v3027
    %v3029 = vrcp.pop %v2887
    %v3030 = vmul.f32 %v2887, %v3029
    %v3031 = vsub.f32 1.0, %v3030
    %v3032 = vmul.f32 %v3029, %v3031
    %v3033 = vadd.f32 %v3029, %v3032
    %vm3034 = vweird.f32 %v2887
    %vm3035 = vweird.f32 %v3029
    %vm3036 = vmor %vm3034, %vm3035
    %v3037 = vsel %vm3036, %v3029, %v3033
    %v3038 = vand.u32 2147483647, %v2887
    %vm3039 = vcmp.eq.f32.partialorder %v3038, 8.507059e+37
    %v3040 = vand.u32 %v2887, 2147483648
    %v3041 = vor.u32 1.1754944e-38, %v3040
    %v3042 = vsel %vm3039, %v3041, %v3037
    %v3043 = vmul.f32 1.0, %v3042
    %v3044 = vrcp.pop %v2888
    %v3045 = vmul.f32 %v2888, %v3044
    %v3046 = vsub.f32 1.0, %v3045
    %v3047 = vmul.f32 %v3044, %v3046
    %v3048 = vadd.f32 %v3044, %v3047
    %vm3049 = vweird.f32 %v2888
    %vm3050 = vweird.f32 %v3044
    %vm3051 = vmor %vm3049, %vm3050
    %v3052 = vsel %vm3051, %v3044, %v3048
    %v3053 = vand.u32 2147483647, %v2888
    %vm3054 = vcmp.eq.f32.partialorder %v3053, 8.507059e+37
    %v3055 = vand.u32 %v2888, 2147483648
    %v3056 = vor.u32 1.1754944e-38, %v3055
    %v3057 = vsel %vm3054, %v3056, %v3052
    %v3058 = vmul.f32 1.0, %v3057
    %v3059 = vrcp.pop %v2889
    %v3060 = vmul.f32 %v2889, %v3059
    %v3061 = vsub.f32 1.0, %v3060
    %v3062 = vmul.f32 %v3059, %v3061
    %v3063 = vadd.f32 %v3059, %v3062
    %vm3064 = vweird.f32 %v2889
    %vm3065 = vweird.f32 %v3059
    %vm3066 = vmor %vm3064, %vm3065
    %v3067 = vsel %vm3066, %v3059, %v3063
    %v3068 = vand.u32 2147483647, %v2889
    %vm3069 = vcmp.eq.f32.partialorder %v3068, 8.507059e+37
    %v3070 = vand.u32 %v2889, 2147483648
    %v3071 = vor.u32 1.1754944e-38, %v3070
    %v3072 = vsel %vm3069, %v3071, %v3067
    %v3073 = vmul.f32 1.0, %v3072
    %v3074 = vrcp.pop %v2890
    %v3075 = vmul.f32 %v2890, %v3074
    %v3076 = vsub.f32 1.0, %v3075
    %v3077 = vmul.f32 %v3074, %v3076
    %v3078 = vadd.f32 %v3074, %v3077
    %vm3079 = vweird.f32 %v2890
    %vm3080 = vweird.f32 %v3074
    %vm3081 = vmor %vm3079, %vm3080
    %v3082 = vsel %vm3081, %v3074, %v3078
    %v3083 = vand.u32 2147483647, %v2890
    %vm3084 = vcmp.eq.f32.partialorder %v3083, 8.507059e+37
    %v3085 = vand.u32 %v2890, 2147483648
    %v3086 = vor.u32 1.1754944e-38, %v3085
    %v3087 = vsel %vm3084, %v3086, %v3082
    %v3088 = vmul.f32 1.0, %v3087
    %v3089 = vrcp.pop %v2891
    %v3090 = vmul.f32 %v2891, %v3089
    %v3091 = vsub.f32 1.0, %v3090
    %v3092 = vmul.f32 %v3089, %v3091
    %v3093 = vadd.f32 %v3089, %v3092
    %vm3094 = vweird.f32 %v2891
    %vm3095 = vweird.f32 %v3089
    %vm3096 = vmor %vm3094, %vm3095
    %v3097 = vsel %vm3096, %v3089, %v3093
    %v3098 = vand.u32 2147483647, %v2891
    %vm3099 = vcmp.eq.f32.partialorder %v3098, 8.507059e+37
    %v3100 = vand.u32 %v2891, 2147483648
    %v3101 = vor.u32 1.1754944e-38, %v3100
    %v3102 = vsel %vm3099, %v3101, %v3097
    %v3103 = vmul.f32 1.0, %v3102
    %v3104 = vrcp.pop %v2892
    %v3105 = vmul.f32 %v2892, %v3104
    %v3106 = vsub.f32 1.0, %v3105
    %v3107 = vmul.f32 %v3104, %v3106
    %v3108 = vadd.f32 %v3104, %v3107
    %vm3109 = vweird.f32 %v2892
    %vm3110 = vweird.f32 %v3104
    %vm3111 = vmor %vm3109, %vm3110
    %v3112 = vsel %vm3111, %v3104, %v3108
    %v3113 = vand.u32 2147483647, %v2892
    %vm3114 = vcmp.eq.f32.partialorder %v3113, 8.507059e+37
    %v3115 = vand.u32 %v2892, 2147483648
    %v3116 = vor.u32 1.1754944e-38, %v3115
    %v3117 = vsel %vm3114, %v3116, %v3112
    %v3118 = vmul.f32 1.0, %v3117
    %v3119 = vrcp.pop %v2893
    %v3120 = vmul.f32 %v2893, %v3119
    %v3121 = vsub.f32 1.0, %v3120
    %v3122 = vmul.f32 %v3119, %v3121
    %v3123 = vadd.f32 %v3119, %v3122
    %vm3124 = vweird.f32 %v2893
    %vm3125 = vweird.f32 %v3119
    %vm3126 = vmor %vm3124, %vm3125
    %v3127 = vsel %vm3126, %v3119, %v3123
    %v3128 = vand.u32 2147483647, %v2893
    %vm3129 = vcmp.eq.f32.partialorder %v3128, 8.507059e+37
    %v3130 = vand.u32 %v2893, 2147483648
    %v3131 = vor.u32 1.1754944e-38, %v3130
    %v3132 = vsel %vm3129, %v3131, %v3127
    %v3133 = vmul.f32 1.0, %v3132
    %v3134 = vld [vmem:[%s37] sm:$0x1]
    %v3136 = vperm.slane %v3134, 0
    %v3138 = vmul.f32 %v2908, %v3136
    %v3139 = vmul.f32 %v2923, %v3136
    %v3140 = vmul.f32 %v2938, %v3136
    %v3141 = vmul.f32 %v2953, %v3136
    %v3142 = vmul.f32 %v2968, %v3136
    %v3143 = vmul.f32 %v2983, %v3136
    %v3144 = vmul.f32 %v2998, %v3136
    %v3145 = vmul.f32 %v3013, %v3136
    %v3146 = vmul.f32 %v3028, %v3136
    %v3147 = vmul.f32 %v3043, %v3136
    %v3148 = vmul.f32 %v3058, %v3136
    %v3149 = vmul.f32 %v3073, %v3136
    %v3150 = vmul.f32 %v3088, %v3136
    %v3151 = vmul.f32 %v3103, %v3136
    %v3152 = vmul.f32 %v3118, %v3136
    %v3153 = vmul.f32 %v3133, %v3136
    %v3154 = vld [vmem:[%s39] sm:$0x1]
    %v3156 = vperm.slane %v3154, 0
    %v3158 = vadd.f32 %v3138, %v3156
    %v3159 = vadd.f32 %v3139, %v3156
    %v3160 = vadd.f32 %v3140, %v3156
    %v3161 = vadd.f32 %v3141, %v3156
    %v3162 = vadd.f32 %v3142, %v3156
    %v3163 = vadd.f32 %v3143, %v3156
    %v3164 = vadd.f32 %v3144, %v3156
    %v3165 = vadd.f32 %v3145, %v3156
    %v3166 = vadd.f32 %v3146, %v3156
    %v3167 = vadd.f32 %v3147, %v3156
    %v3168 = vadd.f32 %v3148, %v3156
    %v3169 = vadd.f32 %v3149, %v3156
    %v3170 = vadd.f32 %v3150, %v3156
    %v3171 = vadd.f32 %v3151, %v3156
    %v3172 = vadd.f32 %v3152, %v3156
    %v3173 = vadd.f32 %v3153, %v3156
    %v3174 = vld [vmem:[%s9] sm:$0x3]
    %3175 = vmatpush.msra.mxu0 %v3173
    %3176 = vmatpush.msra.mxu0 %v3172
    %3177 = vmatpush.msra.mxu0 %v3171
    %3178 = vmatpush.msra.mxu0 %v3170
    %3179 = vmatpush.msra.mxu0 %v3169
    %3180 = vmatpush.msra.mxu0 %v3168
    %3181 = vmatpush.msra.mxu0 %v3167
    %3182 = vmatpush.msra.mxu0 %v3166
    %3183 = vmatpush.msra.mxu0 %v3165
    %3184 = vmatpush.msra.mxu0 %v3164
    %3185 = vmatpush.msra.mxu0 %v3163
    %3186 = vmatpush.msra.mxu0 %v3162
    %3187 = vmatpush.msra.mxu0 %v3161
    %3188 = vmatpush.msra.mxu0 %v3160
    %3189 = vmatpush.msra.mxu0 %v3159
    %3190 = vmatpush.msra.mxu0 %v3158
    %3191 = vmatmul.f32.gmra.mxu0 %v3174
    %v3192 = vpop.f32.mrf.mxu0
    %v3193 = vadd.f32 0.0, %v3192
    %3194 = vdwg.mxu0
    %v3195 = vld [vmem:[%s41] sm:$0xff]
    %v3196 = vld [vmem:[%s11] sm:$0x3]
    %v3197 = vld [vmem:[%s43] sm:$0xff]
    %v3198 = vld [vmem:[%s43 + $0x8] sm:$0xff]
    %v3199 = vld [vmem:[%s43 + $0x10] sm:$0x3f]
    %vm3200 = vcmask 179200
    %v3202 = vsel %vm3200, %v3196, 0
    %v3205 = vsel %vm660, %v3199, 0
    %3207 = vmatpush.msra.mxu0 0.0
    %3208 = vmatpush.msra.mxu0 0.0
    %3209 = vmatpush.msra.mxu0 0.0
    %3210 = vmatpush.msra.mxu0 0.0
    %3211 = vmatpush.msra.mxu0 0.0
    %3212 = vmatpush.msra.mxu0 0.0
    %3213 = vmatpush.msra.mxu0 0.0
    %3214 = vmatpush.msra.mxu0 0.0
    %3215 = vmatpush.msra.mxu0 0.0
    %3216 = vmatpush.msra.mxu0 0.0
    %3217 = vmatpush.msra.mxu0 0.0
    %3218 = vmatpush.msra.mxu0 0.0
    %3219 = vmatpush.msra.mxu0 0.0
    %3220 = vmatpush.msra.mxu0 %v3205
    %3221 = vmatpush.msra.mxu0 %v3198
    %3222 = vmatpush.msra.mxu0 %v3197
    %3223 = vmatmul.f32.gmra.mxu0 %v3202
    %v3224 = vpop.f32.mrf.mxu0
    %v3225 = vadd.f32 0.0, %v3224
    %3226 = vdwg.mxu0
    %v3228 = vsel %vm1768, %v3193, 0
    %3230 = vmatpush.msra.mxu0 0.0
    %3231 = vmatpush.msra.mxu0 0.0
    %3232 = vmatpush.msra.mxu0 0.0
    %3233 = vmatpush.msra.mxu0 0.0
    %3234 = vmatpush.msra.mxu0 0.0
    %3235 = vmatpush.msra.mxu0 0.0
    %3236 = vmatpush.msra.mxu0 0.0
    %3237 = vmatpush.msra.mxu0 0.0
    %3238 = vmatpush.msra.mxu0 0.0
    %3239 = vmatpush.msra.mxu0 0.0
    %3240 = vmatpush.msra.mxu0 0.0
    %3241 = vmatpush.msra.mxu0 0.0
    %3242 = vmatpush.msra.mxu0 0.0
    %3243 = vmatpush.msra.mxu0 0.0
    %3244 = vmatpush.msra.mxu0 0.0
    %3245 = vmatpush.msra.mxu0 %v3195
    %3246 = vmatmul.f32.gmra.mxu0 %v3228
    %v3247 = vpop.f32.mrf.mxu0
    %v3248 = vadd.f32 %v3225, %v3247
    %3249 = vdwg.mxu0
    %v3250 = vld [vmem:[%s45] sm:$0x1]
    %v3252 = vperm.slane %v3250, 0
    %v3254 = vadd.f32 %v3248, %v3252
    %v3255 = vmax.f32 %v3254, 0.0
    %v3256 = vld [vmem:[%s47] sm:$0xff]
    %v3257 = vld [vmem:[%s47 + $0x8] sm:$0xff]
    %v3258 = vld [vmem:[%s47 + $0x10] sm:$0xff]
    %v3259 = vld [vmem:[%s47 + $0x18] sm:$0xff]
    %v3260 = vld [vmem:[%s49] sm:$0x1]
    %v3262 = vperm.slane %v3260, 0
    %v3265 = vsel %vm399, %v3255, 0
    %3267 = vmatpush.msra.mxu0 0.0
    %3268 = vmatpush.msra.mxu0 0.0
    %3269 = vmatpush.msra.mxu0 0.0
    %3270 = vmatpush.msra.mxu0 0.0
    %3271 = vmatpush.msra.mxu0 0.0
    %3272 = vmatpush.msra.mxu0 0.0
    %3273 = vmatpush.msra.mxu0 0.0
    %3274 = vmatpush.msra.mxu0 0.0
    %3275 = vmatpush.msra.mxu0 0.0
    %3276 = vmatpush.msra.mxu0 0.0
    %3277 = vmatpush.msra.mxu0 0.0
    %3278 = vmatpush.msra.mxu0 0.0
    %3279 = vmatpush.msra.mxu0 %v3259
    %3280 = vmatpush.msra.mxu0 %v3258
    %3281 = vmatpush.msra.mxu0 %v3257
    %3282 = vmatpush.msra.mxu0 %v3256
    %3283 = vmatmul.f32.gmra.mxu0 %v3265
    %v3284 = vpop.f32.mrf.mxu0
    %v3285 = vadd.f32 %v3262, %v3284
    %3286 = vdwg.mxu0
    %v3287 = vmax.f32 %v3285, 0.0
    %v3288 = vld [vmem:[%s51] sm:$0xff]
    %v3289 = vld [vmem:[%s51 + $0x8] sm:$0xff]
    %v3290 = vld [vmem:[%s53] sm:$0x1]
    %v3292 = vperm.slane %v3290, 0
    %vm3294 = vcmask 130048
    %v3296 = vsel %vm3294, %v3287, 0
    %3298 = vmatpush.msra.mxu0 0.0
    %3299 = vmatpush.msra.mxu0 0.0
    %3300 = vmatpush.msra.mxu0 0.0
    %3301 = vmatpush.msra.mxu0 0.0
    %3302 = vmatpush.msra.mxu0 0.0
    %3303 = vmatpush.msra.mxu0 0.0
    %3304 = vmatpush.msra.mxu0 0.0
    %3305 = vmatpush.msra.mxu0 0.0
    %3306 = vmatpush.msra.mxu0 0.0
    %3307 = vmatpush.msra.mxu0 0.0
    %3308 = vmatpush.msra.mxu0 0.0
    %3309 = vmatpush.msra.mxu0 0.0
    %3310 = vmatpush.msra.mxu0 0.0
    %3311 = vmatpush.msra.mxu0 0.0
    %3312 = vmatpush.msra.mxu0 %v3289
    %3313 = vmatpush.msra.mxu0 %v3288
    %3314 = vmatmul.f32.gmra.mxu0 %v3296
    %v3315 = vpop.f32.mrf.mxu0
    %v3316 = vadd.f32 %v3292, %v3315
    %3317 = vdwg.mxu0
    %v3318 = vmax.f32 %v3316, 0.0
    %v3319 = vld [vmem:[%s55] sm:$0xff]
    %v3320 = vld [vmem:[%s57] sm:$0x1]
    %v3322 = vperm.slane %v3320, 0
    %v3325 = vsel %vm1768, %v3318, 0
    %3327 = vmatpush.msra.mxu0 0.0
    %3328 = vmatpush.msra.mxu0 0.0
    %3329 = vmatpush.msra.mxu0 0.0
    %3330 = vmatpush.msra.mxu0 0.0
    %3331 = vmatpush.msra.mxu0 0.0
    %3332 = vmatpush.msra.mxu0 0.0
    %3333 = vmatpush.msra.mxu0 0.0
    %3334 = vmatpush.msra.mxu0 0.0
    %3335 = vmatpush.msra.mxu0 0.0
    %3336 = vmatpush.msra.mxu0 0.0
    %3337 = vmatpush.msra.mxu0 0.0
    %3338 = vmatpush.msra.mxu0 0.0
    %3339 = vmatpush.msra.mxu0 0.0
    %3340 = vmatpush.msra.mxu0 0.0
    %3341 = vmatpush.msra.mxu0 0.0
    %3342 = vmatpush.msra.mxu0 %v3319
    %3343 = vmatmul.f32.gmra.mxu0 %v3325
    %v3344 = vpop.f32.mrf.mxu0
    %v3345 = vadd.f32 %v3322, %v3344
    %3346 = vdwg.mxu0
    %v3347 = vmax.f32 %v3345, 0.0
    %v3348 = vld [vmem:[%s59] sm:$0xf]
    %v3349 = vld [vmem:[%s61] sm:$0x1]
    %v3351 = vperm.slane %v3349, 0
    %vm3353 = vcmask 31744
    %v3355 = vsel %vm3353, %v3347, 0
    %v3358 = vsel %vm266, %v3348, 0
    %3360 = vmatpush.msra.mxu0 0.0
    %3361 = vmatpush.msra.mxu0 0.0
    %3362 = vmatpush.msra.mxu0 0.0
    %3363 = vmatpush.msra.mxu0 0.0
    %3364 = vmatpush.msra.mxu0 0.0
    %3365 = vmatpush.msra.mxu0 0.0
    %3366 = vmatpush.msra.mxu0 0.0
    %3367 = vmatpush.msra.mxu0 0.0
    %3368 = vmatpush.msra.mxu0 0.0
    %3369 = vmatpush.msra.mxu0 0.0
    %3370 = vmatpush.msra.mxu0 0.0
    %3371 = vmatpush.msra.mxu0 0.0
    %3372 = vmatpush.msra.mxu0 0.0
    %3373 = vmatpush.msra.mxu0 0.0
    %3374 = vmatpush.msra.mxu0 0.0
    %3375 = vmatpush.msra.mxu0 %v3358
    %3376 = vmatmul.f32.gmra.mxu0 %v3355
    %v3377 = vpop.f32.mrf.mxu0
    %v3378 = vadd.f32 %v3351, %v3377
    %3379 = vdwg.mxu0
    %vm3380 = vcmask 9216
    %3381 = vst.msk [vmem:[#allocation2] sm:$0x3] %vm3380, %v3378
    // Predicated region
    $region126: #{bitter_gcn_forward.1} parent=1 // pred_check
      _
    $region127: #{bitter_gcn_forward.1} parent=1 // pred_check_branch
      %3383 = sbr.rel (0) target = $region129
    $region128: #{bitter_gcn_forward.1} parent=1 // pred_region
      %3385 = vsyncadd [#allocation3], 0
      %s3387 = sshll.u32 [#allocation2], 4
      %s3388 = int_to_ptr.vmem [resolvable:$true] %s3387
      %s3389 = sshll.u32 %s63, 4
      %s3390 = int_to_ptr.hbm [resolvable:$true] %s3389
      %3392 = dma.vmem_to_hbm [thread:$0]  %s3388, 32, %s3390, [#allocation3]
    $region129: #{bitter_gcn_forward.1} parent=1 // pred_fallthru
      _
    // Predicated region
    $region130: #{bitter_gcn_forward.1} parent=1 // pred_check
      _
    $region131: #{bitter_gcn_forward.1} parent=1 // pred_check_branch
      %3394 = sbr.rel (0) target = $region133
    $region132: #{bitter_gcn_forward.1} parent=1 // pred_region
      %3396 = dma.done [#allocation3], 32
    $region133: #{bitter_gcn_forward.1} parent=1 // pred_fallthru
      _
    %3397 = vsyncpa [#allocation3], 1

</llo_original>
